<compile_context>
chip_gen: v6e
topology: v6e:2x2x1
jax: 0.10.0
libtpu: 0.0.40
codegen_flags: <defaults>
</compile_context>

<pallas_src>
import jax
import jax.numpy as jnp
from jax import lax
from jax.experimental import pallas as pl
from jax.experimental.pallas import tpu as pltpu


LANE = 128  # pad the output lane dim to a multiple of this for dense stores


# ----------------------------------------------------------------------------
# Fused kernel: all hidden (norm-folded + graph-conv + relu) layers + Flatten +
# Linear for one block of Bb batch elements.  Built per layer-count (static
# Python unroll).
# ----------------------------------------------------------------------------
def _make_fused_gcn_kernel(n_layers, bb, n_nodes, l_pad):
    def kernel(x_ref, adj_ref, *refs):
        # refs = (w_1, ..., w_n, w_out_3d_pad, b_out_pad, o_ref)
        w_refs = refs[:n_layers]
        wout_ref = refs[n_layers]        # (N, H_last, L_pad)
        bout_ref = refs[n_layers + 1]    # (1, L_pad)
        o_ref = refs[n_layers + 2]       # (Bb, L_pad)

        adj = adj_ref[...]                                        # (Bb, N, N)
        # Leading-dim merge only (N % 8 == 0 -> layout-trivial, no relayout).
        x2 = x_ref[...].reshape(bb * n_nodes, x_ref.shape[-1])    # (Bb*N, Fin)

        for w_ref in w_refs:
            h = w_ref.shape[1]
            # One big MXU pass for the shared-weight matmul over the whole block.
            support = jnp.dot(x2, w_ref[...], preferred_element_type=jnp.float32)
            support = support.reshape(bb, n_nodes, h)             # leading split
            # Per-batch adjacency mix + relu (batched dot_general on the MXU).
            x3 = jnp.maximum(
                jnp.einsum("bij,bjh->bih", adj, support,
                           preferred_element_type=jnp.float32),
                0.0,
            )
            x2 = x3.reshape(bb * n_nodes, h)                      # leading merge

        # ---- Flatten + Linear without any sublane->lane relayout ----
        # logits[b, l] = sum_n sum_h x3[b, n, h] * w3d[n, h, l] + bias[l]
        # Row r = b*N + n of x2 holds x3[b, n, :].  A tiny 0/1 selection matrix
        # Sel_n (Bb, Bb*N) gathers rows {b*N + n}_b via the MXU, which is then
        # hit against the per-node slice of the flattened Linear weight.  Only
        # plain 2-D matmuls and iota compares -> no reshape/transpose of the
        # activations' minor dims.
        col = lax.broadcasted_iota(jnp.int32, (bb, bb * n_nodes), 1)
        row_base = lax.broadcasted_iota(jnp.int32, (bb, bb * n_nodes), 0) * n_nodes
        acc = jnp.zeros((bb, l_pad), jnp.float32)
        for n in range(n_nodes):
            sel_n = (col == row_base + n).astype(jnp.float32)                 # (Bb, Bb*N)
            x_n = jnp.dot(sel_n, x2, preferred_element_type=jnp.float32)      # (Bb, H_last)
            acc = acc + jnp.dot(x_n, wout_ref[n],
                                preferred_element_type=jnp.float32)           # (Bb, L_pad)

        # Sublane- and lane-dense (Bb, 128) store.
        o_ref[...] = (acc + bout_ref[...]).astype(o_ref.dtype)

    return kernel


def gcn_normed_fused(v, adj, w_scaled, w_out_3d_pad, b_out_pad, *, block_b=8):
    """v:(B,N,F) adj:(B,N,N) w_scaled:list[(Fin_i,Fout_i)] w_out_3d_pad:(N,H,L_pad) b_out_pad:(1,L_pad)."""
    B, N, F0 = v.shape
    # TODO(synk): general N would need node-dim padding; kernel assumes sublane-aligned N.
    assert N % 8 == 0, "nb_nodes must be a multiple of 8 (sublane tile) for this kernel"
    L_pad = w_out_3d_pad.shape[-1]
    n_layers = len(w_scaled)

    Bb = block_b
    B_pad = pl.cdiv(B, Bb) * Bb
    if B_pad != B:
        pad = B_pad - B
        v = jnp.pad(v, ((0, pad), (0, 0), (0, 0)))
        adj = jnp.pad(adj, ((0, pad), (0, 0), (0, 0)))

    in_specs = [
        pl.BlockSpec((Bb, N, F0), lambda g: (g, 0, 0)),   # per-block features
        pl.BlockSpec((Bb, N, N), lambda g: (g, 0, 0)),    # per-block adjacency
    ]
    # Grid-invariant (shared) weights: constant index_map -> DMA'd once, no refetch.
    for w in w_scaled:
        in_specs.append(pl.BlockSpec(w.shape, lambda g: (0, 0)))
    in_specs.append(pl.BlockSpec(w_out_3d_pad.shape, lambda g: (0, 0, 0)))
    in_specs.append(pl.BlockSpec(b_out_pad.shape, lambda g: (0, 0)))

    # Advisory cost estimate (lets XLA schedule the wrapper-side W/d scaling
    # and surrounding ops to overlap with the kernel).
    flops_per_elem = 0
    fin = F0
    for w in w_scaled:
        fout = int(w.shape[1])
        flops_per_elem += 2 * N * fin * fout + 2 * N * N * fout
        fin = fout
    flops_per_elem += 2 * N * fin * L_pad
    flops = int(B_pad * flops_per_elem)
    bytes_accessed = int(4 * (
        v.size + adj.size + B_pad * L_pad
        + sum(int(w.size) for w in w_scaled) + w_out_3d_pad.size + b_out_pad.size
    ))

    out = pl.pallas_call(
        _make_fused_gcn_kernel(n_layers, Bb, N, L_pad),
        out_shape=jax.ShapeDtypeStruct((B_pad, L_pad), v.dtype),
        grid_spec=pltpu.PrefetchScalarGridSpec(
            num_scalar_prefetch=0,
            grid=(B_pad // Bb,),
            in_specs=in_specs,
            out_specs=pl.BlockSpec((Bb, L_pad), lambda g: (g, 0)),
        ),
        compiler_params=pltpu.CompilerParams(dimension_semantics=("parallel",)),
        cost_estimate=pl.CostEstimate(
            flops=flops, transcendentals=0, bytes_accessed=bytes_accessed),
    )(v, adj, *w_scaled, w_out_3d_pad, b_out_pad)
    return out[:B]


# ----------------------------------------------------------------------------
# Parameter init (mirrors module __init__ shapes; GraphConvolution bias=False,
# Linear weight (label, nb_nodes*hidden[-1]) + bias).  The out-layer params are
# stored pre-transposed, lane-padded and node-split once, at init.
# ----------------------------------------------------------------------------
def init_gcn_normed_params(key, feats, hidden, label, nb_nodes, D=1):
    dims = [feats] + list(hidden)
    layers = []
    for fin, fout in zip(dims[:-1], dims[1:]):
        key, kw, kd = jax.random.split(key, 3)
        bound = 1.0 / jnp.sqrt(jnp.float32(fout))
        w = jax.random.uniform(kw, (fin, fout), jnp.float32, -bound, bound)
        # NormalizationLayer diameter (init around D, perturbed so the test
        # actually exercises the fold-into-W path with non-trivial d).
        d = jnp.float32(D) * jax.random.uniform(kd, (1, fin), jnp.float32, 0.5, 1.5)
        layers.append({"d": d, "w": w})

    h_last = hidden[-1]
    nh = nb_nodes * h_last
    key, kw2, kb2 = jax.random.split(key, 3)
    bound = 1.0 / jnp.sqrt(jnp.float32(nh))
    w_out = jax.random.uniform(kw2, (label, nh), jnp.float32, -bound, bound)  # nn.Linear weight
    b_out = jax.random.uniform(kb2, (label,), jnp.float32, -bound, bound)     # nn.Linear bias

    # Kernel-side form: transpose to (NH, L), zero-pad the label dim to 128
    # lanes, split NH back into (N, H_last) so the kernel never flattens.
    l_pad = ((label + LANE - 1) // LANE) * LANE
    w_out_t_pad = jnp.zeros((nh, l_pad), jnp.float32).at[:, :label].set(w_out.T)
    w_out_3d_pad = w_out_t_pad.reshape(nb_nodes, h_last, l_pad)
    b_out_pad = jnp.zeros((1, l_pad), jnp.float32).at[:, :label].set(b_out)

    return {
        "layers": layers,
        "out_w": w_out,              # raw nn.Linear weight (reference path)
        "out_b": b_out,
        "out_w3d_pad": w_out_3d_pad,
        "out_b_pad": b_out_pad,
        "label": label,
    }


def gcn_normed_forward(params, v, adj):
    # Fold NormalizationLayer into the GC weight: (x / d) @ W == x @ (W / d^T).
    # Done once per call on tiny (Fin, Fout) weights, amortized over the batch.
    w_scaled = [lyr["w"] / lyr["d"].reshape(-1, 1) for lyr in params["layers"]]
    out = gcn_normed_fused(v, adj, w_scaled, params["out_w3d_pad"], params["out_b_pad"])
    return out[:, : params["label"]]


# ----------------------------------------------------------------------------
# Pure-JAX reference (unfused, unfolded, raw nn.Linear weights) for correctness.
# ----------------------------------------------------------------------------
def _reference_forward(params, v, adj):
    hi = jax.lax.Precision.HIGHEST
    x = v
    for lyr in params["layers"]:
        x = x / lyr["d"]                                               # NormalizationLayer
        s = jnp.einsum("bnf,fh->bnh", x, lyr["w"], precision=hi)       # dropout(v) @ W (eval)
        x = jnp.maximum(jnp.einsum("bij,bjh->bih", adj, s, precision=hi), 0.0)
    flat = x.reshape(x.shape[0], -1)                                   # nn.Flatten
    return jnp.einsum("bk,lk->bl", flat, params["out_w"], precision=hi) + params["out_b"]


if __name__ == "__main__":
    key = jax.random.PRNGKey(0)
    B, nb_nodes, feats = 16, 8, 8
    hidden = [16, 16]
    label = 3

    kv, ka, kp = jax.random.split(key, 3)
    v = jax.random.normal(kv, (B, nb_nodes, feats), jnp.float32)
    adj = jax.random.uniform(ka, (B, nb_nodes, nb_nodes), jnp.float32)
    adj = 0.5 * (adj + jnp.transpose(adj, (0, 2, 1)))    # symmetric adjacency

    params = init_gcn_normed_params(kp, feats, hidden, label, nb_nodes, D=1)

    out = jax.block_until_ready(gcn_normed_forward(params, v, adj))
    assert out.shape == (B, label), out.shape
    assert out.dtype == jnp.float32

    ref = jax.block_until_ready(_reference_forward(params, v, adj))
    assert jnp.allclose(out, ref, atol=2e-3, rtol=2e-3), (out, ref)

    print("KERNEL_OK")
</pallas_src>

<mosaic_0001>
module attributes {stable_mosaic.version = 11 : i64} {
  func.func @kernel(%arg0: i32, %arg1: memref<8x8x8xf32, #tpu.memory_space<vmem>>, %arg2: memref<8x8x8xf32, #tpu.memory_space<vmem>>, %arg3: memref<8x16xf32, #tpu.memory_space<vmem>>, %arg4: memref<16x16xf32, #tpu.memory_space<vmem>>, %arg5: memref<8x16x128xf32, #tpu.memory_space<vmem>>, %arg6: memref<1x128xf32, #tpu.memory_space<vmem>>, %arg7: memref<8x128xf32, #tpu.memory_space<vmem>>) attributes {dimension_semantics = [#tpu.dimension_semantics<parallel>], iteration_bounds = array<i64: 2>, scalar_prefetch = 0 : i64, scratch_operands = 0 : i64, tpu.core_type = #tpu.core_type<tc>, window_params = [{transform_indices = @transform_0, window_bounds = array<i64: 8, 8, 8>}, {transform_indices = @transform_1, window_bounds = array<i64: 8, 8, 8>}, {pipeline_mode = #tpu.pipeline_mode<synchronous>, transform_indices = @transform_2, window_bounds = array<i64: 8, 16>}, {pipeline_mode = #tpu.pipeline_mode<synchronous>, transform_indices = @transform_3, window_bounds = array<i64: 16, 16>}, {pipeline_mode = #tpu.pipeline_mode<synchronous>, transform_indices = @transform_4, window_bounds = array<i64: 8, 16, 128>}, {pipeline_mode = #tpu.pipeline_mode<synchronous>, transform_indices = @transform_5, window_bounds = array<i64: 1, 128>}, {transform_indices = @transform_6, window_bounds = array<i64: 8, 128>}]} {
    %c0 = arith.constant 0 : index
    %c0_0 = arith.constant 0 : index
    %c0_1 = arith.constant 0 : index
    %0 = vector.load %arg2[%c0, %c0_0, %c0_1] : memref<8x8x8xf32, #tpu.memory_space<vmem>>, vector<8x8x8xf32>
    %c0_2 = arith.constant 0 : index
    %c0_3 = arith.constant 0 : index
    %c0_4 = arith.constant 0 : index
    %1 = vector.load %arg1[%c0_2, %c0_3, %c0_4] : memref<8x8x8xf32, #tpu.memory_space<vmem>>, vector<8x8x8xf32>
    %2 = vector.shape_cast %1 : vector<8x8x8xf32> to vector<64x8xf32>
    %c0_5 = arith.constant 0 : index
    %c0_6 = arith.constant 0 : index
    %3 = vector.load %arg3[%c0_5, %c0_6] : memref<8x16xf32, #tpu.memory_space<vmem>>, vector<8x16xf32>
    %cst = arith.constant dense<0.000000e+00> : vector<64x16xf32>
    %4 = tpu.matmul %2, %3, %cst {dimension_numbers = #tpu.dot_dimension_numbers<[1], [0], [0], [1], [0, 0, 1, 1], [], []>} : vector<64x8xf32>, vector<8x16xf32>, vector<64x16xf32> -> vector<64x16xf32>
    %5 = vector.shape_cast %4 : vector<64x16xf32> to vector<8x8x16xf32>
    "tpu.trace_start"() <{level = 10 : i32, message = "bij,bjh->bih"}> : () -> ()
    %cst_7 = arith.constant dense<0.000000e+00> : vector<8x8x16xf32>
    %6 = tpu.matmul %0, %5, %cst_7 {dimension_numbers = #tpu.dot_dimension_numbers<[2], [1], [1], [2], [0, 0, 0, 1, 1, 2], [0], [0]>} : vector<8x8x8xf32>, vector<8x8x16xf32>, vector<8x8x16xf32> -> vector<8x8x16xf32>
    "tpu.trace_stop"() : () -> ()
    %cst_8 = arith.constant 0.000000e+00 : f32
    %7 = vector.broadcast %cst_8 : f32 to vector<8x8x16xf32>
    %8 = arith.maximumf %6, %7 : vector<8x8x16xf32>
    %9 = vector.shape_cast %8 : vector<8x8x16xf32> to vector<64x16xf32>
    %c0_9 = arith.constant 0 : index
    %c0_10 = arith.constant 0 : index
    %10 = vector.load %arg4[%c0_9, %c0_10] : memref<16x16xf32, #tpu.memory_space<vmem>>, vector<16x16xf32>
    %cst_11 = arith.constant dense<0.000000e+00> : vector<64x16xf32>
    %11 = tpu.matmul %9, %10, %cst_11 {dimension_numbers = #tpu.dot_dimension_numbers<[1], [0], [0], [1], [0, 0, 1, 1], [], []>} : vector<64x16xf32>, vector<16x16xf32>, vector<64x16xf32> -> vector<64x16xf32>
    %12 = vector.shape_cast %11 : vector<64x16xf32> to vector<8x8x16xf32>
    "tpu.trace_start"() <{level = 10 : i32, message = "bij,bjh->bih"}> : () -> ()
    %cst_12 = arith.constant dense<0.000000e+00> : vector<8x8x16xf32>
    %13 = tpu.matmul %0, %12, %cst_12 {dimension_numbers = #tpu.dot_dimension_numbers<[2], [1], [1], [2], [0, 0, 0, 1, 1, 2], [0], [0]>} : vector<8x8x8xf32>, vector<8x8x16xf32>, vector<8x8x16xf32> -> vector<8x8x16xf32>
    "tpu.trace_stop"() : () -> ()
    %cst_13 = arith.constant 0.000000e+00 : f32
    %14 = vector.broadcast %cst_13 : f32 to vector<8x8x16xf32>
    %15 = arith.maximumf %13, %14 : vector<8x8x16xf32>
    %16 = vector.shape_cast %15 : vector<8x8x16xf32> to vector<64x16xf32>
    %17 = tpu.iota {dimensions = array<i32: 1>} : vector<8x64xi32>
    %18 = tpu.iota {dimensions = array<i32: 0>} : vector<8x64xi32>
    %c8_i32 = arith.constant 8 : i32
    %19 = vector.broadcast %c8_i32 : i32 to vector<8x64xi32>
    %20 = arith.muli %18, %19 : vector<8x64xi32>
    %cst_14 = arith.constant 0.000000e+00 : f32
    %21 = vector.broadcast %cst_14 : f32 to vector<8x128xf32>
    %c0_i32 = arith.constant 0 : i32
    %22 = vector.broadcast %c0_i32 : i32 to vector<8x64xi32>
    %23 = arith.addi %20, %22 : vector<8x64xi32>
    %24 = arith.cmpi eq, %17, %23 : vector<8x64xi32>
    %25 = arith.extui %24 : vector<8x64xi1> to vector<8x64xi32>
    %26 = arith.sitofp %25 : vector<8x64xi32> to vector<8x64xf32>
    %cst_15 = arith.constant dense<0.000000e+00> : vector<8x16xf32>
    %27 = tpu.matmul %26, %16, %cst_15 {dimension_numbers = #tpu.dot_dimension_numbers<[1], [0], [0], [1], [0, 0, 1, 1], [], []>} : vector<8x64xf32>, vector<64x16xf32>, vector<8x16xf32> -> vector<8x16xf32>
    %c0_16 = arith.constant 0 : index
    %c0_17 = arith.constant 0 : index
    %c0_18 = arith.constant 0 : index
    %28 = vector.load %arg5[%c0_16, %c0_17, %c0_18] : memref<8x16x128xf32, #tpu.memory_space<vmem>>, vector<1x16x128xf32>
    %29 = vector.shape_cast %28 : vector<1x16x128xf32> to vector<16x128xf32>
    %cst_19 = arith.constant dense<0.000000e+00> : vector<8x128xf32>
    %30 = tpu.matmul %27, %29, %cst_19 {dimension_numbers = #tpu.dot_dimension_numbers<[1], [0], [0], [1], [0, 0, 1, 1], [], []>} : vector<8x16xf32>, vector<16x128xf32>, vector<8x128xf32> -> vector<8x128xf32>
    %31 = arith.addf %21, %30 : vector<8x128xf32>
    %c1_i32 = arith.constant 1 : i32
    %32 = vector.broadcast %c1_i32 : i32 to vector<8x64xi32>
    %33 = arith.addi %20, %32 : vector<8x64xi32>
    %34 = arith.cmpi eq, %17, %33 : vector<8x64xi32>
    %35 = arith.extui %34 : vector<8x64xi1> to vector<8x64xi32>
    %36 = arith.sitofp %35 : vector<8x64xi32> to vector<8x64xf32>
    %cst_20 = arith.constant dense<0.000000e+00> : vector<8x16xf32>
    %37 = tpu.matmul %36, %16, %cst_20 {dimension_numbers = #tpu.dot_dimension_numbers<[1], [0], [0], [1], [0, 0, 1, 1], [], []>} : vector<8x64xf32>, vector<64x16xf32>, vector<8x16xf32> -> vector<8x16xf32>
    %c1 = arith.constant 1 : index
    %c0_21 = arith.constant 0 : index
    %c0_22 = arith.constant 0 : index
    %38 = vector.load %arg5[%c1, %c0_21, %c0_22] : memref<8x16x128xf32, #tpu.memory_space<vmem>>, vector<1x16x128xf32>
    %39 = vector.shape_cast %38 : vector<1x16x128xf32> to vector<16x128xf32>
    %cst_23 = arith.constant dense<0.000000e+00> : vector<8x128xf32>
    %40 = tpu.matmul %37, %39, %cst_23 {dimension_numbers = #tpu.dot_dimension_numbers<[1], [0], [0], [1], [0, 0, 1, 1], [], []>} : vector<8x16xf32>, vector<16x128xf32>, vector<8x128xf32> -> vector<8x128xf32>
    %41 = arith.addf %31, %40 : vector<8x128xf32>
    %c2_i32 = arith.constant 2 : i32
    %42 = vector.broadcast %c2_i32 : i32 to vector<8x64xi32>
    %43 = arith.addi %20, %42 : vector<8x64xi32>
    %44 = arith.cmpi eq, %17, %43 : vector<8x64xi32>
    %45 = arith.extui %44 : vector<8x64xi1> to vector<8x64xi32>
    %46 = arith.sitofp %45 : vector<8x64xi32> to vector<8x64xf32>
    %cst_24 = arith.constant dense<0.000000e+00> : vector<8x16xf32>
    %47 = tpu.matmul %46, %16, %cst_24 {dimension_numbers = #tpu.dot_dimension_numbers<[1], [0], [0], [1], [0, 0, 1, 1], [], []>} : vector<8x64xf32>, vector<64x16xf32>, vector<8x16xf32> -> vector<8x16xf32>
    %c2 = arith.constant 2 : index
    %c0_25 = arith.constant 0 : index
    %c0_26 = arith.constant 0 : index
    %48 = vector.load %arg5[%c2, %c0_25, %c0_26] : memref<8x16x128xf32, #tpu.memory_space<vmem>>, vector<1x16x128xf32>
    %49 = vector.shape_cast %48 : vector<1x16x128xf32> to vector<16x128xf32>
    %cst_27 = arith.constant dense<0.000000e+00> : vector<8x128xf32>
    %50 = tpu.matmul %47, %49, %cst_27 {dimension_numbers = #tpu.dot_dimension_numbers<[1], [0], [0], [1], [0, 0, 1, 1], [], []>} : vector<8x16xf32>, vector<16x128xf32>, vector<8x128xf32> -> vector<8x128xf32>
    %51 = arith.addf %41, %50 : vector<8x128xf32>
    %c3_i32 = arith.constant 3 : i32
    %52 = vector.broadcast %c3_i32 : i32 to vector<8x64xi32>
    %53 = arith.addi %20, %52 : vector<8x64xi32>
    %54 = arith.cmpi eq, %17, %53 : vector<8x64xi32>
    %55 = arith.extui %54 : vector<8x64xi1> to vector<8x64xi32>
    %56 = arith.sitofp %55 : vector<8x64xi32> to vector<8x64xf32>
    %cst_28 = arith.constant dense<0.000000e+00> : vector<8x16xf32>
    %57 = tpu.matmul %56, %16, %cst_28 {dimension_numbers = #tpu.dot_dimension_numbers<[1], [0], [0], [1], [0, 0, 1, 1], [], []>} : vector<8x64xf32>, vector<64x16xf32>, vector<8x16xf32> -> vector<8x16xf32>
    %c3 = arith.constant 3 : index
    %c0_29 = arith.constant 0 : index
    %c0_30 = arith.constant 0 : index
    %58 = vector.load %arg5[%c3, %c0_29, %c0_30] : memref<8x16x128xf32, #tpu.memory_space<vmem>>, vector<1x16x128xf32>
    %59 = vector.shape_cast %58 : vector<1x16x128xf32> to vector<16x128xf32>
    %cst_31 = arith.constant dense<0.000000e+00> : vector<8x128xf32>
    %60 = tpu.matmul %57, %59, %cst_31 {dimension_numbers = #tpu.dot_dimension_numbers<[1], [0], [0], [1], [0, 0, 1, 1], [], []>} : vector<8x16xf32>, vector<16x128xf32>, vector<8x128xf32> -> vector<8x128xf32>
    %61 = arith.addf %51, %60 : vector<8x128xf32>
    %c4_i32 = arith.constant 4 : i32
    %62 = vector.broadcast %c4_i32 : i32 to vector<8x64xi32>
    %63 = arith.addi %20, %62 : vector<8x64xi32>
    %64 = arith.cmpi eq, %17, %63 : vector<8x64xi32>
    %65 = arith.extui %64 : vector<8x64xi1> to vector<8x64xi32>
    %66 = arith.sitofp %65 : vector<8x64xi32> to vector<8x64xf32>
    %cst_32 = arith.constant dense<0.000000e+00> : vector<8x16xf32>
    %67 = tpu.matmul %66, %16, %cst_32 {dimension_numbers = #tpu.dot_dimension_numbers<[1], [0], [0], [1], [0, 0, 1, 1], [], []>} : vector<8x64xf32>, vector<64x16xf32>, vector<8x16xf32> -> vector<8x16xf32>
    %c4 = arith.constant 4 : index
    %c0_33 = arith.constant 0 : index
    %c0_34 = arith.constant 0 : index
    %68 = vector.load %arg5[%c4, %c0_33, %c0_34] : memref<8x16x128xf32, #tpu.memory_space<vmem>>, vector<1x16x128xf32>
    %69 = vector.shape_cast %68 : vector<1x16x128xf32> to vector<16x128xf32>
    %cst_35 = arith.constant dense<0.000000e+00> : vector<8x128xf32>
    %70 = tpu.matmul %67, %69, %cst_35 {dimension_numbers = #tpu.dot_dimension_numbers<[1], [0], [0], [1], [0, 0, 1, 1], [], []>} : vector<8x16xf32>, vector<16x128xf32>, vector<8x128xf32> -> vector<8x128xf32>
    %71 = arith.addf %61, %70 : vector<8x128xf32>
    %c5_i32 = arith.constant 5 : i32
    %72 = vector.broadcast %c5_i32 : i32 to vector<8x64xi32>
    %73 = arith.addi %20, %72 : vector<8x64xi32>
    %74 = arith.cmpi eq, %17, %73 : vector<8x64xi32>
    %75 = arith.extui %74 : vector<8x64xi1> to vector<8x64xi32>
    %76 = arith.sitofp %75 : vector<8x64xi32> to vector<8x64xf32>
    %cst_36 = arith.constant dense<0.000000e+00> : vector<8x16xf32>
    %77 = tpu.matmul %76, %16, %cst_36 {dimension_numbers = #tpu.dot_dimension_numbers<[1], [0], [0], [1], [0, 0, 1, 1], [], []>} : vector<8x64xf32>, vector<64x16xf32>, vector<8x16xf32> -> vector<8x16xf32>
    %c5 = arith.constant 5 : index
    %c0_37 = arith.constant 0 : index
    %c0_38 = arith.constant 0 : index
    %78 = vector.load %arg5[%c5, %c0_37, %c0_38] : memref<8x16x128xf32, #tpu.memory_space<vmem>>, vector<1x16x128xf32>
    %79 = vector.shape_cast %78 : vector<1x16x128xf32> to vector<16x128xf32>
    %cst_39 = arith.constant dense<0.000000e+00> : vector<8x128xf32>
    %80 = tpu.matmul %77, %79, %cst_39 {dimension_numbers = #tpu.dot_dimension_numbers<[1], [0], [0], [1], [0, 0, 1, 1], [], []>} : vector<8x16xf32>, vector<16x128xf32>, vector<8x128xf32> -> vector<8x128xf32>
    %81 = arith.addf %71, %80 : vector<8x128xf32>
    %c6_i32 = arith.constant 6 : i32
    %82 = vector.broadcast %c6_i32 : i32 to vector<8x64xi32>
    %83 = arith.addi %20, %82 : vector<8x64xi32>
    %84 = arith.cmpi eq, %17, %83 : vector<8x64xi32>
    %85 = arith.extui %84 : vector<8x64xi1> to vector<8x64xi32>
    %86 = arith.sitofp %85 : vector<8x64xi32> to vector<8x64xf32>
    %cst_40 = arith.constant dense<0.000000e+00> : vector<8x16xf32>
    %87 = tpu.matmul %86, %16, %cst_40 {dimension_numbers = #tpu.dot_dimension_numbers<[1], [0], [0], [1], [0, 0, 1, 1], [], []>} : vector<8x64xf32>, vector<64x16xf32>, vector<8x16xf32> -> vector<8x16xf32>
    %c6 = arith.constant 6 : index
    %c0_41 = arith.constant 0 : index
    %c0_42 = arith.constant 0 : index
    %88 = vector.load %arg5[%c6, %c0_41, %c0_42] : memref<8x16x128xf32, #tpu.memory_space<vmem>>, vector<1x16x128xf32>
    %89 = vector.shape_cast %88 : vector<1x16x128xf32> to vector<16x128xf32>
    %cst_43 = arith.constant dense<0.000000e+00> : vector<8x128xf32>
    %90 = tpu.matmul %87, %89, %cst_43 {dimension_numbers = #tpu.dot_dimension_numbers<[1], [0], [0], [1], [0, 0, 1, 1], [], []>} : vector<8x16xf32>, vector<16x128xf32>, vector<8x128xf32> -> vector<8x128xf32>
    %91 = arith.addf %81, %90 : vector<8x128xf32>
    %c7_i32 = arith.constant 7 : i32
    %92 = vector.broadcast %c7_i32 : i32 to vector<8x64xi32>
    %93 = arith.addi %20, %92 : vector<8x64xi32>
    %94 = arith.cmpi eq, %17, %93 : vector<8x64xi32>
    %95 = arith.extui %94 : vector<8x64xi1> to vector<8x64xi32>
    %96 = arith.sitofp %95 : vector<8x64xi32> to vector<8x64xf32>
    %cst_44 = arith.constant dense<0.000000e+00> : vector<8x16xf32>
    %97 = tpu.matmul %96, %16, %cst_44 {dimension_numbers = #tpu.dot_dimension_numbers<[1], [0], [0], [1], [0, 0, 1, 1], [], []>} : vector<8x64xf32>, vector<64x16xf32>, vector<8x16xf32> -> vector<8x16xf32>
    %c7 = arith.constant 7 : index
    %c0_45 = arith.constant 0 : index
    %c0_46 = arith.constant 0 : index
    %98 = vector.load %arg5[%c7, %c0_45, %c0_46] : memref<8x16x128xf32, #tpu.memory_space<vmem>>, vector<1x16x128xf32>
    %99 = vector.shape_cast %98 : vector<1x16x128xf32> to vector<16x128xf32>
    %cst_47 = arith.constant dense<0.000000e+00> : vector<8x128xf32>
    %100 = tpu.matmul %97, %99, %cst_47 {dimension_numbers = #tpu.dot_dimension_numbers<[1], [0], [0], [1], [0, 0, 1, 1], [], []>} : vector<8x16xf32>, vector<16x128xf32>, vector<8x128xf32> -> vector<8x128xf32>
    %101 = arith.addf %91, %100 : vector<8x128xf32>
    %c0_48 = arith.constant 0 : index
    %c0_49 = arith.constant 0 : index
    %102 = vector.load %arg6[%c0_48, %c0_49] : memref<1x128xf32, #tpu.memory_space<vmem>>, vector<1x128xf32>
    %103 = vector.broadcast %102 : vector<1x128xf32> to vector<8x128xf32>
    %104 = arith.addf %101, %103 : vector<8x128xf32>
    %c0_50 = arith.constant 0 : index
    %c0_51 = arith.constant 0 : index
    %105 = vector.load %arg7[%c0_50, %c0_51] : memref<8x128xf32, #tpu.memory_space<vmem>>, vector<8x128xf32>
    tpu.vector_store %arg7[%c0_50, %c0_51], %104 {strides = array<i32>} : memref<8x128xf32, #tpu.memory_space<vmem>>, vector<8x128xf32>,
    return
  }
  func.func @transform_0(%arg0: i32) -> (i32, i32, i32) {
    %c0_i32 = arith.constant 0 : i32
    %c0_i32_0 = arith.constant 0 : i32
    %c0_i32_1 = arith.constant 0 : i32
    return %arg0, %c0_i32, %c0_i32_0 : i32, i32, i32
  }
  func.func @transform_1(%arg0: i32) -> (i32, i32, i32) {
    %c0_i32 = arith.constant 0 : i32
    %c0_i32_0 = arith.constant 0 : i32
    %c0_i32_1 = arith.constant 0 : i32
    return %arg0, %c0_i32, %c0_i32_0 : i32, i32, i32
  }
  func.func @transform_2(%arg0: i32) -> (i32, i32) {
    %c0_i32 = arith.constant 0 : i32
    %c0_i32_0 = arith.constant 0 : i32
    %c0_i32_1 = arith.constant 0 : i32
    return %c0_i32, %c0_i32_0 : i32, i32
  }
  func.func @transform_3(%arg0: i32) -> (i32, i32) {
    %c0_i32 = arith.constant 0 : i32
    %c0_i32_0 = arith.constant 0 : i32
    %c0_i32_1 = arith.constant 0 : i32
    return %c0_i32, %c0_i32_0 : i32, i32
  }
  func.func @transform_4(%arg0: i32) -> (i32, i32, i32) {
    %c0_i32 = arith.constant 0 : i32
    %c0_i32_0 = arith.constant 0 : i32
    %c0_i32_1 = arith.constant 0 : i32
    %c0_i32_2 = arith.constant 0 : i32
    return %c0_i32, %c0_i32_0, %c0_i32_1 : i32, i32, i32
  }
  func.func @transform_5(%arg0: i32) -> (i32, i32) {
    %c0_i32 = arith.constant 0 : i32
    %c0_i32_0 = arith.constant 0 : i32
    %c0_i32_1 = arith.constant 0 : i32
    return %c0_i32, %c0_i32_0 : i32, i32
  }
  func.func @transform_6(%arg0: i32) -> (i32, i32) {
    %c0_i32 = arith.constant 0 : i32
    %c0_i32_0 = arith.constant 0 : i32
    return %arg0, %c0_i32 : i32, i32
  }
}

</mosaic_0001>

<llo_original>
// kernel: tpu_custom_call.1
$region0: #{tpu_custom_call.1}
  #allocation0 [shape = 'u32[]', space=smem, size = 0x4, offset = 0x4, fixed_abs, tag = 'smem constant byte address 0x4 - core index']
  #allocation1 [shape = 'u32[144,128]{1,0:T(1,128)}', space=vmem, size = 0x12000, scoped, tag = 'internal scratch']
  %s0 = inlined_call_operand.vmem [shape: f32[16,8,8], index: 0, kind: input, shape index: {}]
  %s1 = inlined_call_operand.vmem [shape: f32[16,8,8], index: 1, kind: input, shape index: {}]
  %s2 = inlined_call_operand.vmem [shape: f32[8,16], index: 2, kind: input, shape index: {}]
  %s3 = inlined_call_operand.vmem [shape: f32[16,16], index: 3, kind: input, shape index: {}]
  %s4 = inlined_call_operand.vmem [shape: f32[8,16,128], index: 4, kind: input, shape index: {}]
  %s5 = inlined_call_operand.vmem [shape: f32[1,128], index: 5, kind: input, shape index: {}]
  %s6 = inlined_call_operand.hbm [shape: f32[16,128], index: 6, kind: output, shape index: {}]
  %s7 = sld [smem:[#allocation0]]
  $region57: #{tpu_custom_call.1} parent=0
    _
  %s9 = ssub.s32 1, %s7
  %s10 = scalar_select 0, %s9, %s7
  $region1: #{tpu_custom_call.1} parent=0
    #allocation2 [shape = 'u8[8192]{0}', space=vmem, size = 0x2000, scoped, tag = 'output window, operand 0']
    #allocation3 [shape = 's32[2]{0}', space=sflag, size = 0x8, scoped, tag = 'scoped memory for tpu_custom_call.1']
    %11 = vsyncpa [#allocation3], 0
    %s12 = scalar_lea.sflag [#allocation3], 1
    %13 = vsyncpa %s12, 0
    loop: start=0, step=1, limit=4
    $region2: #{tpu_custom_call.1} parent=1 // loop_pre_header
      _
    $region3: #{tpu_custom_call.1} parent=1 // loop_header
      %s15 = sphi 0, %s19
      %p16 = scmp.ge.s32.totalorder %s15, 4
      %s25 = sphi 0, %s27
      %s28 = sphi 0, %s25
      %s29 = sphi 0, %s28
      %s45 = sphi 0, %s29
      %s51 = sphi 0, %s53
      %s54 = sphi 0, %s51
      %s55 = sphi 0, %s54
      %s71 = sphi 0, %s55
      %s75 = sphi 0, %s75
      %s77 = sphi 0, %s75
      %s78 = sphi 0, %s77
      %s92 = sphi 0, %s78
      %s96 = sphi 0, %s96
      %s98 = sphi 0, %s96
      %s99 = sphi 0, %s98
      %s113 = sphi 0, %s99
      %s117 = sphi 0, %s117
      %s119 = sphi 0, %s117
      %s120 = sphi 0, %s119
      %s134 = sphi 0, %s120
      %s138 = sphi 0, %s138
      %s140 = sphi 0, %s138
      %s141 = sphi 0, %s140
      %s155 = sphi 0, %s141
      %s161 = sphi 0, %s163
      %s164 = sphi 0, %s161
      %s165 = sphi 0, %s164
      %s181 = sphi 0, %s165
    $region4: #{tpu_custom_call.1} parent=1 // loop_header_branch
      %18 = sbr.rel (%p16) target = $region8
    $region5: #{tpu_custom_call.1} parent=1 // loop_body
      %s20 = ssub.s32 %s15, 1
      %s21 = ssub.s32 %s15, 2
      %s22 = sadd.s32 %s15, 1
      %s23 = ssub.s32 %s15, %s22
      %p24 = scmp.eq.s32.totalorder %s23, 0
      %s26 = sadd.s32 %s25, 1
      %s27 = scalar_select %p24, %s25, %s26
      %p30 = pneg %p24
      %p31 = scmp.eq.s32.totalorder %s15, 1
      %p32 = por %p30, %p31
      %p33 = scmp.ne.s32.totalorder %s25, %s28
      %p34 = scmp.eq.s32.totalorder %s15, 0
      %p35 = por %p33, %p34
      %p36 = scmp.ne.s32.totalorder %s25, %s28
      %p37 = scmp.eq.s32.totalorder %s20, 1
      %p38 = por %p36, %p37
      %p39 = scmp.ne.s32.totalorder %s28, %s29
      %p40 = scmp.eq.s32.totalorder %s20, 0
      %p41 = por %p39, %p40
      %p42 = scmp.ne.s32.totalorder %s28, %s29
      %p43 = scmp.eq.s32.totalorder %s21, 1
      %p44 = por %p42, %p43
      %p46 = scmp.ne.s32.totalorder %s29, %s45
      %p47 = scmp.eq.s32.totalorder %s21, 0
      %p48 = por %p46, %p47
      %s49 = ssub.s32 %s15, %s22
      %p50 = scmp.eq.s32.totalorder %s49, 0
      %s52 = sadd.s32 %s51, 1
      %s53 = scalar_select %p50, %s51, %s52
      %p56 = pneg %p50
      %p57 = scmp.eq.s32.totalorder %s15, 1
      %p58 = por %p56, %p57
      %p59 = scmp.ne.s32.totalorder %s51, %s54
      %p60 = scmp.eq.s32.totalorder %s15, 0
      %p61 = por %p59, %p60
      %p62 = scmp.ne.s32.totalorder %s51, %s54
      %p63 = scmp.eq.s32.totalorder %s20, 1
      %p64 = por %p62, %p63
      %p65 = scmp.ne.s32.totalorder %s54, %s55
      %p66 = scmp.eq.s32.totalorder %s20, 0
      %p67 = por %p65, %p66
      %p68 = scmp.ne.s32.totalorder %s54, %s55
      %p69 = scmp.eq.s32.totalorder %s21, 1
      %p70 = por %p68, %p69
      %p72 = scmp.ne.s32.totalorder %s55, %s71
      %p73 = scmp.eq.s32.totalorder %s21, 0
      %p74 = por %p72, %p73
      %s76 = sadd.s32 %s75, 1
      %p79 = scmp.eq.s32.totalorder %s15, 1
      %p80 = scmp.ne.s32.totalorder %s75, %s77
      %p81 = scmp.eq.s32.totalorder %s15, 0
      %p82 = por %p80, %p81
      %p83 = scmp.ne.s32.totalorder %s75, %s77
      %p84 = scmp.eq.s32.totalorder %s20, 1
      %p85 = por %p83, %p84
      %p86 = scmp.ne.s32.totalorder %s77, %s78
      %p87 = scmp.eq.s32.totalorder %s20, 0
      %p88 = por %p86, %p87
      %p89 = scmp.ne.s32.totalorder %s77, %s78
      %p90 = scmp.eq.s32.totalorder %s21, 1
      %p91 = por %p89, %p90
      %p93 = scmp.ne.s32.totalorder %s78, %s92
      %p94 = scmp.eq.s32.totalorder %s21, 0
      %p95 = por %p93, %p94
      %s97 = sadd.s32 %s96, 1
      %p100 = scmp.eq.s32.totalorder %s15, 1
      %p101 = scmp.ne.s32.totalorder %s96, %s98
      %p102 = scmp.eq.s32.totalorder %s15, 0
      %p103 = por %p101, %p102
      %p104 = scmp.ne.s32.totalorder %s96, %s98
      %p105 = scmp.eq.s32.totalorder %s20, 1
      %p106 = por %p104, %p105
      %p107 = scmp.ne.s32.totalorder %s98, %s99
      %p108 = scmp.eq.s32.totalorder %s20, 0
      %p109 = por %p107, %p108
      %p110 = scmp.ne.s32.totalorder %s98, %s99
      %p111 = scmp.eq.s32.totalorder %s21, 1
      %p112 = por %p110, %p111
      %p114 = scmp.ne.s32.totalorder %s99, %s113
      %p115 = scmp.eq.s32.totalorder %s21, 0
      %p116 = por %p114, %p115
      %s118 = sadd.s32 %s117, 1
      %p121 = scmp.eq.s32.totalorder %s15, 1
      %p122 = scmp.ne.s32.totalorder %s117, %s119
      %p123 = scmp.eq.s32.totalorder %s15, 0
      %p124 = por %p122, %p123
      %p125 = scmp.ne.s32.totalorder %s117, %s119
      %p126 = scmp.eq.s32.totalorder %s20, 1
      %p127 = por %p125, %p126
      %p128 = scmp.ne.s32.totalorder %s119, %s120
      %p129 = scmp.eq.s32.totalorder %s20, 0
      %p130 = por %p128, %p129
      %p131 = scmp.ne.s32.totalorder %s119, %s120
      %p132 = scmp.eq.s32.totalorder %s21, 1
      %p133 = por %p131, %p132
      %p135 = scmp.ne.s32.totalorder %s120, %s134
      %p136 = scmp.eq.s32.totalorder %s21, 0
      %p137 = por %p135, %p136
      %s139 = sadd.s32 %s138, 1
      %p142 = scmp.eq.s32.totalorder %s15, 1
      %p143 = scmp.ne.s32.totalorder %s138, %s140
      %p144 = scmp.eq.s32.totalorder %s15, 0
      %p145 = por %p143, %p144
      %p146 = scmp.ne.s32.totalorder %s138, %s140
      %p147 = scmp.eq.s32.totalorder %s20, 1
      %p148 = por %p146, %p147
      %p149 = scmp.ne.s32.totalorder %s140, %s141
      %p150 = scmp.eq.s32.totalorder %s20, 0
      %p151 = por %p149, %p150
      %p152 = scmp.ne.s32.totalorder %s140, %s141
      %p153 = scmp.eq.s32.totalorder %s21, 1
      %p154 = por %p152, %p153
      %p156 = scmp.ne.s32.totalorder %s141, %s155
      %p157 = scmp.eq.s32.totalorder %s21, 0
      %p158 = por %p156, %p157
      %s159 = ssub.s32 %s15, %s22
      %p160 = scmp.eq.s32.totalorder %s159, 0
      %s162 = sadd.s32 %s161, 1
      %s163 = scalar_select %p160, %s161, %s162
      %p166 = pneg %p160
      %p167 = scmp.eq.s32.totalorder %s15, 1
      %p168 = por %p166, %p167
      %p169 = scmp.ne.s32.totalorder %s161, %s164
      %p170 = scmp.eq.s32.totalorder %s15, 0
      %p171 = por %p169, %p170
      %p172 = scmp.ne.s32.totalorder %s161, %s164
      %p173 = scmp.eq.s32.totalorder %s20, 1
      %p174 = por %p172, %p173
      %p175 = scmp.ne.s32.totalorder %s164, %s165
      %p176 = scmp.eq.s32.totalorder %s20, 0
      %p177 = por %p175, %p176
      %p178 = scmp.ne.s32.totalorder %s164, %s165
      %p179 = scmp.eq.s32.totalorder %s21, 1
      %p180 = por %p178, %p179
      %p182 = scmp.ne.s32.totalorder %s165, %s181
      %p183 = scmp.eq.s32.totalorder %s21, 0
      %p184 = por %p182, %p183
      %p185 = scmp.le.s32.totalorder 1, %s15
      %p186 = scmp.lt.s32.totalorder %s15, 3
      %p187 = pnand %p185, %p186
      %p188 = pneg %p187
      // Predicated region
      $region9: #{tpu_custom_call.1} parent=5 // pred_check
        _
      $region10: #{tpu_custom_call.1} parent=5 // pred_check_branch
        %190 = sbr.rel (%p187) target = $region12
      $region11: #{tpu_custom_call.1} parent=5 // pred_region
        %s191 = ssub.s32 %s15, 1
        // Predicated region
        $region13: #{tpu_custom_call.1} parent=11 // pred_check
          %p192 = pneg %p88
        $region14: #{tpu_custom_call.1} parent=11 // pred_check_branch
          %194 = sbr.rel (%p192) target = $region16
        $region15: #{tpu_custom_call.1} parent=11 // pred_region
          _
        $region16: #{tpu_custom_call.1} parent=11 // pred_fallthru
          _
        // Predicated region
        $region17: #{tpu_custom_call.1} parent=11 // pred_check
          %p195 = pneg %p109
        $region18: #{tpu_custom_call.1} parent=11 // pred_check_branch
          %197 = sbr.rel (%p195) target = $region20
        $region19: #{tpu_custom_call.1} parent=11 // pred_region
          _
        $region20: #{tpu_custom_call.1} parent=11 // pred_fallthru
          _
        // Predicated region
        $region21: #{tpu_custom_call.1} parent=11 // pred_check
          %p198 = pneg %p130
        $region22: #{tpu_custom_call.1} parent=11 // pred_check_branch
          %200 = sbr.rel (%p198) target = $region24
        $region23: #{tpu_custom_call.1} parent=11 // pred_region
          _
        $region24: #{tpu_custom_call.1} parent=11 // pred_fallthru
          _
        // Predicated region
        $region25: #{tpu_custom_call.1} parent=11 // pred_check
          %p201 = pneg %p151
        $region26: #{tpu_custom_call.1} parent=11 // pred_check_branch
          %203 = sbr.rel (%p201) target = $region28
        $region27: #{tpu_custom_call.1} parent=11 // pred_region
          _
        $region28: #{tpu_custom_call.1} parent=11 // pred_fallthru
          _
      $region12: #{tpu_custom_call.1} parent=5 // pred_fallthru
        _
      %p204 = scmp.lt.s32.totalorder %s15, 2
      // Predicated region
      $region29: #{tpu_custom_call.1} parent=5 // pred_check
        %p205 = pneg %p204
      $region30: #{tpu_custom_call.1} parent=5 // pred_check_branch
        %207 = sbr.rel (%p205) target = $region32
      $region31: #{tpu_custom_call.1} parent=5 // pred_region
        // Predicated region
        $region33: #{tpu_custom_call.1} parent=31 // pred_check
          %p208 = pneg %p35
        $region34: #{tpu_custom_call.1} parent=31 // pred_check_branch
          %210 = sbr.rel (%p208) target = $region36
        $region35: #{tpu_custom_call.1} parent=31 // pred_region
          %s211 = smul.u32 8, %s15
          %p212 = scmp.lt.s32.totalorder %s211, 15
          %s213 = scalar_select %p212, %s211, 15
          %s214 = smul.addr %s213, 8
          %s215 = scalar_lea.vmem %s0, %s214
          %s216 = smul.u32 8, %s15
        $region36: #{tpu_custom_call.1} parent=31 // pred_fallthru
          _
        // Predicated region
        $region37: #{tpu_custom_call.1} parent=31 // pred_check
          %p217 = pneg %p61
        $region38: #{tpu_custom_call.1} parent=31 // pred_check_branch
          %219 = sbr.rel (%p217) target = $region40
        $region39: #{tpu_custom_call.1} parent=31 // pred_region
          %s220 = smul.u32 8, %s15
          %p221 = scmp.lt.s32.totalorder %s220, 15
          %s222 = scalar_select %p221, %s220, 15
          %s223 = smul.addr %s222, 8
          %s224 = scalar_lea.vmem %s1, %s223
          %s225 = smul.u32 8, %s15
        $region40: #{tpu_custom_call.1} parent=31 // pred_fallthru
          _
      $region32: #{tpu_custom_call.1} parent=5 // pred_fallthru
        _
      %p226 = scmp.le.s32.totalorder 1, %s15
      %p227 = scmp.lt.s32.totalorder %s15, 3
      %p228 = pnand %p226, %p227
      %p229 = pneg %p228
      // Predicated region
      $region41: #{tpu_custom_call.1} parent=5 // pred_check
        _
      $region42: #{tpu_custom_call.1} parent=5 // pred_check_branch
        %231 = sbr.rel (%p228) target = $region44
      $region43: #{tpu_custom_call.1} parent=5 // pred_region
        %s232 = ssub.s32 %s15, 1
        %s233 = smul.u32 8, %s20
        %p234 = scmp.lt.s32.totalorder %s233, 15
        %s235 = scalar_select %p234, %s233, 15
        %s236 = smul.addr %s235, 8
        %s237 = scalar_lea.vmem %s0, %s236
        %p238 = pneg %p41
        %p239 = pneg %p38
        %s240 = smul.u32 8, %s20
        %p241 = scmp.lt.s32.totalorder %s240, 15
        %s242 = scalar_select %p241, %s240, 15
        %s243 = smul.addr %s242, 8
        %s244 = scalar_lea.vmem %s1, %s243
        %p245 = pneg %p67
        %p246 = pneg %p64
        %p247 = pneg %p88
        %p248 = pneg %p85
        %p249 = pneg %p109
        %p250 = pneg %p106
        %p251 = pneg %p130
        %p252 = pneg %p127
        %p253 = pneg %p151
        %p254 = pneg %p148
        %p255 = pneg %p177
        %p256 = pneg %p174
        %s257 = sand.u32 %s164, 1
        %s258 = scalar_lea.sflag [#allocation3], %s257
        %s259 = sand.u32 %s164, 1
        %s260 = smul.addr %s259, 8
        %s261 = scalar_lea.vmem [#allocation2], %s260
        %s262 = smul.u32 8, %s20
        %p263 = scmp.lt.s32.totalorder %s262, 15
        %s264 = scalar_select %p263, %s262, 15
        %s265 = smul.addr %s264, 8
        %s266 = scalar_lea.vmem %s0, %s265
        %s267 = smul.u32 8, %s20
        %s268 = smul.u32 8, %s20
        %p269 = scmp.lt.s32.totalorder %s268, 15
        %s270 = scalar_select %p269, %s268, 15
        %s271 = smul.addr %s270, 8
        %s272 = scalar_lea.vmem %s1, %s271
        %s273 = smul.u32 8, %s20
        %v274 = vld [vmem:[%s272] sm:$0xff]
        %v275 = vld [vmem:[%s272 + $0x8] sm:$0xff]
        %v276 = vld [vmem:[%s272 + $0x10] sm:$0xff]
        %v277 = vld [vmem:[%s272 + $0x18] sm:$0xff]
        %v278 = vld [vmem:[%s272 + $0x20] sm:$0xff]
        %v279 = vld [vmem:[%s272 + $0x28] sm:$0xff]
        %v280 = vld [vmem:[%s272 + $0x30] sm:$0xff]
        %v281 = vld [vmem:[%s272 + $0x38] sm:$0xff]
        %v282 = vld [vmem:[%s266] sm:$0xff]
        %v283 = vld [vmem:[%s266 + $0x8] sm:$0xff]
        %v284 = vld [vmem:[%s266 + $0x10] sm:$0xff]
        %v285 = vld [vmem:[%s266 + $0x18] sm:$0xff]
        %v286 = vld [vmem:[%s266 + $0x20] sm:$0xff]
        %v287 = vld [vmem:[%s266 + $0x28] sm:$0xff]
        %v288 = vld [vmem:[%s266 + $0x30] sm:$0xff]
        %v289 = vld [vmem:[%s266 + $0x38] sm:$0xff]
        %v290 = vld [vmem:[%s2] sm:$0xff]
        %vm291 = vcmask 64512
        %v293 = vsel %vm291, %v282, 0
        %v296 = vsel %vm291, %v283, 0
        %v299 = vsel %vm291, %v284, 0
        %v302 = vsel %vm291, %v285, 0
        %v305 = vsel %vm291, %v286, 0
        %v308 = vsel %vm291, %v287, 0
        %v311 = vsel %vm291, %v288, 0
        %v314 = vsel %vm291, %v289, 0
        %316 = vmatprep.subr.mxu0 0.0
        %317 = vmatpush1.msra.mxu0 0.0
        %318 = vmatprep.subr.mxu0 0.0
        %319 = vmatpush1.msra.mxu0 0.0
        %320 = vmatprep.subr.mxu0 0.0
        %321 = vmatpush1.msra.mxu0 0.0
        %322 = vmatprep.subr.mxu0 0.0
        %323 = vmatpush1.msra.mxu0 0.0
        %324 = vmatprep.subr.mxu0 0.0
        %325 = vmatpush1.msra.mxu0 0.0
        %326 = vmatprep.subr.mxu0 0.0
        %327 = vmatpush1.msra.mxu0 0.0
        %328 = vmatprep.subr.mxu0 0.0
        %329 = vmatpush1.msra.mxu0 0.0
        %330 = vmatprep.subr.mxu0 0.0
        %331 = vmatpush1.msra.mxu0 0.0
        %332 = vmatprep.subr.mxu0 0.0
        %333 = vmatpush1.msra.mxu0 0.0
        %334 = vmatprep.subr.mxu0 0.0
        %335 = vmatpush1.msra.mxu0 0.0
        %336 = vmatprep.subr.mxu0 0.0
        %337 = vmatpush1.msra.mxu0 0.0
        %338 = vmatprep.subr.mxu0 0.0
        %339 = vmatpush1.msra.mxu0 0.0
        %340 = vmatprep.subr.mxu0 0.0
        %341 = vmatpush1.msra.mxu0 0.0
        %342 = vmatprep.subr.mxu0 0.0
        %343 = vmatpush1.msra.mxu0 0.0
        %344 = vmatprep.subr.mxu0 0.0
        %345 = vmatpush1.msra.mxu0 0.0
        %346 = vmatprep.subr.mxu0 0.0
        %347 = vmatpush1.msra.mxu0 %v290
        %348 = vmatprep.subr.mxu0 0.0
        %349 = vmatpush2.msra.mxu0 0.0
        %350 = vmatprep.subr.mxu0 0.0
        %351 = vmatpush2.msra.mxu0 0.0
        %352 = vmatprep.subr.mxu0 0.0
        %353 = vmatpush2.msra.mxu0 0.0
        %354 = vmatprep.subr.mxu0 0.0
        %355 = vmatpush2.msra.mxu0 0.0
        %356 = vmatprep.subr.mxu0 0.0
        %357 = vmatpush2.msra.mxu0 0.0
        %358 = vmatprep.subr.mxu0 0.0
        %359 = vmatpush2.msra.mxu0 0.0
        %360 = vmatprep.subr.mxu0 0.0
        %361 = vmatpush2.msra.mxu0 0.0
        %362 = vmatprep.subr.mxu0 0.0
        %363 = vmatpush2.msra.mxu0 0.0
        %364 = vmatprep.subr.mxu0 0.0
        %365 = vmatpush2.msra.mxu0 0.0
        %366 = vmatprep.subr.mxu0 0.0
        %367 = vmatpush2.msra.mxu0 0.0
        %368 = vmatprep.subr.mxu0 0.0
        %369 = vmatpush2.msra.mxu0 0.0
        %370 = vmatprep.subr.mxu0 0.0
        %371 = vmatpush2.msra.mxu0 0.0
        %372 = vmatprep.subr.mxu0 0.0
        %373 = vmatpush2.msra.mxu0 0.0
        %374 = vmatprep.subr.mxu0 0.0
        %375 = vmatpush2.msra.mxu0 0.0
        %376 = vmatprep.subr.mxu0 0.0
        %377 = vmatpush2.msra.mxu0 0.0
        %378 = vmatprep.subr.mxu0 0.0
        %379 = vmatpush2.msra.mxu0 0.0
        %380 = vmatprep.mubr.f32.mxu0 0.0
        %381 = vmatmul.mubr.f32.gmra.mxu0 %v293
        %v382 = vpop.f32.mrf.mxu0
        %v383 = vadd.f32 0.0, %v382
        %v384 = vpop.f32.mrf.mxu0
        %385 = vmatprep.mubr.f32.mxu0 0.0
        %386 = vmatmul.mubr.f32.gmra.mxu0 %v296
        %v387 = vpop.f32.mrf.mxu0
        %v388 = vadd.f32 0.0, %v387
        %v389 = vpop.f32.mrf.mxu0
        %390 = vmatprep.mubr.f32.mxu0 0.0
        %391 = vmatmul.mubr.f32.gmra.mxu0 %v299
        %v392 = vpop.f32.mrf.mxu0
        %v393 = vadd.f32 0.0, %v392
        %v394 = vpop.f32.mrf.mxu0
        %395 = vmatprep.mubr.f32.mxu0 0.0
        %396 = vmatmul.mubr.f32.gmra.mxu0 %v302
        %v397 = vpop.f32.mrf.mxu0
        %v398 = vadd.f32 0.0, %v397
        %v399 = vpop.f32.mrf.mxu0
        %400 = vmatprep.mubr.f32.mxu0 0.0
        %401 = vmatmul.mubr.f32.gmra.mxu0 %v305
        %v402 = vpop.f32.mrf.mxu0
        %v403 = vadd.f32 0.0, %v402
        %v404 = vpop.f32.mrf.mxu0
        %405 = vmatprep.mubr.f32.mxu0 0.0
        %406 = vmatmul.mubr.f32.gmra.mxu0 %v308
        %v407 = vpop.f32.mrf.mxu0
        %v408 = vadd.f32 0.0, %v407
        %v409 = vpop.f32.mrf.mxu0
        %410 = vmatprep.mubr.f32.mxu0 0.0
        %411 = vmatmul.mubr.f32.gmra.mxu0 %v311
        %v412 = vpop.f32.mrf.mxu0
        %v413 = vadd.f32 0.0, %v412
        %v414 = vpop.f32.mrf.mxu0
        %415 = vmatprep.mubr.f32.mxu0 0.0
        %416 = vmatmul.mubr.f32.gmra.mxu0 %v314
        %v417 = vpop.f32.mrf.mxu0
        %v418 = vadd.f32 0.0, %v417
        %v419 = vpop.f32.mrf.mxu0
        %420 = vdwg.mxu0
        %v422 = vsel %vm291, %v274, 0
        %424 = vmatprep.subr.mxu0 0.0
        %425 = vmatpush1.msra.mxu0 0.0
        %426 = vmatprep.subr.mxu0 0.0
        %427 = vmatpush1.msra.mxu0 0.0
        %428 = vmatprep.subr.mxu0 0.0
        %429 = vmatpush1.msra.mxu0 0.0
        %430 = vmatprep.subr.mxu0 0.0
        %431 = vmatpush1.msra.mxu0 0.0
        %432 = vmatprep.subr.mxu0 0.0
        %433 = vmatpush1.msra.mxu0 0.0
        %434 = vmatprep.subr.mxu0 0.0
        %435 = vmatpush1.msra.mxu0 0.0
        %436 = vmatprep.subr.mxu0 0.0
        %437 = vmatpush1.msra.mxu0 0.0
        %438 = vmatprep.subr.mxu0 0.0
        %439 = vmatpush1.msra.mxu0 0.0
        %440 = vmatprep.subr.mxu0 0.0
        %441 = vmatpush1.msra.mxu0 0.0
        %442 = vmatprep.subr.mxu0 0.0
        %443 = vmatpush1.msra.mxu0 0.0
        %444 = vmatprep.subr.mxu0 0.0
        %445 = vmatpush1.msra.mxu0 0.0
        %446 = vmatprep.subr.mxu0 0.0
        %447 = vmatpush1.msra.mxu0 0.0
        %448 = vmatprep.subr.mxu0 0.0
        %449 = vmatpush1.msra.mxu0 0.0
        %450 = vmatprep.subr.mxu0 0.0
        %451 = vmatpush1.msra.mxu0 0.0
        %452 = vmatprep.subr.mxu0 0.0
        %453 = vmatpush1.msra.mxu0 0.0
        %454 = vmatprep.subr.mxu0 0.0
        %455 = vmatpush1.msra.mxu0 %v383
        %456 = vmatprep.subr.mxu0 0.0
        %457 = vmatpush2.msra.mxu0 0.0
        %458 = vmatprep.subr.mxu0 0.0
        %459 = vmatpush2.msra.mxu0 0.0
        %460 = vmatprep.subr.mxu0 0.0
        %461 = vmatpush2.msra.mxu0 0.0
        %462 = vmatprep.subr.mxu0 0.0
        %463 = vmatpush2.msra.mxu0 0.0
        %464 = vmatprep.subr.mxu0 0.0
        %465 = vmatpush2.msra.mxu0 0.0
        %466 = vmatprep.subr.mxu0 0.0
        %467 = vmatpush2.msra.mxu0 0.0
        %468 = vmatprep.subr.mxu0 0.0
        %469 = vmatpush2.msra.mxu0 0.0
        %470 = vmatprep.subr.mxu0 0.0
        %471 = vmatpush2.msra.mxu0 0.0
        %472 = vmatprep.subr.mxu0 0.0
        %473 = vmatpush2.msra.mxu0 0.0
        %474 = vmatprep.subr.mxu0 0.0
        %475 = vmatpush2.msra.mxu0 0.0
        %476 = vmatprep.subr.mxu0 0.0
        %477 = vmatpush2.msra.mxu0 0.0
        %478 = vmatprep.subr.mxu0 0.0
        %479 = vmatpush2.msra.mxu0 0.0
        %480 = vmatprep.subr.mxu0 0.0
        %481 = vmatpush2.msra.mxu0 0.0
        %482 = vmatprep.subr.mxu0 0.0
        %483 = vmatpush2.msra.mxu0 0.0
        %484 = vmatprep.subr.mxu0 0.0
        %485 = vmatpush2.msra.mxu0 0.0
        %486 = vmatprep.subr.mxu0 0.0
        %487 = vmatpush2.msra.mxu0 0.0
        %488 = vmatprep.mubr.f32.mxu0 0.0
        %489 = vmatmul.mubr.f32.gmra.mxu0 %v422
        %v490 = vpop.f32.mrf.mxu0
        %v491 = vadd.f32 0.0, %v490
        %v492 = vpop.f32.mrf.mxu0
        %493 = vdwg.mxu0
        %v495 = vsel %vm291, %v275, 0
        %497 = vmatprep.subr.mxu0 0.0
        %498 = vmatpush1.msra.mxu0 0.0
        %499 = vmatprep.subr.mxu0 0.0
        %500 = vmatpush1.msra.mxu0 0.0
        %501 = vmatprep.subr.mxu0 0.0
        %502 = vmatpush1.msra.mxu0 0.0
        %503 = vmatprep.subr.mxu0 0.0
        %504 = vmatpush1.msra.mxu0 0.0
        %505 = vmatprep.subr.mxu0 0.0
        %506 = vmatpush1.msra.mxu0 0.0
        %507 = vmatprep.subr.mxu0 0.0
        %508 = vmatpush1.msra.mxu0 0.0
        %509 = vmatprep.subr.mxu0 0.0
        %510 = vmatpush1.msra.mxu0 0.0
        %511 = vmatprep.subr.mxu0 0.0
        %512 = vmatpush1.msra.mxu0 0.0
        %513 = vmatprep.subr.mxu0 0.0
        %514 = vmatpush1.msra.mxu0 0.0
        %515 = vmatprep.subr.mxu0 0.0
        %516 = vmatpush1.msra.mxu0 0.0
        %517 = vmatprep.subr.mxu0 0.0
        %518 = vmatpush1.msra.mxu0 0.0
        %519 = vmatprep.subr.mxu0 0.0
        %520 = vmatpush1.msra.mxu0 0.0
        %521 = vmatprep.subr.mxu0 0.0
        %522 = vmatpush1.msra.mxu0 0.0
        %523 = vmatprep.subr.mxu0 0.0
        %524 = vmatpush1.msra.mxu0 0.0
        %525 = vmatprep.subr.mxu0 0.0
        %526 = vmatpush1.msra.mxu0 0.0
        %527 = vmatprep.subr.mxu0 0.0
        %528 = vmatpush1.msra.mxu0 %v388
        %529 = vmatprep.subr.mxu0 0.0
        %530 = vmatpush2.msra.mxu0 0.0
        %531 = vmatprep.subr.mxu0 0.0
        %532 = vmatpush2.msra.mxu0 0.0
        %533 = vmatprep.subr.mxu0 0.0
        %534 = vmatpush2.msra.mxu0 0.0
        %535 = vmatprep.subr.mxu0 0.0
        %536 = vmatpush2.msra.mxu0 0.0
        %537 = vmatprep.subr.mxu0 0.0
        %538 = vmatpush2.msra.mxu0 0.0
        %539 = vmatprep.subr.mxu0 0.0
        %540 = vmatpush2.msra.mxu0 0.0
        %541 = vmatprep.subr.mxu0 0.0
        %542 = vmatpush2.msra.mxu0 0.0
        %543 = vmatprep.subr.mxu0 0.0
        %544 = vmatpush2.msra.mxu0 0.0
        %545 = vmatprep.subr.mxu0 0.0
        %546 = vmatpush2.msra.mxu0 0.0
        %547 = vmatprep.subr.mxu0 0.0
        %548 = vmatpush2.msra.mxu0 0.0
        %549 = vmatprep.subr.mxu0 0.0
        %550 = vmatpush2.msra.mxu0 0.0
        %551 = vmatprep.subr.mxu0 0.0
        %552 = vmatpush2.msra.mxu0 0.0
        %553 = vmatprep.subr.mxu0 0.0
        %554 = vmatpush2.msra.mxu0 0.0
        %555 = vmatprep.subr.mxu0 0.0
        %556 = vmatpush2.msra.mxu0 0.0
        %557 = vmatprep.subr.mxu0 0.0
        %558 = vmatpush2.msra.mxu0 0.0
        %559 = vmatprep.subr.mxu0 0.0
        %560 = vmatpush2.msra.mxu0 0.0
        %561 = vmatprep.mubr.f32.mxu0 0.0
        %562 = vmatmul.mubr.f32.gmra.mxu0 %v495
        %v563 = vpop.f32.mrf.mxu0
        %v564 = vadd.f32 0.0, %v563
        %v565 = vpop.f32.mrf.mxu0
        %566 = vdwg.mxu0
        %v568 = vsel %vm291, %v276, 0
        %570 = vmatprep.subr.mxu0 0.0
        %571 = vmatpush1.msra.mxu0 0.0
        %572 = vmatprep.subr.mxu0 0.0
        %573 = vmatpush1.msra.mxu0 0.0
        %574 = vmatprep.subr.mxu0 0.0
        %575 = vmatpush1.msra.mxu0 0.0
        %576 = vmatprep.subr.mxu0 0.0
        %577 = vmatpush1.msra.mxu0 0.0
        %578 = vmatprep.subr.mxu0 0.0
        %579 = vmatpush1.msra.mxu0 0.0
        %580 = vmatprep.subr.mxu0 0.0
        %581 = vmatpush1.msra.mxu0 0.0
        %582 = vmatprep.subr.mxu0 0.0
        %583 = vmatpush1.msra.mxu0 0.0
        %584 = vmatprep.subr.mxu0 0.0
        %585 = vmatpush1.msra.mxu0 0.0
        %586 = vmatprep.subr.mxu0 0.0
        %587 = vmatpush1.msra.mxu0 0.0
        %588 = vmatprep.subr.mxu0 0.0
        %589 = vmatpush1.msra.mxu0 0.0
        %590 = vmatprep.subr.mxu0 0.0
        %591 = vmatpush1.msra.mxu0 0.0
        %592 = vmatprep.subr.mxu0 0.0
        %593 = vmatpush1.msra.mxu0 0.0
        %594 = vmatprep.subr.mxu0 0.0
        %595 = vmatpush1.msra.mxu0 0.0
        %596 = vmatprep.subr.mxu0 0.0
        %597 = vmatpush1.msra.mxu0 0.0
        %598 = vmatprep.subr.mxu0 0.0
        %599 = vmatpush1.msra.mxu0 0.0
        %600 = vmatprep.subr.mxu0 0.0
        %601 = vmatpush1.msra.mxu0 %v393
        %602 = vmatprep.subr.mxu0 0.0
        %603 = vmatpush2.msra.mxu0 0.0
        %604 = vmatprep.subr.mxu0 0.0
        %605 = vmatpush2.msra.mxu0 0.0
        %606 = vmatprep.subr.mxu0 0.0
        %607 = vmatpush2.msra.mxu0 0.0
        %608 = vmatprep.subr.mxu0 0.0
        %609 = vmatpush2.msra.mxu0 0.0
        %610 = vmatprep.subr.mxu0 0.0
        %611 = vmatpush2.msra.mxu0 0.0
        %612 = vmatprep.subr.mxu0 0.0
        %613 = vmatpush2.msra.mxu0 0.0
        %614 = vmatprep.subr.mxu0 0.0
        %615 = vmatpush2.msra.mxu0 0.0
        %616 = vmatprep.subr.mxu0 0.0
        %617 = vmatpush2.msra.mxu0 0.0
        %618 = vmatprep.subr.mxu0 0.0
        %619 = vmatpush2.msra.mxu0 0.0
        %620 = vmatprep.subr.mxu0 0.0
        %621 = vmatpush2.msra.mxu0 0.0
        %622 = vmatprep.subr.mxu0 0.0
        %623 = vmatpush2.msra.mxu0 0.0
        %624 = vmatprep.subr.mxu0 0.0
        %625 = vmatpush2.msra.mxu0 0.0
        %626 = vmatprep.subr.mxu0 0.0
        %627 = vmatpush2.msra.mxu0 0.0
        %628 = vmatprep.subr.mxu0 0.0
        %629 = vmatpush2.msra.mxu0 0.0
        %630 = vmatprep.subr.mxu0 0.0
        %631 = vmatpush2.msra.mxu0 0.0
        %632 = vmatprep.subr.mxu0 0.0
        %633 = vmatpush2.msra.mxu0 0.0
        %634 = vmatprep.mubr.f32.mxu0 0.0
        %635 = vmatmul.mubr.f32.gmra.mxu0 %v568
        %v636 = vpop.f32.mrf.mxu0
        %v637 = vadd.f32 0.0, %v636
        %v638 = vpop.f32.mrf.mxu0
        %639 = vdwg.mxu0
        %v641 = vsel %vm291, %v277, 0
        %643 = vmatprep.subr.mxu0 0.0
        %644 = vmatpush1.msra.mxu0 0.0
        %645 = vmatprep.subr.mxu0 0.0
        %646 = vmatpush1.msra.mxu0 0.0
        %647 = vmatprep.subr.mxu0 0.0
        %648 = vmatpush1.msra.mxu0 0.0
        %649 = vmatprep.subr.mxu0 0.0
        %650 = vmatpush1.msra.mxu0 0.0
        %651 = vmatprep.subr.mxu0 0.0
        %652 = vmatpush1.msra.mxu0 0.0
        %653 = vmatprep.subr.mxu0 0.0
        %654 = vmatpush1.msra.mxu0 0.0
        %655 = vmatprep.subr.mxu0 0.0
        %656 = vmatpush1.msra.mxu0 0.0
        %657 = vmatprep.subr.mxu0 0.0
        %658 = vmatpush1.msra.mxu0 0.0
        %659 = vmatprep.subr.mxu0 0.0
        %660 = vmatpush1.msra.mxu0 0.0
        %661 = vmatprep.subr.mxu0 0.0
        %662 = vmatpush1.msra.mxu0 0.0
        %663 = vmatprep.subr.mxu0 0.0
        %664 = vmatpush1.msra.mxu0 0.0
        %665 = vmatprep.subr.mxu0 0.0
        %666 = vmatpush1.msra.mxu0 0.0
        %667 = vmatprep.subr.mxu0 0.0
        %668 = vmatpush1.msra.mxu0 0.0
        %669 = vmatprep.subr.mxu0 0.0
        %670 = vmatpush1.msra.mxu0 0.0
        %671 = vmatprep.subr.mxu0 0.0
        %672 = vmatpush1.msra.mxu0 0.0
        %673 = vmatprep.subr.mxu0 0.0
        %674 = vmatpush1.msra.mxu0 %v398
        %675 = vmatprep.subr.mxu0 0.0
        %676 = vmatpush2.msra.mxu0 0.0
        %677 = vmatprep.subr.mxu0 0.0
        %678 = vmatpush2.msra.mxu0 0.0
        %679 = vmatprep.subr.mxu0 0.0
        %680 = vmatpush2.msra.mxu0 0.0
        %681 = vmatprep.subr.mxu0 0.0
        %682 = vmatpush2.msra.mxu0 0.0
        %683 = vmatprep.subr.mxu0 0.0
        %684 = vmatpush2.msra.mxu0 0.0
        %685 = vmatprep.subr.mxu0 0.0
        %686 = vmatpush2.msra.mxu0 0.0
        %687 = vmatprep.subr.mxu0 0.0
        %688 = vmatpush2.msra.mxu0 0.0
        %689 = vmatprep.subr.mxu0 0.0
        %690 = vmatpush2.msra.mxu0 0.0
        %691 = vmatprep.subr.mxu0 0.0
        %692 = vmatpush2.msra.mxu0 0.0
        %693 = vmatprep.subr.mxu0 0.0
        %694 = vmatpush2.msra.mxu0 0.0
        %695 = vmatprep.subr.mxu0 0.0
        %696 = vmatpush2.msra.mxu0 0.0
        %697 = vmatprep.subr.mxu0 0.0
        %698 = vmatpush2.msra.mxu0 0.0
        %699 = vmatprep.subr.mxu0 0.0
        %700 = vmatpush2.msra.mxu0 0.0
        %701 = vmatprep.subr.mxu0 0.0
        %702 = vmatpush2.msra.mxu0 0.0
        %703 = vmatprep.subr.mxu0 0.0
        %704 = vmatpush2.msra.mxu0 0.0
        %705 = vmatprep.subr.mxu0 0.0
        %706 = vmatpush2.msra.mxu0 0.0
        %707 = vmatprep.mubr.f32.mxu0 0.0
        %708 = vmatmul.mubr.f32.gmra.mxu0 %v641
        %v709 = vpop.f32.mrf.mxu0
        %v710 = vadd.f32 0.0, %v709
        %v711 = vpop.f32.mrf.mxu0
        %712 = vdwg.mxu0
        %v714 = vsel %vm291, %v278, 0
        %716 = vmatprep.subr.mxu0 0.0
        %717 = vmatpush1.msra.mxu0 0.0
        %718 = vmatprep.subr.mxu0 0.0
        %719 = vmatpush1.msra.mxu0 0.0
        %720 = vmatprep.subr.mxu0 0.0
        %721 = vmatpush1.msra.mxu0 0.0
        %722 = vmatprep.subr.mxu0 0.0
        %723 = vmatpush1.msra.mxu0 0.0
        %724 = vmatprep.subr.mxu0 0.0
        %725 = vmatpush1.msra.mxu0 0.0
        %726 = vmatprep.subr.mxu0 0.0
        %727 = vmatpush1.msra.mxu0 0.0
        %728 = vmatprep.subr.mxu0 0.0
        %729 = vmatpush1.msra.mxu0 0.0
        %730 = vmatprep.subr.mxu0 0.0
        %731 = vmatpush1.msra.mxu0 0.0
        %732 = vmatprep.subr.mxu0 0.0
        %733 = vmatpush1.msra.mxu0 0.0
        %734 = vmatprep.subr.mxu0 0.0
        %735 = vmatpush1.msra.mxu0 0.0
        %736 = vmatprep.subr.mxu0 0.0
        %737 = vmatpush1.msra.mxu0 0.0
        %738 = vmatprep.subr.mxu0 0.0
        %739 = vmatpush1.msra.mxu0 0.0
        %740 = vmatprep.subr.mxu0 0.0
        %741 = vmatpush1.msra.mxu0 0.0
        %742 = vmatprep.subr.mxu0 0.0
        %743 = vmatpush1.msra.mxu0 0.0
        %744 = vmatprep.subr.mxu0 0.0
        %745 = vmatpush1.msra.mxu0 0.0
        %746 = vmatprep.subr.mxu0 0.0
        %747 = vmatpush1.msra.mxu0 %v403
        %748 = vmatprep.subr.mxu0 0.0
        %749 = vmatpush2.msra.mxu0 0.0
        %750 = vmatprep.subr.mxu0 0.0
        %751 = vmatpush2.msra.mxu0 0.0
        %752 = vmatprep.subr.mxu0 0.0
        %753 = vmatpush2.msra.mxu0 0.0
        %754 = vmatprep.subr.mxu0 0.0
        %755 = vmatpush2.msra.mxu0 0.0
        %756 = vmatprep.subr.mxu0 0.0
        %757 = vmatpush2.msra.mxu0 0.0
        %758 = vmatprep.subr.mxu0 0.0
        %759 = vmatpush2.msra.mxu0 0.0
        %760 = vmatprep.subr.mxu0 0.0
        %761 = vmatpush2.msra.mxu0 0.0
        %762 = vmatprep.subr.mxu0 0.0
        %763 = vmatpush2.msra.mxu0 0.0
        %764 = vmatprep.subr.mxu0 0.0
        %765 = vmatpush2.msra.mxu0 0.0
        %766 = vmatprep.subr.mxu0 0.0
        %767 = vmatpush2.msra.mxu0 0.0
        %768 = vmatprep.subr.mxu0 0.0
        %769 = vmatpush2.msra.mxu0 0.0
        %770 = vmatprep.subr.mxu0 0.0
        %771 = vmatpush2.msra.mxu0 0.0
        %772 = vmatprep.subr.mxu0 0.0
        %773 = vmatpush2.msra.mxu0 0.0
        %774 = vmatprep.subr.mxu0 0.0
        %775 = vmatpush2.msra.mxu0 0.0
        %776 = vmatprep.subr.mxu0 0.0
        %777 = vmatpush2.msra.mxu0 0.0
        %778 = vmatprep.subr.mxu0 0.0
        %779 = vmatpush2.msra.mxu0 0.0
        %780 = vmatprep.mubr.f32.mxu0 0.0
        %781 = vmatmul.mubr.f32.gmra.mxu0 %v714
        %v782 = vpop.f32.mrf.mxu0
        %v783 = vadd.f32 0.0, %v782
        %v784 = vpop.f32.mrf.mxu0
        %785 = vdwg.mxu0
        %v787 = vsel %vm291, %v279, 0
        %789 = vmatprep.subr.mxu0 0.0
        %790 = vmatpush1.msra.mxu0 0.0
        %791 = vmatprep.subr.mxu0 0.0
        %792 = vmatpush1.msra.mxu0 0.0
        %793 = vmatprep.subr.mxu0 0.0
        %794 = vmatpush1.msra.mxu0 0.0
        %795 = vmatprep.subr.mxu0 0.0
        %796 = vmatpush1.msra.mxu0 0.0
        %797 = vmatprep.subr.mxu0 0.0
        %798 = vmatpush1.msra.mxu0 0.0
        %799 = vmatprep.subr.mxu0 0.0
        %800 = vmatpush1.msra.mxu0 0.0
        %801 = vmatprep.subr.mxu0 0.0
        %802 = vmatpush1.msra.mxu0 0.0
        %803 = vmatprep.subr.mxu0 0.0
        %804 = vmatpush1.msra.mxu0 0.0
        %805 = vmatprep.subr.mxu0 0.0
        %806 = vmatpush1.msra.mxu0 0.0
        %807 = vmatprep.subr.mxu0 0.0
        %808 = vmatpush1.msra.mxu0 0.0
        %809 = vmatprep.subr.mxu0 0.0
        %810 = vmatpush1.msra.mxu0 0.0
        %811 = vmatprep.subr.mxu0 0.0
        %812 = vmatpush1.msra.mxu0 0.0
        %813 = vmatprep.subr.mxu0 0.0
        %814 = vmatpush1.msra.mxu0 0.0
        %815 = vmatprep.subr.mxu0 0.0
        %816 = vmatpush1.msra.mxu0 0.0
        %817 = vmatprep.subr.mxu0 0.0
        %818 = vmatpush1.msra.mxu0 0.0
        %819 = vmatprep.subr.mxu0 0.0
        %820 = vmatpush1.msra.mxu0 %v408
        %821 = vmatprep.subr.mxu0 0.0
        %822 = vmatpush2.msra.mxu0 0.0
        %823 = vmatprep.subr.mxu0 0.0
        %824 = vmatpush2.msra.mxu0 0.0
        %825 = vmatprep.subr.mxu0 0.0
        %826 = vmatpush2.msra.mxu0 0.0
        %827 = vmatprep.subr.mxu0 0.0
        %828 = vmatpush2.msra.mxu0 0.0
        %829 = vmatprep.subr.mxu0 0.0
        %830 = vmatpush2.msra.mxu0 0.0
        %831 = vmatprep.subr.mxu0 0.0
        %832 = vmatpush2.msra.mxu0 0.0
        %833 = vmatprep.subr.mxu0 0.0
        %834 = vmatpush2.msra.mxu0 0.0
        %835 = vmatprep.subr.mxu0 0.0
        %836 = vmatpush2.msra.mxu0 0.0
        %837 = vmatprep.subr.mxu0 0.0
        %838 = vmatpush2.msra.mxu0 0.0
        %839 = vmatprep.subr.mxu0 0.0
        %840 = vmatpush2.msra.mxu0 0.0
        %841 = vmatprep.subr.mxu0 0.0
        %842 = vmatpush2.msra.mxu0 0.0
        %843 = vmatprep.subr.mxu0 0.0
        %844 = vmatpush2.msra.mxu0 0.0
        %845 = vmatprep.subr.mxu0 0.0
        %846 = vmatpush2.msra.mxu0 0.0
        %847 = vmatprep.subr.mxu0 0.0
        %848 = vmatpush2.msra.mxu0 0.0
        %849 = vmatprep.subr.mxu0 0.0
        %850 = vmatpush2.msra.mxu0 0.0
        %851 = vmatprep.subr.mxu0 0.0
        %852 = vmatpush2.msra.mxu0 0.0
        %853 = vmatprep.mubr.f32.mxu0 0.0
        %854 = vmatmul.mubr.f32.gmra.mxu0 %v787
        %v855 = vpop.f32.mrf.mxu0
        %v856 = vadd.f32 0.0, %v855
        %v857 = vpop.f32.mrf.mxu0
        %858 = vdwg.mxu0
        %v860 = vsel %vm291, %v280, 0
        %862 = vmatprep.subr.mxu0 0.0
        %863 = vmatpush1.msra.mxu0 0.0
        %864 = vmatprep.subr.mxu0 0.0
        %865 = vmatpush1.msra.mxu0 0.0
        %866 = vmatprep.subr.mxu0 0.0
        %867 = vmatpush1.msra.mxu0 0.0
        %868 = vmatprep.subr.mxu0 0.0
        %869 = vmatpush1.msra.mxu0 0.0
        %870 = vmatprep.subr.mxu0 0.0
        %871 = vmatpush1.msra.mxu0 0.0
        %872 = vmatprep.subr.mxu0 0.0
        %873 = vmatpush1.msra.mxu0 0.0
        %874 = vmatprep.subr.mxu0 0.0
        %875 = vmatpush1.msra.mxu0 0.0
        %876 = vmatprep.subr.mxu0 0.0
        %877 = vmatpush1.msra.mxu0 0.0
        %878 = vmatprep.subr.mxu0 0.0
        %879 = vmatpush1.msra.mxu0 0.0
        %880 = vmatprep.subr.mxu0 0.0
        %881 = vmatpush1.msra.mxu0 0.0
        %882 = vmatprep.subr.mxu0 0.0
        %883 = vmatpush1.msra.mxu0 0.0
        %884 = vmatprep.subr.mxu0 0.0
        %885 = vmatpush1.msra.mxu0 0.0
        %886 = vmatprep.subr.mxu0 0.0
        %887 = vmatpush1.msra.mxu0 0.0
        %888 = vmatprep.subr.mxu0 0.0
        %889 = vmatpush1.msra.mxu0 0.0
        %890 = vmatprep.subr.mxu0 0.0
        %891 = vmatpush1.msra.mxu0 0.0
        %892 = vmatprep.subr.mxu0 0.0
        %893 = vmatpush1.msra.mxu0 %v413
        %894 = vmatprep.subr.mxu0 0.0
        %895 = vmatpush2.msra.mxu0 0.0
        %896 = vmatprep.subr.mxu0 0.0
        %897 = vmatpush2.msra.mxu0 0.0
        %898 = vmatprep.subr.mxu0 0.0
        %899 = vmatpush2.msra.mxu0 0.0
        %900 = vmatprep.subr.mxu0 0.0
        %901 = vmatpush2.msra.mxu0 0.0
        %902 = vmatprep.subr.mxu0 0.0
        %903 = vmatpush2.msra.mxu0 0.0
        %904 = vmatprep.subr.mxu0 0.0
        %905 = vmatpush2.msra.mxu0 0.0
        %906 = vmatprep.subr.mxu0 0.0
        %907 = vmatpush2.msra.mxu0 0.0
        %908 = vmatprep.subr.mxu0 0.0
        %909 = vmatpush2.msra.mxu0 0.0
        %910 = vmatprep.subr.mxu0 0.0
        %911 = vmatpush2.msra.mxu0 0.0
        %912 = vmatprep.subr.mxu0 0.0
        %913 = vmatpush2.msra.mxu0 0.0
        %914 = vmatprep.subr.mxu0 0.0
        %915 = vmatpush2.msra.mxu0 0.0
        %916 = vmatprep.subr.mxu0 0.0
        %917 = vmatpush2.msra.mxu0 0.0
        %918 = vmatprep.subr.mxu0 0.0
        %919 = vmatpush2.msra.mxu0 0.0
        %920 = vmatprep.subr.mxu0 0.0
        %921 = vmatpush2.msra.mxu0 0.0
        %922 = vmatprep.subr.mxu0 0.0
        %923 = vmatpush2.msra.mxu0 0.0
        %924 = vmatprep.subr.mxu0 0.0
        %925 = vmatpush2.msra.mxu0 0.0
        %926 = vmatprep.mubr.f32.mxu0 0.0
        %927 = vmatmul.mubr.f32.gmra.mxu0 %v860
        %v928 = vpop.f32.mrf.mxu0
        %v929 = vadd.f32 0.0, %v928
        %v930 = vpop.f32.mrf.mxu0
        %931 = vdwg.mxu0
        %v933 = vsel %vm291, %v281, 0
        %935 = vmatprep.subr.mxu0 0.0
        %936 = vmatpush1.msra.mxu0 0.0
        %937 = vmatprep.subr.mxu0 0.0
        %938 = vmatpush1.msra.mxu0 0.0
        %939 = vmatprep.subr.mxu0 0.0
        %940 = vmatpush1.msra.mxu0 0.0
        %941 = vmatprep.subr.mxu0 0.0
        %942 = vmatpush1.msra.mxu0 0.0
        %943 = vmatprep.subr.mxu0 0.0
        %944 = vmatpush1.msra.mxu0 0.0
        %945 = vmatprep.subr.mxu0 0.0
        %946 = vmatpush1.msra.mxu0 0.0
        %947 = vmatprep.subr.mxu0 0.0
        %948 = vmatpush1.msra.mxu0 0.0
        %949 = vmatprep.subr.mxu0 0.0
        %950 = vmatpush1.msra.mxu0 0.0
        %951 = vmatprep.subr.mxu0 0.0
        %952 = vmatpush1.msra.mxu0 0.0
        %953 = vmatprep.subr.mxu0 0.0
        %954 = vmatpush1.msra.mxu0 0.0
        %955 = vmatprep.subr.mxu0 0.0
        %956 = vmatpush1.msra.mxu0 0.0
        %957 = vmatprep.subr.mxu0 0.0
        %958 = vmatpush1.msra.mxu0 0.0
        %959 = vmatprep.subr.mxu0 0.0
        %960 = vmatpush1.msra.mxu0 0.0
        %961 = vmatprep.subr.mxu0 0.0
        %962 = vmatpush1.msra.mxu0 0.0
        %963 = vmatprep.subr.mxu0 0.0
        %964 = vmatpush1.msra.mxu0 0.0
        %965 = vmatprep.subr.mxu0 0.0
        %966 = vmatpush1.msra.mxu0 %v418
        %967 = vmatprep.subr.mxu0 0.0
        %968 = vmatpush2.msra.mxu0 0.0
        %969 = vmatprep.subr.mxu0 0.0
        %970 = vmatpush2.msra.mxu0 0.0
        %971 = vmatprep.subr.mxu0 0.0
        %972 = vmatpush2.msra.mxu0 0.0
        %973 = vmatprep.subr.mxu0 0.0
        %974 = vmatpush2.msra.mxu0 0.0
        %975 = vmatprep.subr.mxu0 0.0
        %976 = vmatpush2.msra.mxu0 0.0
        %977 = vmatprep.subr.mxu0 0.0
        %978 = vmatpush2.msra.mxu0 0.0
        %979 = vmatprep.subr.mxu0 0.0
        %980 = vmatpush2.msra.mxu0 0.0
        %981 = vmatprep.subr.mxu0 0.0
        %982 = vmatpush2.msra.mxu0 0.0
        %983 = vmatprep.subr.mxu0 0.0
        %984 = vmatpush2.msra.mxu0 0.0
        %985 = vmatprep.subr.mxu0 0.0
        %986 = vmatpush2.msra.mxu0 0.0
        %987 = vmatprep.subr.mxu0 0.0
        %988 = vmatpush2.msra.mxu0 0.0
        %989 = vmatprep.subr.mxu0 0.0
        %990 = vmatpush2.msra.mxu0 0.0
        %991 = vmatprep.subr.mxu0 0.0
        %992 = vmatpush2.msra.mxu0 0.0
        %993 = vmatprep.subr.mxu0 0.0
        %994 = vmatpush2.msra.mxu0 0.0
        %995 = vmatprep.subr.mxu0 0.0
        %996 = vmatpush2.msra.mxu0 0.0
        %997 = vmatprep.subr.mxu0 0.0
        %998 = vmatpush2.msra.mxu0 0.0
        %999 = vmatprep.mubr.f32.mxu0 0.0
        %1000 = vmatmul.mubr.f32.gmra.mxu0 %v933
        %v1001 = vpop.f32.mrf.mxu0
        %v1002 = vadd.f32 0.0, %v1001
        %v1003 = vpop.f32.mrf.mxu0
        %1004 = vdwg.mxu0
        %v1005 = vmax.f32 %v491, 0.0
        %v1006 = vmax.f32 %v564, 0.0
        %v1007 = vmax.f32 %v637, 0.0
        %v1008 = vmax.f32 %v710, 0.0
        %v1009 = vmax.f32 %v783, 0.0
        %v1010 = vmax.f32 %v856, 0.0
        %v1011 = vmax.f32 %v929, 0.0
        %v1012 = vmax.f32 %v1002, 0.0
        %v1013 = vld [vmem:[%s3] sm:$0xff]
        %v1014 = vld [vmem:[%s3 + $0x8] sm:$0xff]
        %vm1015 = vcmask 130048
        %v1017 = vsel %vm1015, %v1005, 0
        %v1020 = vsel %vm1015, %v1006, 0
        %v1023 = vsel %vm1015, %v1007, 0
        %v1026 = vsel %vm1015, %v1008, 0
        %v1029 = vsel %vm1015, %v1009, 0
        %v1032 = vsel %vm1015, %v1010, 0
        %v1035 = vsel %vm1015, %v1011, 0
        %v1038 = vsel %vm1015, %v1012, 0
        %1040 = vmatprep.subr.mxu0 0.0
        %1041 = vmatpush1.msra.mxu0 0.0
        %1042 = vmatprep.subr.mxu0 0.0
        %1043 = vmatpush1.msra.mxu0 0.0
        %1044 = vmatprep.subr.mxu0 0.0
        %1045 = vmatpush1.msra.mxu0 0.0
        %1046 = vmatprep.subr.mxu0 0.0
        %1047 = vmatpush1.msra.mxu0 0.0
        %1048 = vmatprep.subr.mxu0 0.0
        %1049 = vmatpush1.msra.mxu0 0.0
        %1050 = vmatprep.subr.mxu0 0.0
        %1051 = vmatpush1.msra.mxu0 0.0
        %1052 = vmatprep.subr.mxu0 0.0
        %1053 = vmatpush1.msra.mxu0 0.0
        %1054 = vmatprep.subr.mxu0 0.0
        %1055 = vmatpush1.msra.mxu0 0.0
        %1056 = vmatprep.subr.mxu0 0.0
        %1057 = vmatpush1.msra.mxu0 0.0
        %1058 = vmatprep.subr.mxu0 0.0
        %1059 = vmatpush1.msra.mxu0 0.0
        %1060 = vmatprep.subr.mxu0 0.0
        %1061 = vmatpush1.msra.mxu0 0.0
        %1062 = vmatprep.subr.mxu0 0.0
        %1063 = vmatpush1.msra.mxu0 0.0
        %1064 = vmatprep.subr.mxu0 0.0
        %1065 = vmatpush1.msra.mxu0 0.0
        %1066 = vmatprep.subr.mxu0 0.0
        %1067 = vmatpush1.msra.mxu0 0.0
        %1068 = vmatprep.subr.mxu0 0.0
        %1069 = vmatpush1.msra.mxu0 %v1014
        %1070 = vmatprep.subr.mxu0 0.0
        %1071 = vmatpush1.msra.mxu0 %v1013
        %1072 = vmatprep.subr.mxu0 0.0
        %1073 = vmatpush2.msra.mxu0 0.0
        %1074 = vmatprep.subr.mxu0 0.0
        %1075 = vmatpush2.msra.mxu0 0.0
        %1076 = vmatprep.subr.mxu0 0.0
        %1077 = vmatpush2.msra.mxu0 0.0
        %1078 = vmatprep.subr.mxu0 0.0
        %1079 = vmatpush2.msra.mxu0 0.0
        %1080 = vmatprep.subr.mxu0 0.0
        %1081 = vmatpush2.msra.mxu0 0.0
        %1082 = vmatprep.subr.mxu0 0.0
        %1083 = vmatpush2.msra.mxu0 0.0
        %1084 = vmatprep.subr.mxu0 0.0
        %1085 = vmatpush2.msra.mxu0 0.0
        %1086 = vmatprep.subr.mxu0 0.0
        %1087 = vmatpush2.msra.mxu0 0.0
        %1088 = vmatprep.subr.mxu0 0.0
        %1089 = vmatpush2.msra.mxu0 0.0
        %1090 = vmatprep.subr.mxu0 0.0
        %1091 = vmatpush2.msra.mxu0 0.0
        %1092 = vmatprep.subr.mxu0 0.0
        %1093 = vmatpush2.msra.mxu0 0.0
        %1094 = vmatprep.subr.mxu0 0.0
        %1095 = vmatpush2.msra.mxu0 0.0
        %1096 = vmatprep.subr.mxu0 0.0
        %1097 = vmatpush2.msra.mxu0 0.0
        %1098 = vmatprep.subr.mxu0 0.0
        %1099 = vmatpush2.msra.mxu0 0.0
        %1100 = vmatprep.subr.mxu0 0.0
        %1101 = vmatpush2.msra.mxu0 0.0
        %1102 = vmatprep.subr.mxu0 0.0
        %1103 = vmatpush2.msra.mxu0 0.0
        %1104 = vmatprep.mubr.f32.mxu0 0.0
        %1105 = vmatmul.mubr.f32.gmra.mxu0 %v1017
        %v1106 = vpop.f32.mrf.mxu0
        %v1107 = vadd.f32 0.0, %v1106
        %v1108 = vpop.f32.mrf.mxu0
        %1109 = vmatprep.mubr.f32.mxu0 0.0
        %1110 = vmatmul.mubr.f32.gmra.mxu0 %v1020
        %v1111 = vpop.f32.mrf.mxu0
        %v1112 = vadd.f32 0.0, %v1111
        %v1113 = vpop.f32.mrf.mxu0
        %1114 = vmatprep.mubr.f32.mxu0 0.0
        %1115 = vmatmul.mubr.f32.gmra.mxu0 %v1023
        %v1116 = vpop.f32.mrf.mxu0
        %v1117 = vadd.f32 0.0, %v1116
        %v1118 = vpop.f32.mrf.mxu0
        %1119 = vmatprep.mubr.f32.mxu0 0.0
        %1120 = vmatmul.mubr.f32.gmra.mxu0 %v1026
        %v1121 = vpop.f32.mrf.mxu0
        %v1122 = vadd.f32 0.0, %v1121
        %v1123 = vpop.f32.mrf.mxu0
        %1124 = vmatprep.mubr.f32.mxu0 0.0
        %1125 = vmatmul.mubr.f32.gmra.mxu0 %v1029
        %v1126 = vpop.f32.mrf.mxu0
        %v1127 = vadd.f32 0.0, %v1126
        %v1128 = vpop.f32.mrf.mxu0
        %1129 = vmatprep.mubr.f32.mxu0 0.0
        %1130 = vmatmul.mubr.f32.gmra.mxu0 %v1032
        %v1131 = vpop.f32.mrf.mxu0
        %v1132 = vadd.f32 0.0, %v1131
        %v1133 = vpop.f32.mrf.mxu0
        %1134 = vmatprep.mubr.f32.mxu0 0.0
        %1135 = vmatmul.mubr.f32.gmra.mxu0 %v1035
        %v1136 = vpop.f32.mrf.mxu0
        %v1137 = vadd.f32 0.0, %v1136
        %v1138 = vpop.f32.mrf.mxu0
        %1139 = vmatprep.mubr.f32.mxu0 0.0
        %1140 = vmatmul.mubr.f32.gmra.mxu0 %v1038
        %v1141 = vpop.f32.mrf.mxu0
        %v1142 = vadd.f32 0.0, %v1141
        %v1143 = vpop.f32.mrf.mxu0
        %1144 = vdwg.mxu0
        %1145 = vmatprep.subr.mxu0 0.0
        %1146 = vmatpush1.msra.mxu0 0.0
        %1147 = vmatprep.subr.mxu0 0.0
        %1148 = vmatpush1.msra.mxu0 0.0
        %1149 = vmatprep.subr.mxu0 0.0
        %1150 = vmatpush1.msra.mxu0 0.0
        %1151 = vmatprep.subr.mxu0 0.0
        %1152 = vmatpush1.msra.mxu0 0.0
        %1153 = vmatprep.subr.mxu0 0.0
        %1154 = vmatpush1.msra.mxu0 0.0
        %1155 = vmatprep.subr.mxu0 0.0
        %1156 = vmatpush1.msra.mxu0 0.0
        %1157 = vmatprep.subr.mxu0 0.0
        %1158 = vmatpush1.msra.mxu0 0.0
        %1159 = vmatprep.subr.mxu0 0.0
        %1160 = vmatpush1.msra.mxu0 0.0
        %1161 = vmatprep.subr.mxu0 0.0
        %1162 = vmatpush1.msra.mxu0 0.0
        %1163 = vmatprep.subr.mxu0 0.0
        %1164 = vmatpush1.msra.mxu0 0.0
        %1165 = vmatprep.subr.mxu0 0.0
        %1166 = vmatpush1.msra.mxu0 0.0
        %1167 = vmatprep.subr.mxu0 0.0
        %1168 = vmatpush1.msra.mxu0 0.0
        %1169 = vmatprep.subr.mxu0 0.0
        %1170 = vmatpush1.msra.mxu0 0.0
        %1171 = vmatprep.subr.mxu0 0.0
        %1172 = vmatpush1.msra.mxu0 0.0
        %1173 = vmatprep.subr.mxu0 0.0
        %1174 = vmatpush1.msra.mxu0 0.0
        %1175 = vmatprep.subr.mxu0 0.0
        %1176 = vmatpush1.msra.mxu0 %v1107
        %1177 = vmatprep.subr.mxu0 0.0
        %1178 = vmatpush2.msra.mxu0 0.0
        %1179 = vmatprep.subr.mxu0 0.0
        %1180 = vmatpush2.msra.mxu0 0.0
        %1181 = vmatprep.subr.mxu0 0.0
        %1182 = vmatpush2.msra.mxu0 0.0
        %1183 = vmatprep.subr.mxu0 0.0
        %1184 = vmatpush2.msra.mxu0 0.0
        %1185 = vmatprep.subr.mxu0 0.0
        %1186 = vmatpush2.msra.mxu0 0.0
        %1187 = vmatprep.subr.mxu0 0.0
        %1188 = vmatpush2.msra.mxu0 0.0
        %1189 = vmatprep.subr.mxu0 0.0
        %1190 = vmatpush2.msra.mxu0 0.0
        %1191 = vmatprep.subr.mxu0 0.0
        %1192 = vmatpush2.msra.mxu0 0.0
        %1193 = vmatprep.subr.mxu0 0.0
        %1194 = vmatpush2.msra.mxu0 0.0
        %1195 = vmatprep.subr.mxu0 0.0
        %1196 = vmatpush2.msra.mxu0 0.0
        %1197 = vmatprep.subr.mxu0 0.0
        %1198 = vmatpush2.msra.mxu0 0.0
        %1199 = vmatprep.subr.mxu0 0.0
        %1200 = vmatpush2.msra.mxu0 0.0
        %1201 = vmatprep.subr.mxu0 0.0
        %1202 = vmatpush2.msra.mxu0 0.0
        %1203 = vmatprep.subr.mxu0 0.0
        %1204 = vmatpush2.msra.mxu0 0.0
        %1205 = vmatprep.subr.mxu0 0.0
        %1206 = vmatpush2.msra.mxu0 0.0
        %1207 = vmatprep.subr.mxu0 0.0
        %1208 = vmatpush2.msra.mxu0 0.0
        %1209 = vmatprep.mubr.f32.mxu0 0.0
        %1210 = vmatmul.mubr.f32.gmra.mxu0 %v422
        %v1211 = vpop.f32.mrf.mxu0
        %v1212 = vadd.f32 0.0, %v1211
        %v1213 = vpop.f32.mrf.mxu0
        %1214 = vdwg.mxu0
        %1215 = vmatprep.subr.mxu0 0.0
        %1216 = vmatpush1.msra.mxu0 0.0
        %1217 = vmatprep.subr.mxu0 0.0
        %1218 = vmatpush1.msra.mxu0 0.0
        %1219 = vmatprep.subr.mxu0 0.0
        %1220 = vmatpush1.msra.mxu0 0.0
        %1221 = vmatprep.subr.mxu0 0.0
        %1222 = vmatpush1.msra.mxu0 0.0
        %1223 = vmatprep.subr.mxu0 0.0
        %1224 = vmatpush1.msra.mxu0 0.0
        %1225 = vmatprep.subr.mxu0 0.0
        %1226 = vmatpush1.msra.mxu0 0.0
        %1227 = vmatprep.subr.mxu0 0.0
        %1228 = vmatpush1.msra.mxu0 0.0
        %1229 = vmatprep.subr.mxu0 0.0
        %1230 = vmatpush1.msra.mxu0 0.0
        %1231 = vmatprep.subr.mxu0 0.0
        %1232 = vmatpush1.msra.mxu0 0.0
        %1233 = vmatprep.subr.mxu0 0.0
        %1234 = vmatpush1.msra.mxu0 0.0
        %1235 = vmatprep.subr.mxu0 0.0
        %1236 = vmatpush1.msra.mxu0 0.0
        %1237 = vmatprep.subr.mxu0 0.0
        %1238 = vmatpush1.msra.mxu0 0.0
        %1239 = vmatprep.subr.mxu0 0.0
        %1240 = vmatpush1.msra.mxu0 0.0
        %1241 = vmatprep.subr.mxu0 0.0
        %1242 = vmatpush1.msra.mxu0 0.0
        %1243 = vmatprep.subr.mxu0 0.0
        %1244 = vmatpush1.msra.mxu0 0.0
        %1245 = vmatprep.subr.mxu0 0.0
        %1246 = vmatpush1.msra.mxu0 %v1112
        %1247 = vmatprep.subr.mxu0 0.0
        %1248 = vmatpush2.msra.mxu0 0.0
        %1249 = vmatprep.subr.mxu0 0.0
        %1250 = vmatpush2.msra.mxu0 0.0
        %1251 = vmatprep.subr.mxu0 0.0
        %1252 = vmatpush2.msra.mxu0 0.0
        %1253 = vmatprep.subr.mxu0 0.0
        %1254 = vmatpush2.msra.mxu0 0.0
        %1255 = vmatprep.subr.mxu0 0.0
        %1256 = vmatpush2.msra.mxu0 0.0
        %1257 = vmatprep.subr.mxu0 0.0
        %1258 = vmatpush2.msra.mxu0 0.0
        %1259 = vmatprep.subr.mxu0 0.0
        %1260 = vmatpush2.msra.mxu0 0.0
        %1261 = vmatprep.subr.mxu0 0.0
        %1262 = vmatpush2.msra.mxu0 0.0
        %1263 = vmatprep.subr.mxu0 0.0
        %1264 = vmatpush2.msra.mxu0 0.0
        %1265 = vmatprep.subr.mxu0 0.0
        %1266 = vmatpush2.msra.mxu0 0.0
        %1267 = vmatprep.subr.mxu0 0.0
        %1268 = vmatpush2.msra.mxu0 0.0
        %1269 = vmatprep.subr.mxu0 0.0
        %1270 = vmatpush2.msra.mxu0 0.0
        %1271 = vmatprep.subr.mxu0 0.0
        %1272 = vmatpush2.msra.mxu0 0.0
        %1273 = vmatprep.subr.mxu0 0.0
        %1274 = vmatpush2.msra.mxu0 0.0
        %1275 = vmatprep.subr.mxu0 0.0
        %1276 = vmatpush2.msra.mxu0 0.0
        %1277 = vmatprep.subr.mxu0 0.0
        %1278 = vmatpush2.msra.mxu0 0.0
        %1279 = vmatprep.mubr.f32.mxu0 0.0
        %1280 = vmatmul.mubr.f32.gmra.mxu0 %v495
        %v1281 = vpop.f32.mrf.mxu0
        %v1282 = vadd.f32 0.0, %v1281
        %v1283 = vpop.f32.mrf.mxu0
        %1284 = vdwg.mxu0
        %1285 = vmatprep.subr.mxu0 0.0
        %1286 = vmatpush1.msra.mxu0 0.0
        %1287 = vmatprep.subr.mxu0 0.0
        %1288 = vmatpush1.msra.mxu0 0.0
        %1289 = vmatprep.subr.mxu0 0.0
        %1290 = vmatpush1.msra.mxu0 0.0
        %1291 = vmatprep.subr.mxu0 0.0
        %1292 = vmatpush1.msra.mxu0 0.0
        %1293 = vmatprep.subr.mxu0 0.0
        %1294 = vmatpush1.msra.mxu0 0.0
        %1295 = vmatprep.subr.mxu0 0.0
        %1296 = vmatpush1.msra.mxu0 0.0
        %1297 = vmatprep.subr.mxu0 0.0
        %1298 = vmatpush1.msra.mxu0 0.0
        %1299 = vmatprep.subr.mxu0 0.0
        %1300 = vmatpush1.msra.mxu0 0.0
        %1301 = vmatprep.subr.mxu0 0.0
        %1302 = vmatpush1.msra.mxu0 0.0
        %1303 = vmatprep.subr.mxu0 0.0
        %1304 = vmatpush1.msra.mxu0 0.0
        %1305 = vmatprep.subr.mxu0 0.0
        %1306 = vmatpush1.msra.mxu0 0.0
        %1307 = vmatprep.subr.mxu0 0.0
        %1308 = vmatpush1.msra.mxu0 0.0
        %1309 = vmatprep.subr.mxu0 0.0
        %1310 = vmatpush1.msra.mxu0 0.0
        %1311 = vmatprep.subr.mxu0 0.0
        %1312 = vmatpush1.msra.mxu0 0.0
        %1313 = vmatprep.subr.mxu0 0.0
        %1314 = vmatpush1.msra.mxu0 0.0
        %1315 = vmatprep.subr.mxu0 0.0
        %1316 = vmatpush1.msra.mxu0 %v1117
        %1317 = vmatprep.subr.mxu0 0.0
        %1318 = vmatpush2.msra.mxu0 0.0
        %1319 = vmatprep.subr.mxu0 0.0
        %1320 = vmatpush2.msra.mxu0 0.0
        %1321 = vmatprep.subr.mxu0 0.0
        %1322 = vmatpush2.msra.mxu0 0.0
        %1323 = vmatprep.subr.mxu0 0.0
        %1324 = vmatpush2.msra.mxu0 0.0
        %1325 = vmatprep.subr.mxu0 0.0
        %1326 = vmatpush2.msra.mxu0 0.0
        %1327 = vmatprep.subr.mxu0 0.0
        %1328 = vmatpush2.msra.mxu0 0.0
        %1329 = vmatprep.subr.mxu0 0.0
        %1330 = vmatpush2.msra.mxu0 0.0
        %1331 = vmatprep.subr.mxu0 0.0
        %1332 = vmatpush2.msra.mxu0 0.0
        %1333 = vmatprep.subr.mxu0 0.0
        %1334 = vmatpush2.msra.mxu0 0.0
        %1335 = vmatprep.subr.mxu0 0.0
        %1336 = vmatpush2.msra.mxu0 0.0
        %1337 = vmatprep.subr.mxu0 0.0
        %1338 = vmatpush2.msra.mxu0 0.0
        %1339 = vmatprep.subr.mxu0 0.0
        %1340 = vmatpush2.msra.mxu0 0.0
        %1341 = vmatprep.subr.mxu0 0.0
        %1342 = vmatpush2.msra.mxu0 0.0
        %1343 = vmatprep.subr.mxu0 0.0
        %1344 = vmatpush2.msra.mxu0 0.0
        %1345 = vmatprep.subr.mxu0 0.0
        %1346 = vmatpush2.msra.mxu0 0.0
        %1347 = vmatprep.subr.mxu0 0.0
        %1348 = vmatpush2.msra.mxu0 0.0
        %1349 = vmatprep.mubr.f32.mxu0 0.0
        %1350 = vmatmul.mubr.f32.gmra.mxu0 %v568
        %v1351 = vpop.f32.mrf.mxu0
        %v1352 = vadd.f32 0.0, %v1351
        %v1353 = vpop.f32.mrf.mxu0
        %1354 = vdwg.mxu0
        %1355 = vmatprep.subr.mxu0 0.0
        %1356 = vmatpush1.msra.mxu0 0.0
        %1357 = vmatprep.subr.mxu0 0.0
        %1358 = vmatpush1.msra.mxu0 0.0
        %1359 = vmatprep.subr.mxu0 0.0
        %1360 = vmatpush1.msra.mxu0 0.0
        %1361 = vmatprep.subr.mxu0 0.0
        %1362 = vmatpush1.msra.mxu0 0.0
        %1363 = vmatprep.subr.mxu0 0.0
        %1364 = vmatpush1.msra.mxu0 0.0
        %1365 = vmatprep.subr.mxu0 0.0
        %1366 = vmatpush1.msra.mxu0 0.0
        %1367 = vmatprep.subr.mxu0 0.0
        %1368 = vmatpush1.msra.mxu0 0.0
        %1369 = vmatprep.subr.mxu0 0.0
        %1370 = vmatpush1.msra.mxu0 0.0
        %1371 = vmatprep.subr.mxu0 0.0
        %1372 = vmatpush1.msra.mxu0 0.0
        %1373 = vmatprep.subr.mxu0 0.0
        %1374 = vmatpush1.msra.mxu0 0.0
        %1375 = vmatprep.subr.mxu0 0.0
        %1376 = vmatpush1.msra.mxu0 0.0
        %1377 = vmatprep.subr.mxu0 0.0
        %1378 = vmatpush1.msra.mxu0 0.0
        %1379 = vmatprep.subr.mxu0 0.0
        %1380 = vmatpush1.msra.mxu0 0.0
        %1381 = vmatprep.subr.mxu0 0.0
        %1382 = vmatpush1.msra.mxu0 0.0
        %1383 = vmatprep.subr.mxu0 0.0
        %1384 = vmatpush1.msra.mxu0 0.0
        %1385 = vmatprep.subr.mxu0 0.0
        %1386 = vmatpush1.msra.mxu0 %v1122
        %1387 = vmatprep.subr.mxu0 0.0
        %1388 = vmatpush2.msra.mxu0 0.0
        %1389 = vmatprep.subr.mxu0 0.0
        %1390 = vmatpush2.msra.mxu0 0.0
        %1391 = vmatprep.subr.mxu0 0.0
        %1392 = vmatpush2.msra.mxu0 0.0
        %1393 = vmatprep.subr.mxu0 0.0
        %1394 = vmatpush2.msra.mxu0 0.0
        %1395 = vmatprep.subr.mxu0 0.0
        %1396 = vmatpush2.msra.mxu0 0.0
        %1397 = vmatprep.subr.mxu0 0.0
        %1398 = vmatpush2.msra.mxu0 0.0
        %1399 = vmatprep.subr.mxu0 0.0
        %1400 = vmatpush2.msra.mxu0 0.0
        %1401 = vmatprep.subr.mxu0 0.0
        %1402 = vmatpush2.msra.mxu0 0.0
        %1403 = vmatprep.subr.mxu0 0.0
        %1404 = vmatpush2.msra.mxu0 0.0
        %1405 = vmatprep.subr.mxu0 0.0
        %1406 = vmatpush2.msra.mxu0 0.0
        %1407 = vmatprep.subr.mxu0 0.0
        %1408 = vmatpush2.msra.mxu0 0.0
        %1409 = vmatprep.subr.mxu0 0.0
        %1410 = vmatpush2.msra.mxu0 0.0
        %1411 = vmatprep.subr.mxu0 0.0
        %1412 = vmatpush2.msra.mxu0 0.0
        %1413 = vmatprep.subr.mxu0 0.0
        %1414 = vmatpush2.msra.mxu0 0.0
        %1415 = vmatprep.subr.mxu0 0.0
        %1416 = vmatpush2.msra.mxu0 0.0
        %1417 = vmatprep.subr.mxu0 0.0
        %1418 = vmatpush2.msra.mxu0 0.0
        %1419 = vmatprep.mubr.f32.mxu0 0.0
        %1420 = vmatmul.mubr.f32.gmra.mxu0 %v641
        %v1421 = vpop.f32.mrf.mxu0
        %v1422 = vadd.f32 0.0, %v1421
        %v1423 = vpop.f32.mrf.mxu0
        %1424 = vdwg.mxu0
        %1425 = vmatprep.subr.mxu0 0.0
        %1426 = vmatpush1.msra.mxu0 0.0
        %1427 = vmatprep.subr.mxu0 0.0
        %1428 = vmatpush1.msra.mxu0 0.0
        %1429 = vmatprep.subr.mxu0 0.0
        %1430 = vmatpush1.msra.mxu0 0.0
        %1431 = vmatprep.subr.mxu0 0.0
        %1432 = vmatpush1.msra.mxu0 0.0
        %1433 = vmatprep.subr.mxu0 0.0
        %1434 = vmatpush1.msra.mxu0 0.0
        %1435 = vmatprep.subr.mxu0 0.0
        %1436 = vmatpush1.msra.mxu0 0.0
        %1437 = vmatprep.subr.mxu0 0.0
        %1438 = vmatpush1.msra.mxu0 0.0
        %1439 = vmatprep.subr.mxu0 0.0
        %1440 = vmatpush1.msra.mxu0 0.0
        %1441 = vmatprep.subr.mxu0 0.0
        %1442 = vmatpush1.msra.mxu0 0.0
        %1443 = vmatprep.subr.mxu0 0.0
        %1444 = vmatpush1.msra.mxu0 0.0
        %1445 = vmatprep.subr.mxu0 0.0
        %1446 = vmatpush1.msra.mxu0 0.0
        %1447 = vmatprep.subr.mxu0 0.0
        %1448 = vmatpush1.msra.mxu0 0.0
        %1449 = vmatprep.subr.mxu0 0.0
        %1450 = vmatpush1.msra.mxu0 0.0
        %1451 = vmatprep.subr.mxu0 0.0
        %1452 = vmatpush1.msra.mxu0 0.0
        %1453 = vmatprep.subr.mxu0 0.0
        %1454 = vmatpush1.msra.mxu0 0.0
        %1455 = vmatprep.subr.mxu0 0.0
        %1456 = vmatpush1.msra.mxu0 %v1127
        %1457 = vmatprep.subr.mxu0 0.0
        %1458 = vmatpush2.msra.mxu0 0.0
        %1459 = vmatprep.subr.mxu0 0.0
        %1460 = vmatpush2.msra.mxu0 0.0
        %1461 = vmatprep.subr.mxu0 0.0
        %1462 = vmatpush2.msra.mxu0 0.0
        %1463 = vmatprep.subr.mxu0 0.0
        %1464 = vmatpush2.msra.mxu0 0.0
        %1465 = vmatprep.subr.mxu0 0.0
        %1466 = vmatpush2.msra.mxu0 0.0
        %1467 = vmatprep.subr.mxu0 0.0
        %1468 = vmatpush2.msra.mxu0 0.0
        %1469 = vmatprep.subr.mxu0 0.0
        %1470 = vmatpush2.msra.mxu0 0.0
        %1471 = vmatprep.subr.mxu0 0.0
        %1472 = vmatpush2.msra.mxu0 0.0
        %1473 = vmatprep.subr.mxu0 0.0
        %1474 = vmatpush2.msra.mxu0 0.0
        %1475 = vmatprep.subr.mxu0 0.0
        %1476 = vmatpush2.msra.mxu0 0.0
        %1477 = vmatprep.subr.mxu0 0.0
        %1478 = vmatpush2.msra.mxu0 0.0
        %1479 = vmatprep.subr.mxu0 0.0
        %1480 = vmatpush2.msra.mxu0 0.0
        %1481 = vmatprep.subr.mxu0 0.0
        %1482 = vmatpush2.msra.mxu0 0.0
        %1483 = vmatprep.subr.mxu0 0.0
        %1484 = vmatpush2.msra.mxu0 0.0
        %1485 = vmatprep.subr.mxu0 0.0
        %1486 = vmatpush2.msra.mxu0 0.0
        %1487 = vmatprep.subr.mxu0 0.0
        %1488 = vmatpush2.msra.mxu0 0.0
        %1489 = vmatprep.mubr.f32.mxu0 0.0
        %1490 = vmatmul.mubr.f32.gmra.mxu0 %v714
        %v1491 = vpop.f32.mrf.mxu0
        %v1492 = vadd.f32 0.0, %v1491
        %v1493 = vpop.f32.mrf.mxu0
        %1494 = vdwg.mxu0
        %1495 = vmatprep.subr.mxu0 0.0
        %1496 = vmatpush1.msra.mxu0 0.0
        %1497 = vmatprep.subr.mxu0 0.0
        %1498 = vmatpush1.msra.mxu0 0.0
        %1499 = vmatprep.subr.mxu0 0.0
        %1500 = vmatpush1.msra.mxu0 0.0
        %1501 = vmatprep.subr.mxu0 0.0
        %1502 = vmatpush1.msra.mxu0 0.0
        %1503 = vmatprep.subr.mxu0 0.0
        %1504 = vmatpush1.msra.mxu0 0.0
        %1505 = vmatprep.subr.mxu0 0.0
        %1506 = vmatpush1.msra.mxu0 0.0
        %1507 = vmatprep.subr.mxu0 0.0
        %1508 = vmatpush1.msra.mxu0 0.0
        %1509 = vmatprep.subr.mxu0 0.0
        %1510 = vmatpush1.msra.mxu0 0.0
        %1511 = vmatprep.subr.mxu0 0.0
        %1512 = vmatpush1.msra.mxu0 0.0
        %1513 = vmatprep.subr.mxu0 0.0
        %1514 = vmatpush1.msra.mxu0 0.0
        %1515 = vmatprep.subr.mxu0 0.0
        %1516 = vmatpush1.msra.mxu0 0.0
        %1517 = vmatprep.subr.mxu0 0.0
        %1518 = vmatpush1.msra.mxu0 0.0
        %1519 = vmatprep.subr.mxu0 0.0
        %1520 = vmatpush1.msra.mxu0 0.0
        %1521 = vmatprep.subr.mxu0 0.0
        %1522 = vmatpush1.msra.mxu0 0.0
        %1523 = vmatprep.subr.mxu0 0.0
        %1524 = vmatpush1.msra.mxu0 0.0
        %1525 = vmatprep.subr.mxu0 0.0
        %1526 = vmatpush1.msra.mxu0 %v1132
        %1527 = vmatprep.subr.mxu0 0.0
        %1528 = vmatpush2.msra.mxu0 0.0
        %1529 = vmatprep.subr.mxu0 0.0
        %1530 = vmatpush2.msra.mxu0 0.0
        %1531 = vmatprep.subr.mxu0 0.0
        %1532 = vmatpush2.msra.mxu0 0.0
        %1533 = vmatprep.subr.mxu0 0.0
        %1534 = vmatpush2.msra.mxu0 0.0
        %1535 = vmatprep.subr.mxu0 0.0
        %1536 = vmatpush2.msra.mxu0 0.0
        %1537 = vmatprep.subr.mxu0 0.0
        %1538 = vmatpush2.msra.mxu0 0.0
        %1539 = vmatprep.subr.mxu0 0.0
        %1540 = vmatpush2.msra.mxu0 0.0
        %1541 = vmatprep.subr.mxu0 0.0
        %1542 = vmatpush2.msra.mxu0 0.0
        %1543 = vmatprep.subr.mxu0 0.0
        %1544 = vmatpush2.msra.mxu0 0.0
        %1545 = vmatprep.subr.mxu0 0.0
        %1546 = vmatpush2.msra.mxu0 0.0
        %1547 = vmatprep.subr.mxu0 0.0
        %1548 = vmatpush2.msra.mxu0 0.0
        %1549 = vmatprep.subr.mxu0 0.0
        %1550 = vmatpush2.msra.mxu0 0.0
        %1551 = vmatprep.subr.mxu0 0.0
        %1552 = vmatpush2.msra.mxu0 0.0
        %1553 = vmatprep.subr.mxu0 0.0
        %1554 = vmatpush2.msra.mxu0 0.0
        %1555 = vmatprep.subr.mxu0 0.0
        %1556 = vmatpush2.msra.mxu0 0.0
        %1557 = vmatprep.subr.mxu0 0.0
        %1558 = vmatpush2.msra.mxu0 0.0
        %1559 = vmatprep.mubr.f32.mxu0 0.0
        %1560 = vmatmul.mubr.f32.gmra.mxu0 %v787
        %v1561 = vpop.f32.mrf.mxu0
        %v1562 = vadd.f32 0.0, %v1561
        %v1563 = vpop.f32.mrf.mxu0
        %1564 = vdwg.mxu0
        %1565 = vmatprep.subr.mxu0 0.0
        %1566 = vmatpush1.msra.mxu0 0.0
        %1567 = vmatprep.subr.mxu0 0.0
        %1568 = vmatpush1.msra.mxu0 0.0
        %1569 = vmatprep.subr.mxu0 0.0
        %1570 = vmatpush1.msra.mxu0 0.0
        %1571 = vmatprep.subr.mxu0 0.0
        %1572 = vmatpush1.msra.mxu0 0.0
        %1573 = vmatprep.subr.mxu0 0.0
        %1574 = vmatpush1.msra.mxu0 0.0
        %1575 = vmatprep.subr.mxu0 0.0
        %1576 = vmatpush1.msra.mxu0 0.0
        %1577 = vmatprep.subr.mxu0 0.0
        %1578 = vmatpush1.msra.mxu0 0.0
        %1579 = vmatprep.subr.mxu0 0.0
        %1580 = vmatpush1.msra.mxu0 0.0
        %1581 = vmatprep.subr.mxu0 0.0
        %1582 = vmatpush1.msra.mxu0 0.0
        %1583 = vmatprep.subr.mxu0 0.0
        %1584 = vmatpush1.msra.mxu0 0.0
        %1585 = vmatprep.subr.mxu0 0.0
        %1586 = vmatpush1.msra.mxu0 0.0
        %1587 = vmatprep.subr.mxu0 0.0
        %1588 = vmatpush1.msra.mxu0 0.0
        %1589 = vmatprep.subr.mxu0 0.0
        %1590 = vmatpush1.msra.mxu0 0.0
        %1591 = vmatprep.subr.mxu0 0.0
        %1592 = vmatpush1.msra.mxu0 0.0
        %1593 = vmatprep.subr.mxu0 0.0
        %1594 = vmatpush1.msra.mxu0 0.0
        %1595 = vmatprep.subr.mxu0 0.0
        %1596 = vmatpush1.msra.mxu0 %v1137
        %1597 = vmatprep.subr.mxu0 0.0
        %1598 = vmatpush2.msra.mxu0 0.0
        %1599 = vmatprep.subr.mxu0 0.0
        %1600 = vmatpush2.msra.mxu0 0.0
        %1601 = vmatprep.subr.mxu0 0.0
        %1602 = vmatpush2.msra.mxu0 0.0
        %1603 = vmatprep.subr.mxu0 0.0
        %1604 = vmatpush2.msra.mxu0 0.0
        %1605 = vmatprep.subr.mxu0 0.0
        %1606 = vmatpush2.msra.mxu0 0.0
        %1607 = vmatprep.subr.mxu0 0.0
        %1608 = vmatpush2.msra.mxu0 0.0
        %1609 = vmatprep.subr.mxu0 0.0
        %1610 = vmatpush2.msra.mxu0 0.0
        %1611 = vmatprep.subr.mxu0 0.0
        %1612 = vmatpush2.msra.mxu0 0.0
        %1613 = vmatprep.subr.mxu0 0.0
        %1614 = vmatpush2.msra.mxu0 0.0
        %1615 = vmatprep.subr.mxu0 0.0
        %1616 = vmatpush2.msra.mxu0 0.0
        %1617 = vmatprep.subr.mxu0 0.0
        %1618 = vmatpush2.msra.mxu0 0.0
        %1619 = vmatprep.subr.mxu0 0.0
        %1620 = vmatpush2.msra.mxu0 0.0
        %1621 = vmatprep.subr.mxu0 0.0
        %1622 = vmatpush2.msra.mxu0 0.0
        %1623 = vmatprep.subr.mxu0 0.0
        %1624 = vmatpush2.msra.mxu0 0.0
        %1625 = vmatprep.subr.mxu0 0.0
        %1626 = vmatpush2.msra.mxu0 0.0
        %1627 = vmatprep.subr.mxu0 0.0
        %1628 = vmatpush2.msra.mxu0 0.0
        %1629 = vmatprep.mubr.f32.mxu0 0.0
        %1630 = vmatmul.mubr.f32.gmra.mxu0 %v860
        %v1631 = vpop.f32.mrf.mxu0
        %v1632 = vadd.f32 0.0, %v1631
        %v1633 = vpop.f32.mrf.mxu0
        %1634 = vdwg.mxu0
        %1635 = vmatprep.subr.mxu0 0.0
        %1636 = vmatpush1.msra.mxu0 0.0
        %1637 = vmatprep.subr.mxu0 0.0
        %1638 = vmatpush1.msra.mxu0 0.0
        %1639 = vmatprep.subr.mxu0 0.0
        %1640 = vmatpush1.msra.mxu0 0.0
        %1641 = vmatprep.subr.mxu0 0.0
        %1642 = vmatpush1.msra.mxu0 0.0
        %1643 = vmatprep.subr.mxu0 0.0
        %1644 = vmatpush1.msra.mxu0 0.0
        %1645 = vmatprep.subr.mxu0 0.0
        %1646 = vmatpush1.msra.mxu0 0.0
        %1647 = vmatprep.subr.mxu0 0.0
        %1648 = vmatpush1.msra.mxu0 0.0
        %1649 = vmatprep.subr.mxu0 0.0
        %1650 = vmatpush1.msra.mxu0 0.0
        %1651 = vmatprep.subr.mxu0 0.0
        %1652 = vmatpush1.msra.mxu0 0.0
        %1653 = vmatprep.subr.mxu0 0.0
        %1654 = vmatpush1.msra.mxu0 0.0
        %1655 = vmatprep.subr.mxu0 0.0
        %1656 = vmatpush1.msra.mxu0 0.0
        %1657 = vmatprep.subr.mxu0 0.0
        %1658 = vmatpush1.msra.mxu0 0.0
        %1659 = vmatprep.subr.mxu0 0.0
        %1660 = vmatpush1.msra.mxu0 0.0
        %1661 = vmatprep.subr.mxu0 0.0
        %1662 = vmatpush1.msra.mxu0 0.0
        %1663 = vmatprep.subr.mxu0 0.0
        %1664 = vmatpush1.msra.mxu0 0.0
        %1665 = vmatprep.subr.mxu0 0.0
        %1666 = vmatpush1.msra.mxu0 %v1142
        %1667 = vmatprep.subr.mxu0 0.0
        %1668 = vmatpush2.msra.mxu0 0.0
        %1669 = vmatprep.subr.mxu0 0.0
        %1670 = vmatpush2.msra.mxu0 0.0
        %1671 = vmatprep.subr.mxu0 0.0
        %1672 = vmatpush2.msra.mxu0 0.0
        %1673 = vmatprep.subr.mxu0 0.0
        %1674 = vmatpush2.msra.mxu0 0.0
        %1675 = vmatprep.subr.mxu0 0.0
        %1676 = vmatpush2.msra.mxu0 0.0
        %1677 = vmatprep.subr.mxu0 0.0
        %1678 = vmatpush2.msra.mxu0 0.0
        %1679 = vmatprep.subr.mxu0 0.0
        %1680 = vmatpush2.msra.mxu0 0.0
        %1681 = vmatprep.subr.mxu0 0.0
        %1682 = vmatpush2.msra.mxu0 0.0
        %1683 = vmatprep.subr.mxu0 0.0
        %1684 = vmatpush2.msra.mxu0 0.0
        %1685 = vmatprep.subr.mxu0 0.0
        %1686 = vmatpush2.msra.mxu0 0.0
        %1687 = vmatprep.subr.mxu0 0.0
        %1688 = vmatpush2.msra.mxu0 0.0
        %1689 = vmatprep.subr.mxu0 0.0
        %1690 = vmatpush2.msra.mxu0 0.0
        %1691 = vmatprep.subr.mxu0 0.0
        %1692 = vmatpush2.msra.mxu0 0.0
        %1693 = vmatprep.subr.mxu0 0.0
        %1694 = vmatpush2.msra.mxu0 0.0
        %1695 = vmatprep.subr.mxu0 0.0
        %1696 = vmatpush2.msra.mxu0 0.0
        %1697 = vmatprep.subr.mxu0 0.0
        %1698 = vmatpush2.msra.mxu0 0.0
        %1699 = vmatprep.mubr.f32.mxu0 0.0
        %1700 = vmatmul.mubr.f32.gmra.mxu0 %v933
        %v1701 = vpop.f32.mrf.mxu0
        %v1702 = vadd.f32 0.0, %v1701
        %v1703 = vpop.f32.mrf.mxu0
        %1704 = vdwg.mxu0
        %v1705 = vmax.f32 %v1212, 0.0
        %v1706 = vmax.f32 %v1282, 0.0
        %v1707 = vmax.f32 %v1352, 0.0
        %v1708 = vmax.f32 %v1422, 0.0
        %v1709 = vmax.f32 %v1492, 0.0
        %v1710 = vmax.f32 %v1562, 0.0
        %v1711 = vmax.f32 %v1632, 0.0
        %v1712 = vmax.f32 %v1702, 0.0
        %v1713 = vlaneseq
        %v1714 = vand.u32 %v1713, 127
        %v1715 = vlaneseq
        %v1716 = vshrl.u32 %v1715, 7
        %v1717 = vmul.u32 %v1716, 8
        %vm1718 = vcmp.eq.s32.totalorder %v1714, %v1717
        %v1719 = vsel %vm1718, 1, 0
        %v1720 = vcvt.s32.f32 %v1719
        %vm1721 = vcmask 523264
        %v1723 = vsel %vm1721, %v1720, 0
        %1725 = vmatprep.subr.mxu0 0.0
        %1726 = vmatpush1.msra.mxu0 0.0
        %1727 = vmatprep.subr.mxu0 0.0
        %1728 = vmatpush1.msra.mxu0 0.0
        %1729 = vmatprep.subr.mxu0 0.0
        %1730 = vmatpush1.msra.mxu0 0.0
        %1731 = vmatprep.subr.mxu0 0.0
        %1732 = vmatpush1.msra.mxu0 0.0
        %1733 = vmatprep.subr.mxu0 0.0
        %1734 = vmatpush1.msra.mxu0 0.0
        %1735 = vmatprep.subr.mxu0 0.0
        %1736 = vmatpush1.msra.mxu0 0.0
        %1737 = vmatprep.subr.mxu0 0.0
        %1738 = vmatpush1.msra.mxu0 0.0
        %1739 = vmatprep.subr.mxu0 0.0
        %1740 = vmatpush1.msra.mxu0 0.0
        %1741 = vmatprep.subr.mxu0 0.0
        %1742 = vmatpush1.msra.mxu0 %v1712
        %1743 = vmatprep.subr.mxu0 0.0
        %1744 = vmatpush1.msra.mxu0 %v1711
        %1745 = vmatprep.subr.mxu0 0.0
        %1746 = vmatpush1.msra.mxu0 %v1710
        %1747 = vmatprep.subr.mxu0 0.0
        %1748 = vmatpush1.msra.mxu0 %v1709
        %1749 = vmatprep.subr.mxu0 0.0
        %1750 = vmatpush1.msra.mxu0 %v1708
        %1751 = vmatprep.subr.mxu0 0.0
        %1752 = vmatpush1.msra.mxu0 %v1707
        %1753 = vmatprep.subr.mxu0 0.0
        %1754 = vmatpush1.msra.mxu0 %v1706
        %1755 = vmatprep.subr.mxu0 0.0
        %1756 = vmatpush1.msra.mxu0 %v1705
        %1757 = vmatprep.subr.mxu0 0.0
        %1758 = vmatpush2.msra.mxu0 0.0
        %1759 = vmatprep.subr.mxu0 0.0
        %1760 = vmatpush2.msra.mxu0 0.0
        %1761 = vmatprep.subr.mxu0 0.0
        %1762 = vmatpush2.msra.mxu0 0.0
        %1763 = vmatprep.subr.mxu0 0.0
        %1764 = vmatpush2.msra.mxu0 0.0
        %1765 = vmatprep.subr.mxu0 0.0
        %1766 = vmatpush2.msra.mxu0 0.0
        %1767 = vmatprep.subr.mxu0 0.0
        %1768 = vmatpush2.msra.mxu0 0.0
        %1769 = vmatprep.subr.mxu0 0.0
        %1770 = vmatpush2.msra.mxu0 0.0
        %1771 = vmatprep.subr.mxu0 0.0
        %1772 = vmatpush2.msra.mxu0 0.0
        %1773 = vmatprep.subr.mxu0 0.0
        %1774 = vmatpush2.msra.mxu0 0.0
        %1775 = vmatprep.subr.mxu0 0.0
        %1776 = vmatpush2.msra.mxu0 0.0
        %1777 = vmatprep.subr.mxu0 0.0
        %1778 = vmatpush2.msra.mxu0 0.0
        %1779 = vmatprep.subr.mxu0 0.0
        %1780 = vmatpush2.msra.mxu0 0.0
        %1781 = vmatprep.subr.mxu0 0.0
        %1782 = vmatpush2.msra.mxu0 0.0
        %1783 = vmatprep.subr.mxu0 0.0
        %1784 = vmatpush2.msra.mxu0 0.0
        %1785 = vmatprep.subr.mxu0 0.0
        %1786 = vmatpush2.msra.mxu0 0.0
        %1787 = vmatprep.subr.mxu0 0.0
        %1788 = vmatpush2.msra.mxu0 0.0
        %1789 = vmatprep.mubr.f32.mxu0 0.0
        %1790 = vmatmul.mubr.f32.gmra.mxu0 %v1723
        %v1791 = vpop.f32.mrf.mxu0
        %v1792 = vadd.f32 0.0, %v1791
        %v1793 = vpop.f32.mrf.mxu0
        %1794 = vdwg.mxu0
        %v1795 = vld [vmem:[%s4] sm:$0xff]
        %v1796 = vld [vmem:[%s4 + $0x8] sm:$0xff]
        %v1797 = vadd.s32 %v1717, 1
        %vm1798 = vcmp.eq.s32.totalorder %v1714, %v1797
        %v1799 = vsel %vm1798, 1, 0
        %v1800 = vcvt.s32.f32 %v1799
        %v1802 = vsel %vm1721, %v1800, 0
        %1804 = vmatprep.subr.mxu0 0.0
        %1805 = vmatpush1.msra.mxu0 0.0
        %1806 = vmatprep.subr.mxu0 0.0
        %1807 = vmatpush1.msra.mxu0 0.0
        %1808 = vmatprep.subr.mxu0 0.0
        %1809 = vmatpush1.msra.mxu0 0.0
        %1810 = vmatprep.subr.mxu0 0.0
        %1811 = vmatpush1.msra.mxu0 0.0
        %1812 = vmatprep.subr.mxu0 0.0
        %1813 = vmatpush1.msra.mxu0 0.0
        %1814 = vmatprep.subr.mxu0 0.0
        %1815 = vmatpush1.msra.mxu0 0.0
        %1816 = vmatprep.subr.mxu0 0.0
        %1817 = vmatpush1.msra.mxu0 0.0
        %1818 = vmatprep.subr.mxu0 0.0
        %1819 = vmatpush1.msra.mxu0 0.0
        %1820 = vmatprep.subr.mxu0 0.0
        %1821 = vmatpush1.msra.mxu0 %v1712
        %1822 = vmatprep.subr.mxu0 0.0
        %1823 = vmatpush1.msra.mxu0 %v1711
        %1824 = vmatprep.subr.mxu0 0.0
        %1825 = vmatpush1.msra.mxu0 %v1710
        %1826 = vmatprep.subr.mxu0 0.0
        %1827 = vmatpush1.msra.mxu0 %v1709
        %1828 = vmatprep.subr.mxu0 0.0
        %1829 = vmatpush1.msra.mxu0 %v1708
        %1830 = vmatprep.subr.mxu0 0.0
        %1831 = vmatpush1.msra.mxu0 %v1707
        %1832 = vmatprep.subr.mxu0 0.0
        %1833 = vmatpush1.msra.mxu0 %v1706
        %1834 = vmatprep.subr.mxu0 0.0
        %1835 = vmatpush1.msra.mxu0 %v1705
        %1836 = vmatprep.subr.mxu0 0.0
        %1837 = vmatpush2.msra.mxu0 0.0
        %1838 = vmatprep.subr.mxu0 0.0
        %1839 = vmatpush2.msra.mxu0 0.0
        %1840 = vmatprep.subr.mxu0 0.0
        %1841 = vmatpush2.msra.mxu0 0.0
        %1842 = vmatprep.subr.mxu0 0.0
        %1843 = vmatpush2.msra.mxu0 0.0
        %1844 = vmatprep.subr.mxu0 0.0
        %1845 = vmatpush2.msra.mxu0 0.0
        %1846 = vmatprep.subr.mxu0 0.0
        %1847 = vmatpush2.msra.mxu0 0.0
        %1848 = vmatprep.subr.mxu0 0.0
        %1849 = vmatpush2.msra.mxu0 0.0
        %1850 = vmatprep.subr.mxu0 0.0
        %1851 = vmatpush2.msra.mxu0 0.0
        %1852 = vmatprep.subr.mxu0 0.0
        %1853 = vmatpush2.msra.mxu0 0.0
        %1854 = vmatprep.subr.mxu0 0.0
        %1855 = vmatpush2.msra.mxu0 0.0
        %1856 = vmatprep.subr.mxu0 0.0
        %1857 = vmatpush2.msra.mxu0 0.0
        %1858 = vmatprep.subr.mxu0 0.0
        %1859 = vmatpush2.msra.mxu0 0.0
        %1860 = vmatprep.subr.mxu0 0.0
        %1861 = vmatpush2.msra.mxu0 0.0
        %1862 = vmatprep.subr.mxu0 0.0
        %1863 = vmatpush2.msra.mxu0 0.0
        %1864 = vmatprep.subr.mxu0 0.0
        %1865 = vmatpush2.msra.mxu0 0.0
        %1866 = vmatprep.subr.mxu0 0.0
        %1867 = vmatpush2.msra.mxu0 0.0
        %1868 = vmatprep.mubr.f32.mxu0 0.0
        %1869 = vmatmul.mubr.f32.gmra.mxu0 %v1802
        %v1870 = vpop.f32.mrf.mxu0
        %v1871 = vadd.f32 0.0, %v1870
        %v1872 = vpop.f32.mrf.mxu0
        %1873 = vdwg.mxu0
        %s1874 = scalar_lea.vmem %s4, 16
        %v1875 = vld [vmem:[%s1874] sm:$0xff]
        %v1876 = vld [vmem:[%s1874 + $0x8] sm:$0xff]
        %v1878 = vsel %vm1015, %v1871, 0
        %1880 = vmatprep.subr.mxu0 0.0
        %1881 = vmatpush1.msra.mxu0 0.0
        %1882 = vmatprep.subr.mxu0 0.0
        %1883 = vmatpush1.msra.mxu0 0.0
        %1884 = vmatprep.subr.mxu0 0.0
        %1885 = vmatpush1.msra.mxu0 0.0
        %1886 = vmatprep.subr.mxu0 0.0
        %1887 = vmatpush1.msra.mxu0 0.0
        %1888 = vmatprep.subr.mxu0 0.0
        %1889 = vmatpush1.msra.mxu0 0.0
        %1890 = vmatprep.subr.mxu0 0.0
        %1891 = vmatpush1.msra.mxu0 0.0
        %1892 = vmatprep.subr.mxu0 0.0
        %1893 = vmatpush1.msra.mxu0 0.0
        %1894 = vmatprep.subr.mxu0 0.0
        %1895 = vmatpush1.msra.mxu0 0.0
        %1896 = vmatprep.subr.mxu0 0.0
        %1897 = vmatpush1.msra.mxu0 0.0
        %1898 = vmatprep.subr.mxu0 0.0
        %1899 = vmatpush1.msra.mxu0 0.0
        %1900 = vmatprep.subr.mxu0 0.0
        %1901 = vmatpush1.msra.mxu0 0.0
        %1902 = vmatprep.subr.mxu0 0.0
        %1903 = vmatpush1.msra.mxu0 0.0
        %1904 = vmatprep.subr.mxu0 0.0
        %1905 = vmatpush1.msra.mxu0 0.0
        %1906 = vmatprep.subr.mxu0 0.0
        %1907 = vmatpush1.msra.mxu0 0.0
        %1908 = vmatprep.subr.mxu0 0.0
        %1909 = vmatpush1.msra.mxu0 %v1876
        %1910 = vmatprep.subr.mxu0 0.0
        %1911 = vmatpush1.msra.mxu0 %v1875
        %1912 = vmatprep.subr.mxu0 0.0
        %1913 = vmatpush2.msra.mxu0 0.0
        %1914 = vmatprep.subr.mxu0 0.0
        %1915 = vmatpush2.msra.mxu0 0.0
        %1916 = vmatprep.subr.mxu0 0.0
        %1917 = vmatpush2.msra.mxu0 0.0
        %1918 = vmatprep.subr.mxu0 0.0
        %1919 = vmatpush2.msra.mxu0 0.0
        %1920 = vmatprep.subr.mxu0 0.0
        %1921 = vmatpush2.msra.mxu0 0.0
        %1922 = vmatprep.subr.mxu0 0.0
        %1923 = vmatpush2.msra.mxu0 0.0
        %1924 = vmatprep.subr.mxu0 0.0
        %1925 = vmatpush2.msra.mxu0 0.0
        %1926 = vmatprep.subr.mxu0 0.0
        %1927 = vmatpush2.msra.mxu0 0.0
        %1928 = vmatprep.subr.mxu0 0.0
        %1929 = vmatpush2.msra.mxu0 0.0
        %1930 = vmatprep.subr.mxu0 0.0
        %1931 = vmatpush2.msra.mxu0 0.0
        %1932 = vmatprep.subr.mxu0 0.0
        %1933 = vmatpush2.msra.mxu0 0.0
        %1934 = vmatprep.subr.mxu0 0.0
        %1935 = vmatpush2.msra.mxu0 0.0
        %1936 = vmatprep.subr.mxu0 0.0
        %1937 = vmatpush2.msra.mxu0 0.0
        %1938 = vmatprep.subr.mxu0 0.0
        %1939 = vmatpush2.msra.mxu0 0.0
        %1940 = vmatprep.subr.mxu0 0.0
        %1941 = vmatpush2.msra.mxu0 0.0
        %1942 = vmatprep.subr.mxu0 0.0
        %1943 = vmatpush2.msra.mxu0 0.0
        %1944 = vmatprep.mubr.f32.mxu0 0.0
        %1945 = vmatmul.mubr.f32.gmra.mxu0 %v1878
        %v1946 = vpop.f32.mrf.mxu0
        %v1947 = vadd.f32 0.0, %v1946
        %v1948 = vpop.f32.mrf.mxu0
        %1949 = vdwg.mxu0
        %v1951 = vsel %vm1015, %v1792, 0
        %1953 = vmatprep.subr.mxu0 0.0
        %1954 = vmatpush1.msra.mxu0 0.0
        %1955 = vmatprep.subr.mxu0 0.0
        %1956 = vmatpush1.msra.mxu0 0.0
        %1957 = vmatprep.subr.mxu0 0.0
        %1958 = vmatpush1.msra.mxu0 0.0
        %1959 = vmatprep.subr.mxu0 0.0
        %1960 = vmatpush1.msra.mxu0 0.0
        %1961 = vmatprep.subr.mxu0 0.0
        %1962 = vmatpush1.msra.mxu0 0.0
        %1963 = vmatprep.subr.mxu0 0.0
        %1964 = vmatpush1.msra.mxu0 0.0
        %1965 = vmatprep.subr.mxu0 0.0
        %1966 = vmatpush1.msra.mxu0 0.0
        %1967 = vmatprep.subr.mxu0 0.0
        %1968 = vmatpush1.msra.mxu0 0.0
        %1969 = vmatprep.subr.mxu0 0.0
        %1970 = vmatpush1.msra.mxu0 0.0
        %1971 = vmatprep.subr.mxu0 0.0
        %1972 = vmatpush1.msra.mxu0 0.0
        %1973 = vmatprep.subr.mxu0 0.0
        %1974 = vmatpush1.msra.mxu0 0.0
        %1975 = vmatprep.subr.mxu0 0.0
        %1976 = vmatpush1.msra.mxu0 0.0
        %1977 = vmatprep.subr.mxu0 0.0
        %1978 = vmatpush1.msra.mxu0 0.0
        %1979 = vmatprep.subr.mxu0 0.0
        %1980 = vmatpush1.msra.mxu0 0.0
        %1981 = vmatprep.subr.mxu0 0.0
        %1982 = vmatpush1.msra.mxu0 %v1796
        %1983 = vmatprep.subr.mxu0 0.0
        %1984 = vmatpush1.msra.mxu0 %v1795
        %1985 = vmatprep.subr.mxu0 0.0
        %1986 = vmatpush2.msra.mxu0 0.0
        %1987 = vmatprep.subr.mxu0 0.0
        %1988 = vmatpush2.msra.mxu0 0.0
        %1989 = vmatprep.subr.mxu0 0.0
        %1990 = vmatpush2.msra.mxu0 0.0
        %1991 = vmatprep.subr.mxu0 0.0
        %1992 = vmatpush2.msra.mxu0 0.0
        %1993 = vmatprep.subr.mxu0 0.0
        %1994 = vmatpush2.msra.mxu0 0.0
        %1995 = vmatprep.subr.mxu0 0.0
        %1996 = vmatpush2.msra.mxu0 0.0
        %1997 = vmatprep.subr.mxu0 0.0
        %1998 = vmatpush2.msra.mxu0 0.0
        %1999 = vmatprep.subr.mxu0 0.0
        %2000 = vmatpush2.msra.mxu0 0.0
        %2001 = vmatprep.subr.mxu0 0.0
        %2002 = vmatpush2.msra.mxu0 0.0
        %2003 = vmatprep.subr.mxu0 0.0
        %2004 = vmatpush2.msra.mxu0 0.0
        %2005 = vmatprep.subr.mxu0 0.0
        %2006 = vmatpush2.msra.mxu0 0.0
        %2007 = vmatprep.subr.mxu0 0.0
        %2008 = vmatpush2.msra.mxu0 0.0
        %2009 = vmatprep.subr.mxu0 0.0
        %2010 = vmatpush2.msra.mxu0 0.0
        %2011 = vmatprep.subr.mxu0 0.0
        %2012 = vmatpush2.msra.mxu0 0.0
        %2013 = vmatprep.subr.mxu0 0.0
        %2014 = vmatpush2.msra.mxu0 0.0
        %2015 = vmatprep.subr.mxu0 0.0
        %2016 = vmatpush2.msra.mxu0 0.0
        %2017 = vmatprep.mubr.f32.mxu0 0.0
        %2018 = vmatmul.mubr.f32.gmra.mxu0 %v1951
        %v2019 = vpop.f32.mrf.mxu0
        %v2020 = vadd.f32 %v1947, %v2019
        %v2021 = vpop.f32.mrf.mxu0
        %2022 = vdwg.mxu0
        %v2023 = vadd.s32 %v1717, 2
        %vm2024 = vcmp.eq.s32.totalorder %v1714, %v2023
        %v2025 = vsel %vm2024, 1, 0
        %v2026 = vcvt.s32.f32 %v2025
        %v2028 = vsel %vm1721, %v2026, 0
        %2030 = vmatprep.subr.mxu0 0.0
        %2031 = vmatpush1.msra.mxu0 0.0
        %2032 = vmatprep.subr.mxu0 0.0
        %2033 = vmatpush1.msra.mxu0 0.0
        %2034 = vmatprep.subr.mxu0 0.0
        %2035 = vmatpush1.msra.mxu0 0.0
        %2036 = vmatprep.subr.mxu0 0.0
        %2037 = vmatpush1.msra.mxu0 0.0
        %2038 = vmatprep.subr.mxu0 0.0
        %2039 = vmatpush1.msra.mxu0 0.0
        %2040 = vmatprep.subr.mxu0 0.0
        %2041 = vmatpush1.msra.mxu0 0.0
        %2042 = vmatprep.subr.mxu0 0.0
        %2043 = vmatpush1.msra.mxu0 0.0
        %2044 = vmatprep.subr.mxu0 0.0
        %2045 = vmatpush1.msra.mxu0 0.0
        %2046 = vmatprep.subr.mxu0 0.0
        %2047 = vmatpush1.msra.mxu0 %v1712
        %2048 = vmatprep.subr.mxu0 0.0
        %2049 = vmatpush1.msra.mxu0 %v1711
        %2050 = vmatprep.subr.mxu0 0.0
        %2051 = vmatpush1.msra.mxu0 %v1710
        %2052 = vmatprep.subr.mxu0 0.0
        %2053 = vmatpush1.msra.mxu0 %v1709
        %2054 = vmatprep.subr.mxu0 0.0
        %2055 = vmatpush1.msra.mxu0 %v1708
        %2056 = vmatprep.subr.mxu0 0.0
        %2057 = vmatpush1.msra.mxu0 %v1707
        %2058 = vmatprep.subr.mxu0 0.0
        %2059 = vmatpush1.msra.mxu0 %v1706
        %2060 = vmatprep.subr.mxu0 0.0
        %2061 = vmatpush1.msra.mxu0 %v1705
        %2062 = vmatprep.subr.mxu0 0.0
        %2063 = vmatpush2.msra.mxu0 0.0
        %2064 = vmatprep.subr.mxu0 0.0
        %2065 = vmatpush2.msra.mxu0 0.0
        %2066 = vmatprep.subr.mxu0 0.0
        %2067 = vmatpush2.msra.mxu0 0.0
        %2068 = vmatprep.subr.mxu0 0.0
        %2069 = vmatpush2.msra.mxu0 0.0
        %2070 = vmatprep.subr.mxu0 0.0
        %2071 = vmatpush2.msra.mxu0 0.0
        %2072 = vmatprep.subr.mxu0 0.0
        %2073 = vmatpush2.msra.mxu0 0.0
        %2074 = vmatprep.subr.mxu0 0.0
        %2075 = vmatpush2.msra.mxu0 0.0
        %2076 = vmatprep.subr.mxu0 0.0
        %2077 = vmatpush2.msra.mxu0 0.0
        %2078 = vmatprep.subr.mxu0 0.0
        %2079 = vmatpush2.msra.mxu0 0.0
        %2080 = vmatprep.subr.mxu0 0.0
        %2081 = vmatpush2.msra.mxu0 0.0
        %2082 = vmatprep.subr.mxu0 0.0
        %2083 = vmatpush2.msra.mxu0 0.0
        %2084 = vmatprep.subr.mxu0 0.0
        %2085 = vmatpush2.msra.mxu0 0.0
        %2086 = vmatprep.subr.mxu0 0.0
        %2087 = vmatpush2.msra.mxu0 0.0
        %2088 = vmatprep.subr.mxu0 0.0
        %2089 = vmatpush2.msra.mxu0 0.0
        %2090 = vmatprep.subr.mxu0 0.0
        %2091 = vmatpush2.msra.mxu0 0.0
        %2092 = vmatprep.subr.mxu0 0.0
        %2093 = vmatpush2.msra.mxu0 0.0
        %2094 = vmatprep.mubr.f32.mxu0 0.0
        %2095 = vmatmul.mubr.f32.gmra.mxu0 %v2028
        %v2096 = vpop.f32.mrf.mxu0
        %v2097 = vadd.f32 0.0, %v2096
        %v2098 = vpop.f32.mrf.mxu0
        %2099 = vdwg.mxu0
        %s2100 = scalar_lea.vmem %s4, 32
        %v2101 = vld [vmem:[%s2100] sm:$0xff]
        %v2102 = vld [vmem:[%s2100 + $0x8] sm:$0xff]
        %v2104 = vsel %vm1015, %v2097, 0
        %2106 = vmatprep.subr.mxu0 0.0
        %2107 = vmatpush1.msra.mxu0 0.0
        %2108 = vmatprep.subr.mxu0 0.0
        %2109 = vmatpush1.msra.mxu0 0.0
        %2110 = vmatprep.subr.mxu0 0.0
        %2111 = vmatpush1.msra.mxu0 0.0
        %2112 = vmatprep.subr.mxu0 0.0
        %2113 = vmatpush1.msra.mxu0 0.0
        %2114 = vmatprep.subr.mxu0 0.0
        %2115 = vmatpush1.msra.mxu0 0.0
        %2116 = vmatprep.subr.mxu0 0.0
        %2117 = vmatpush1.msra.mxu0 0.0
        %2118 = vmatprep.subr.mxu0 0.0
        %2119 = vmatpush1.msra.mxu0 0.0
        %2120 = vmatprep.subr.mxu0 0.0
        %2121 = vmatpush1.msra.mxu0 0.0
        %2122 = vmatprep.subr.mxu0 0.0
        %2123 = vmatpush1.msra.mxu0 0.0
        %2124 = vmatprep.subr.mxu0 0.0
        %2125 = vmatpush1.msra.mxu0 0.0
        %2126 = vmatprep.subr.mxu0 0.0
        %2127 = vmatpush1.msra.mxu0 0.0
        %2128 = vmatprep.subr.mxu0 0.0
        %2129 = vmatpush1.msra.mxu0 0.0
        %2130 = vmatprep.subr.mxu0 0.0
        %2131 = vmatpush1.msra.mxu0 0.0
        %2132 = vmatprep.subr.mxu0 0.0
        %2133 = vmatpush1.msra.mxu0 0.0
        %2134 = vmatprep.subr.mxu0 0.0
        %2135 = vmatpush1.msra.mxu0 %v2102
        %2136 = vmatprep.subr.mxu0 0.0
        %2137 = vmatpush1.msra.mxu0 %v2101
        %2138 = vmatprep.subr.mxu0 0.0
        %2139 = vmatpush2.msra.mxu0 0.0
        %2140 = vmatprep.subr.mxu0 0.0
        %2141 = vmatpush2.msra.mxu0 0.0
        %2142 = vmatprep.subr.mxu0 0.0
        %2143 = vmatpush2.msra.mxu0 0.0
        %2144 = vmatprep.subr.mxu0 0.0
        %2145 = vmatpush2.msra.mxu0 0.0
        %2146 = vmatprep.subr.mxu0 0.0
        %2147 = vmatpush2.msra.mxu0 0.0
        %2148 = vmatprep.subr.mxu0 0.0
        %2149 = vmatpush2.msra.mxu0 0.0
        %2150 = vmatprep.subr.mxu0 0.0
        %2151 = vmatpush2.msra.mxu0 0.0
        %2152 = vmatprep.subr.mxu0 0.0
        %2153 = vmatpush2.msra.mxu0 0.0
        %2154 = vmatprep.subr.mxu0 0.0
        %2155 = vmatpush2.msra.mxu0 0.0
        %2156 = vmatprep.subr.mxu0 0.0
        %2157 = vmatpush2.msra.mxu0 0.0
        %2158 = vmatprep.subr.mxu0 0.0
        %2159 = vmatpush2.msra.mxu0 0.0
        %2160 = vmatprep.subr.mxu0 0.0
        %2161 = vmatpush2.msra.mxu0 0.0
        %2162 = vmatprep.subr.mxu0 0.0
        %2163 = vmatpush2.msra.mxu0 0.0
        %2164 = vmatprep.subr.mxu0 0.0
        %2165 = vmatpush2.msra.mxu0 0.0
        %2166 = vmatprep.subr.mxu0 0.0
        %2167 = vmatpush2.msra.mxu0 0.0
        %2168 = vmatprep.subr.mxu0 0.0
        %2169 = vmatpush2.msra.mxu0 0.0
        %2170 = vmatprep.mubr.f32.mxu0 0.0
        %2171 = vmatmul.mubr.f32.gmra.mxu0 %v2104
        %v2172 = vpop.f32.mrf.mxu0
        %v2173 = vadd.f32 0.0, %v2172
        %v2174 = vpop.f32.mrf.mxu0
        %2175 = vdwg.mxu0
        %v2176 = vadd.f32 %v2020, %v2173
        %v2177 = vadd.s32 %v1717, 3
        %vm2178 = vcmp.eq.s32.totalorder %v1714, %v2177
        %v2179 = vsel %vm2178, 1, 0
        %v2180 = vcvt.s32.f32 %v2179
        %v2182 = vsel %vm1721, %v2180, 0
        %2184 = vmatprep.subr.mxu0 0.0
        %2185 = vmatpush1.msra.mxu0 0.0
        %2186 = vmatprep.subr.mxu0 0.0
        %2187 = vmatpush1.msra.mxu0 0.0
        %2188 = vmatprep.subr.mxu0 0.0
        %2189 = vmatpush1.msra.mxu0 0.0
        %2190 = vmatprep.subr.mxu0 0.0
        %2191 = vmatpush1.msra.mxu0 0.0
        %2192 = vmatprep.subr.mxu0 0.0
        %2193 = vmatpush1.msra.mxu0 0.0
        %2194 = vmatprep.subr.mxu0 0.0
        %2195 = vmatpush1.msra.mxu0 0.0
        %2196 = vmatprep.subr.mxu0 0.0
        %2197 = vmatpush1.msra.mxu0 0.0
        %2198 = vmatprep.subr.mxu0 0.0
        %2199 = vmatpush1.msra.mxu0 0.0
        %2200 = vmatprep.subr.mxu0 0.0
        %2201 = vmatpush1.msra.mxu0 %v1712
        %2202 = vmatprep.subr.mxu0 0.0
        %2203 = vmatpush1.msra.mxu0 %v1711
        %2204 = vmatprep.subr.mxu0 0.0
        %2205 = vmatpush1.msra.mxu0 %v1710
        %2206 = vmatprep.subr.mxu0 0.0
        %2207 = vmatpush1.msra.mxu0 %v1709
        %2208 = vmatprep.subr.mxu0 0.0
        %2209 = vmatpush1.msra.mxu0 %v1708
        %2210 = vmatprep.subr.mxu0 0.0
        %2211 = vmatpush1.msra.mxu0 %v1707
        %2212 = vmatprep.subr.mxu0 0.0
        %2213 = vmatpush1.msra.mxu0 %v1706
        %2214 = vmatprep.subr.mxu0 0.0
        %2215 = vmatpush1.msra.mxu0 %v1705
        %2216 = vmatprep.subr.mxu0 0.0
        %2217 = vmatpush2.msra.mxu0 0.0
        %2218 = vmatprep.subr.mxu0 0.0
        %2219 = vmatpush2.msra.mxu0 0.0
        %2220 = vmatprep.subr.mxu0 0.0
        %2221 = vmatpush2.msra.mxu0 0.0
        %2222 = vmatprep.subr.mxu0 0.0
        %2223 = vmatpush2.msra.mxu0 0.0
        %2224 = vmatprep.subr.mxu0 0.0
        %2225 = vmatpush2.msra.mxu0 0.0
        %2226 = vmatprep.subr.mxu0 0.0
        %2227 = vmatpush2.msra.mxu0 0.0
        %2228 = vmatprep.subr.mxu0 0.0
        %2229 = vmatpush2.msra.mxu0 0.0
        %2230 = vmatprep.subr.mxu0 0.0
        %2231 = vmatpush2.msra.mxu0 0.0
        %2232 = vmatprep.subr.mxu0 0.0
        %2233 = vmatpush2.msra.mxu0 0.0
        %2234 = vmatprep.subr.mxu0 0.0
        %2235 = vmatpush2.msra.mxu0 0.0
        %2236 = vmatprep.subr.mxu0 0.0
        %2237 = vmatpush2.msra.mxu0 0.0
        %2238 = vmatprep.subr.mxu0 0.0
        %2239 = vmatpush2.msra.mxu0 0.0
        %2240 = vmatprep.subr.mxu0 0.0
        %2241 = vmatpush2.msra.mxu0 0.0
        %2242 = vmatprep.subr.mxu0 0.0
        %2243 = vmatpush2.msra.mxu0 0.0
        %2244 = vmatprep.subr.mxu0 0.0
        %2245 = vmatpush2.msra.mxu0 0.0
        %2246 = vmatprep.subr.mxu0 0.0
        %2247 = vmatpush2.msra.mxu0 0.0
        %2248 = vmatprep.mubr.f32.mxu0 0.0
        %2249 = vmatmul.mubr.f32.gmra.mxu0 %v2182
        %v2250 = vpop.f32.mrf.mxu0
        %v2251 = vadd.f32 0.0, %v2250
        %v2252 = vpop.f32.mrf.mxu0
        %2253 = vdwg.mxu0
        %s2254 = scalar_lea.vmem %s4, 48
        %v2255 = vld [vmem:[%s2254] sm:$0xff]
        %v2256 = vld [vmem:[%s2254 + $0x8] sm:$0xff]
        %v2258 = vsel %vm1015, %v2251, 0
        %2260 = vmatprep.subr.mxu0 0.0
        %2261 = vmatpush1.msra.mxu0 0.0
        %2262 = vmatprep.subr.mxu0 0.0
        %2263 = vmatpush1.msra.mxu0 0.0
        %2264 = vmatprep.subr.mxu0 0.0
        %2265 = vmatpush1.msra.mxu0 0.0
        %2266 = vmatprep.subr.mxu0 0.0
        %2267 = vmatpush1.msra.mxu0 0.0
        %2268 = vmatprep.subr.mxu0 0.0
        %2269 = vmatpush1.msra.mxu0 0.0
        %2270 = vmatprep.subr.mxu0 0.0
        %2271 = vmatpush1.msra.mxu0 0.0
        %2272 = vmatprep.subr.mxu0 0.0
        %2273 = vmatpush1.msra.mxu0 0.0
        %2274 = vmatprep.subr.mxu0 0.0
        %2275 = vmatpush1.msra.mxu0 0.0
        %2276 = vmatprep.subr.mxu0 0.0
        %2277 = vmatpush1.msra.mxu0 0.0
        %2278 = vmatprep.subr.mxu0 0.0
        %2279 = vmatpush1.msra.mxu0 0.0
        %2280 = vmatprep.subr.mxu0 0.0
        %2281 = vmatpush1.msra.mxu0 0.0
        %2282 = vmatprep.subr.mxu0 0.0
        %2283 = vmatpush1.msra.mxu0 0.0
        %2284 = vmatprep.subr.mxu0 0.0
        %2285 = vmatpush1.msra.mxu0 0.0
        %2286 = vmatprep.subr.mxu0 0.0
        %2287 = vmatpush1.msra.mxu0 0.0
        %2288 = vmatprep.subr.mxu0 0.0
        %2289 = vmatpush1.msra.mxu0 %v2256
        %2290 = vmatprep.subr.mxu0 0.0
        %2291 = vmatpush1.msra.mxu0 %v2255
        %2292 = vmatprep.subr.mxu0 0.0
        %2293 = vmatpush2.msra.mxu0 0.0
        %2294 = vmatprep.subr.mxu0 0.0
        %2295 = vmatpush2.msra.mxu0 0.0
        %2296 = vmatprep.subr.mxu0 0.0
        %2297 = vmatpush2.msra.mxu0 0.0
        %2298 = vmatprep.subr.mxu0 0.0
        %2299 = vmatpush2.msra.mxu0 0.0
        %2300 = vmatprep.subr.mxu0 0.0
        %2301 = vmatpush2.msra.mxu0 0.0
        %2302 = vmatprep.subr.mxu0 0.0
        %2303 = vmatpush2.msra.mxu0 0.0
        %2304 = vmatprep.subr.mxu0 0.0
        %2305 = vmatpush2.msra.mxu0 0.0
        %2306 = vmatprep.subr.mxu0 0.0
        %2307 = vmatpush2.msra.mxu0 0.0
        %2308 = vmatprep.subr.mxu0 0.0
        %2309 = vmatpush2.msra.mxu0 0.0
        %2310 = vmatprep.subr.mxu0 0.0
        %2311 = vmatpush2.msra.mxu0 0.0
        %2312 = vmatprep.subr.mxu0 0.0
        %2313 = vmatpush2.msra.mxu0 0.0
        %2314 = vmatprep.subr.mxu0 0.0
        %2315 = vmatpush2.msra.mxu0 0.0
        %2316 = vmatprep.subr.mxu0 0.0
        %2317 = vmatpush2.msra.mxu0 0.0
        %2318 = vmatprep.subr.mxu0 0.0
        %2319 = vmatpush2.msra.mxu0 0.0
        %2320 = vmatprep.subr.mxu0 0.0
        %2321 = vmatpush2.msra.mxu0 0.0
        %2322 = vmatprep.subr.mxu0 0.0
        %2323 = vmatpush2.msra.mxu0 0.0
        %2324 = vmatprep.mubr.f32.mxu0 0.0
        %2325 = vmatmul.mubr.f32.gmra.mxu0 %v2258
        %v2326 = vpop.f32.mrf.mxu0
        %v2327 = vadd.f32 0.0, %v2326
        %v2328 = vpop.f32.mrf.mxu0
        %2329 = vdwg.mxu0
        %v2330 = vadd.f32 %v2176, %v2327
        %v2331 = vadd.s32 %v1717, 4
        %vm2332 = vcmp.eq.s32.totalorder %v1714, %v2331
        %v2333 = vsel %vm2332, 1, 0
        %v2334 = vcvt.s32.f32 %v2333
        %v2336 = vsel %vm1721, %v2334, 0
        %2338 = vmatprep.subr.mxu0 0.0
        %2339 = vmatpush1.msra.mxu0 0.0
        %2340 = vmatprep.subr.mxu0 0.0
        %2341 = vmatpush1.msra.mxu0 0.0
        %2342 = vmatprep.subr.mxu0 0.0
        %2343 = vmatpush1.msra.mxu0 0.0
        %2344 = vmatprep.subr.mxu0 0.0
        %2345 = vmatpush1.msra.mxu0 0.0
        %2346 = vmatprep.subr.mxu0 0.0
        %2347 = vmatpush1.msra.mxu0 0.0
        %2348 = vmatprep.subr.mxu0 0.0
        %2349 = vmatpush1.msra.mxu0 0.0
        %2350 = vmatprep.subr.mxu0 0.0
        %2351 = vmatpush1.msra.mxu0 0.0
        %2352 = vmatprep.subr.mxu0 0.0
        %2353 = vmatpush1.msra.mxu0 0.0
        %2354 = vmatprep.subr.mxu0 0.0
        %2355 = vmatpush1.msra.mxu0 %v1712
        %2356 = vmatprep.subr.mxu0 0.0
        %2357 = vmatpush1.msra.mxu0 %v1711
        %2358 = vmatprep.subr.mxu0 0.0
        %2359 = vmatpush1.msra.mxu0 %v1710
        %2360 = vmatprep.subr.mxu0 0.0
        %2361 = vmatpush1.msra.mxu0 %v1709
        %2362 = vmatprep.subr.mxu0 0.0
        %2363 = vmatpush1.msra.mxu0 %v1708
        %2364 = vmatprep.subr.mxu0 0.0
        %2365 = vmatpush1.msra.mxu0 %v1707
        %2366 = vmatprep.subr.mxu0 0.0
        %2367 = vmatpush1.msra.mxu0 %v1706
        %2368 = vmatprep.subr.mxu0 0.0
        %2369 = vmatpush1.msra.mxu0 %v1705
        %2370 = vmatprep.subr.mxu0 0.0
        %2371 = vmatpush2.msra.mxu0 0.0
        %2372 = vmatprep.subr.mxu0 0.0
        %2373 = vmatpush2.msra.mxu0 0.0
        %2374 = vmatprep.subr.mxu0 0.0
        %2375 = vmatpush2.msra.mxu0 0.0
        %2376 = vmatprep.subr.mxu0 0.0
        %2377 = vmatpush2.msra.mxu0 0.0
        %2378 = vmatprep.subr.mxu0 0.0
        %2379 = vmatpush2.msra.mxu0 0.0
        %2380 = vmatprep.subr.mxu0 0.0
        %2381 = vmatpush2.msra.mxu0 0.0
        %2382 = vmatprep.subr.mxu0 0.0
        %2383 = vmatpush2.msra.mxu0 0.0
        %2384 = vmatprep.subr.mxu0 0.0
        %2385 = vmatpush2.msra.mxu0 0.0
        %2386 = vmatprep.subr.mxu0 0.0
        %2387 = vmatpush2.msra.mxu0 0.0
        %2388 = vmatprep.subr.mxu0 0.0
        %2389 = vmatpush2.msra.mxu0 0.0
        %2390 = vmatprep.subr.mxu0 0.0
        %2391 = vmatpush2.msra.mxu0 0.0
        %2392 = vmatprep.subr.mxu0 0.0
        %2393 = vmatpush2.msra.mxu0 0.0
        %2394 = vmatprep.subr.mxu0 0.0
        %2395 = vmatpush2.msra.mxu0 0.0
        %2396 = vmatprep.subr.mxu0 0.0
        %2397 = vmatpush2.msra.mxu0 0.0
        %2398 = vmatprep.subr.mxu0 0.0
        %2399 = vmatpush2.msra.mxu0 0.0
        %2400 = vmatprep.subr.mxu0 0.0
        %2401 = vmatpush2.msra.mxu0 0.0
        %2402 = vmatprep.mubr.f32.mxu0 0.0
        %2403 = vmatmul.mubr.f32.gmra.mxu0 %v2336
        %v2404 = vpop.f32.mrf.mxu0
        %v2405 = vadd.f32 0.0, %v2404
        %v2406 = vpop.f32.mrf.mxu0
        %2407 = vdwg.mxu0
        %s2408 = scalar_lea.vmem %s4, 64
        %v2409 = vld [vmem:[%s2408] sm:$0xff]
        %v2410 = vld [vmem:[%s2408 + $0x8] sm:$0xff]
        %v2412 = vsel %vm1015, %v2405, 0
        %2414 = vmatprep.subr.mxu0 0.0
        %2415 = vmatpush1.msra.mxu0 0.0
        %2416 = vmatprep.subr.mxu0 0.0
        %2417 = vmatpush1.msra.mxu0 0.0
        %2418 = vmatprep.subr.mxu0 0.0
        %2419 = vmatpush1.msra.mxu0 0.0
        %2420 = vmatprep.subr.mxu0 0.0
        %2421 = vmatpush1.msra.mxu0 0.0
        %2422 = vmatprep.subr.mxu0 0.0
        %2423 = vmatpush1.msra.mxu0 0.0
        %2424 = vmatprep.subr.mxu0 0.0
        %2425 = vmatpush1.msra.mxu0 0.0
        %2426 = vmatprep.subr.mxu0 0.0
        %2427 = vmatpush1.msra.mxu0 0.0
        %2428 = vmatprep.subr.mxu0 0.0
        %2429 = vmatpush1.msra.mxu0 0.0
        %2430 = vmatprep.subr.mxu0 0.0
        %2431 = vmatpush1.msra.mxu0 0.0
        %2432 = vmatprep.subr.mxu0 0.0
        %2433 = vmatpush1.msra.mxu0 0.0
        %2434 = vmatprep.subr.mxu0 0.0
        %2435 = vmatpush1.msra.mxu0 0.0
        %2436 = vmatprep.subr.mxu0 0.0
        %2437 = vmatpush1.msra.mxu0 0.0
        %2438 = vmatprep.subr.mxu0 0.0
        %2439 = vmatpush1.msra.mxu0 0.0
        %2440 = vmatprep.subr.mxu0 0.0
        %2441 = vmatpush1.msra.mxu0 0.0
        %2442 = vmatprep.subr.mxu0 0.0
        %2443 = vmatpush1.msra.mxu0 %v2410
        %2444 = vmatprep.subr.mxu0 0.0
        %2445 = vmatpush1.msra.mxu0 %v2409
        %2446 = vmatprep.subr.mxu0 0.0
        %2447 = vmatpush2.msra.mxu0 0.0
        %2448 = vmatprep.subr.mxu0 0.0
        %2449 = vmatpush2.msra.mxu0 0.0
        %2450 = vmatprep.subr.mxu0 0.0
        %2451 = vmatpush2.msra.mxu0 0.0
        %2452 = vmatprep.subr.mxu0 0.0
        %2453 = vmatpush2.msra.mxu0 0.0
        %2454 = vmatprep.subr.mxu0 0.0
        %2455 = vmatpush2.msra.mxu0 0.0
        %2456 = vmatprep.subr.mxu0 0.0
        %2457 = vmatpush2.msra.mxu0 0.0
        %2458 = vmatprep.subr.mxu0 0.0
        %2459 = vmatpush2.msra.mxu0 0.0
        %2460 = vmatprep.subr.mxu0 0.0
        %2461 = vmatpush2.msra.mxu0 0.0
        %2462 = vmatprep.subr.mxu0 0.0
        %2463 = vmatpush2.msra.mxu0 0.0
        %2464 = vmatprep.subr.mxu0 0.0
        %2465 = vmatpush2.msra.mxu0 0.0
        %2466 = vmatprep.subr.mxu0 0.0
        %2467 = vmatpush2.msra.mxu0 0.0
        %2468 = vmatprep.subr.mxu0 0.0
        %2469 = vmatpush2.msra.mxu0 0.0
        %2470 = vmatprep.subr.mxu0 0.0
        %2471 = vmatpush2.msra.mxu0 0.0
        %2472 = vmatprep.subr.mxu0 0.0
        %2473 = vmatpush2.msra.mxu0 0.0
        %2474 = vmatprep.subr.mxu0 0.0
        %2475 = vmatpush2.msra.mxu0 0.0
        %2476 = vmatprep.subr.mxu0 0.0
        %2477 = vmatpush2.msra.mxu0 0.0
        %2478 = vmatprep.mubr.f32.mxu0 0.0
        %2479 = vmatmul.mubr.f32.gmra.mxu0 %v2412
        %v2480 = vpop.f32.mrf.mxu0
        %v2481 = vadd.f32 0.0, %v2480
        %v2482 = vpop.f32.mrf.mxu0
        %2483 = vdwg.mxu0
        %v2484 = vadd.f32 %v2330, %v2481
        %v2485 = vadd.s32 %v1717, 5
        %vm2486 = vcmp.eq.s32.totalorder %v1714, %v2485
        %v2487 = vsel %vm2486, 1, 0
        %v2488 = vcvt.s32.f32 %v2487
        %v2490 = vsel %vm1721, %v2488, 0
        %2492 = vmatprep.subr.mxu0 0.0
        %2493 = vmatpush1.msra.mxu0 0.0
        %2494 = vmatprep.subr.mxu0 0.0
        %2495 = vmatpush1.msra.mxu0 0.0
        %2496 = vmatprep.subr.mxu0 0.0
        %2497 = vmatpush1.msra.mxu0 0.0
        %2498 = vmatprep.subr.mxu0 0.0
        %2499 = vmatpush1.msra.mxu0 0.0
        %2500 = vmatprep.subr.mxu0 0.0
        %2501 = vmatpush1.msra.mxu0 0.0
        %2502 = vmatprep.subr.mxu0 0.0
        %2503 = vmatpush1.msra.mxu0 0.0
        %2504 = vmatprep.subr.mxu0 0.0
        %2505 = vmatpush1.msra.mxu0 0.0
        %2506 = vmatprep.subr.mxu0 0.0
        %2507 = vmatpush1.msra.mxu0 0.0
        %2508 = vmatprep.subr.mxu0 0.0
        %2509 = vmatpush1.msra.mxu0 %v1712
        %2510 = vmatprep.subr.mxu0 0.0
        %2511 = vmatpush1.msra.mxu0 %v1711
        %2512 = vmatprep.subr.mxu0 0.0
        %2513 = vmatpush1.msra.mxu0 %v1710
        %2514 = vmatprep.subr.mxu0 0.0
        %2515 = vmatpush1.msra.mxu0 %v1709
        %2516 = vmatprep.subr.mxu0 0.0
        %2517 = vmatpush1.msra.mxu0 %v1708
        %2518 = vmatprep.subr.mxu0 0.0
        %2519 = vmatpush1.msra.mxu0 %v1707
        %2520 = vmatprep.subr.mxu0 0.0
        %2521 = vmatpush1.msra.mxu0 %v1706
        %2522 = vmatprep.subr.mxu0 0.0
        %2523 = vmatpush1.msra.mxu0 %v1705
        %2524 = vmatprep.subr.mxu0 0.0
        %2525 = vmatpush2.msra.mxu0 0.0
        %2526 = vmatprep.subr.mxu0 0.0
        %2527 = vmatpush2.msra.mxu0 0.0
        %2528 = vmatprep.subr.mxu0 0.0
        %2529 = vmatpush2.msra.mxu0 0.0
        %2530 = vmatprep.subr.mxu0 0.0
        %2531 = vmatpush2.msra.mxu0 0.0
        %2532 = vmatprep.subr.mxu0 0.0
        %2533 = vmatpush2.msra.mxu0 0.0
        %2534 = vmatprep.subr.mxu0 0.0
        %2535 = vmatpush2.msra.mxu0 0.0
        %2536 = vmatprep.subr.mxu0 0.0
        %2537 = vmatpush2.msra.mxu0 0.0
        %2538 = vmatprep.subr.mxu0 0.0
        %2539 = vmatpush2.msra.mxu0 0.0
        %2540 = vmatprep.subr.mxu0 0.0
        %2541 = vmatpush2.msra.mxu0 0.0
        %2542 = vmatprep.subr.mxu0 0.0
        %2543 = vmatpush2.msra.mxu0 0.0
        %2544 = vmatprep.subr.mxu0 0.0
        %2545 = vmatpush2.msra.mxu0 0.0
        %2546 = vmatprep.subr.mxu0 0.0
        %2547 = vmatpush2.msra.mxu0 0.0
        %2548 = vmatprep.subr.mxu0 0.0
        %2549 = vmatpush2.msra.mxu0 0.0
        %2550 = vmatprep.subr.mxu0 0.0
        %2551 = vmatpush2.msra.mxu0 0.0
        %2552 = vmatprep.subr.mxu0 0.0
        %2553 = vmatpush2.msra.mxu0 0.0
        %2554 = vmatprep.subr.mxu0 0.0
        %2555 = vmatpush2.msra.mxu0 0.0
        %2556 = vmatprep.mubr.f32.mxu0 0.0
        %2557 = vmatmul.mubr.f32.gmra.mxu0 %v2490
        %v2558 = vpop.f32.mrf.mxu0
        %v2559 = vadd.f32 0.0, %v2558
        %v2560 = vpop.f32.mrf.mxu0
        %2561 = vdwg.mxu0
        %s2562 = scalar_lea.vmem %s4, 80
        %v2563 = vld [vmem:[%s2562] sm:$0xff]
        %v2564 = vld [vmem:[%s2562 + $0x8] sm:$0xff]
        %v2566 = vsel %vm1015, %v2559, 0
        %2568 = vmatprep.subr.mxu0 0.0
        %2569 = vmatpush1.msra.mxu0 0.0
        %2570 = vmatprep.subr.mxu0 0.0
        %2571 = vmatpush1.msra.mxu0 0.0
        %2572 = vmatprep.subr.mxu0 0.0
        %2573 = vmatpush1.msra.mxu0 0.0
        %2574 = vmatprep.subr.mxu0 0.0
        %2575 = vmatpush1.msra.mxu0 0.0
        %2576 = vmatprep.subr.mxu0 0.0
        %2577 = vmatpush1.msra.mxu0 0.0
        %2578 = vmatprep.subr.mxu0 0.0
        %2579 = vmatpush1.msra.mxu0 0.0
        %2580 = vmatprep.subr.mxu0 0.0
        %2581 = vmatpush1.msra.mxu0 0.0
        %2582 = vmatprep.subr.mxu0 0.0
        %2583 = vmatpush1.msra.mxu0 0.0
        %2584 = vmatprep.subr.mxu0 0.0
        %2585 = vmatpush1.msra.mxu0 0.0
        %2586 = vmatprep.subr.mxu0 0.0
        %2587 = vmatpush1.msra.mxu0 0.0
        %2588 = vmatprep.subr.mxu0 0.0
        %2589 = vmatpush1.msra.mxu0 0.0
        %2590 = vmatprep.subr.mxu0 0.0
        %2591 = vmatpush1.msra.mxu0 0.0
        %2592 = vmatprep.subr.mxu0 0.0
        %2593 = vmatpush1.msra.mxu0 0.0
        %2594 = vmatprep.subr.mxu0 0.0
        %2595 = vmatpush1.msra.mxu0 0.0
        %2596 = vmatprep.subr.mxu0 0.0
        %2597 = vmatpush1.msra.mxu0 %v2564
        %2598 = vmatprep.subr.mxu0 0.0
        %2599 = vmatpush1.msra.mxu0 %v2563
        %2600 = vmatprep.subr.mxu0 0.0
        %2601 = vmatpush2.msra.mxu0 0.0
        %2602 = vmatprep.subr.mxu0 0.0
        %2603 = vmatpush2.msra.mxu0 0.0
        %2604 = vmatprep.subr.mxu0 0.0
        %2605 = vmatpush2.msra.mxu0 0.0
        %2606 = vmatprep.subr.mxu0 0.0
        %2607 = vmatpush2.msra.mxu0 0.0
        %2608 = vmatprep.subr.mxu0 0.0
        %2609 = vmatpush2.msra.mxu0 0.0
        %2610 = vmatprep.subr.mxu0 0.0
        %2611 = vmatpush2.msra.mxu0 0.0
        %2612 = vmatprep.subr.mxu0 0.0
        %2613 = vmatpush2.msra.mxu0 0.0
        %2614 = vmatprep.subr.mxu0 0.0
        %2615 = vmatpush2.msra.mxu0 0.0
        %2616 = vmatprep.subr.mxu0 0.0
        %2617 = vmatpush2.msra.mxu0 0.0
        %2618 = vmatprep.subr.mxu0 0.0
        %2619 = vmatpush2.msra.mxu0 0.0
        %2620 = vmatprep.subr.mxu0 0.0
        %2621 = vmatpush2.msra.mxu0 0.0
        %2622 = vmatprep.subr.mxu0 0.0
        %2623 = vmatpush2.msra.mxu0 0.0
        %2624 = vmatprep.subr.mxu0 0.0
        %2625 = vmatpush2.msra.mxu0 0.0
        %2626 = vmatprep.subr.mxu0 0.0
        %2627 = vmatpush2.msra.mxu0 0.0
        %2628 = vmatprep.subr.mxu0 0.0
        %2629 = vmatpush2.msra.mxu0 0.0
        %2630 = vmatprep.subr.mxu0 0.0
        %2631 = vmatpush2.msra.mxu0 0.0
        %2632 = vmatprep.mubr.f32.mxu0 0.0
        %2633 = vmatmul.mubr.f32.gmra.mxu0 %v2566
        %v2634 = vpop.f32.mrf.mxu0
        %v2635 = vadd.f32 0.0, %v2634
        %v2636 = vpop.f32.mrf.mxu0
        %2637 = vdwg.mxu0
        %v2638 = vadd.f32 %v2484, %v2635
        %v2639 = vadd.s32 %v1717, 6
        %vm2640 = vcmp.eq.s32.totalorder %v1714, %v2639
        %v2641 = vsel %vm2640, 1, 0
        %v2642 = vcvt.s32.f32 %v2641
        %v2644 = vsel %vm1721, %v2642, 0
        %2646 = vmatprep.subr.mxu0 0.0
        %2647 = vmatpush1.msra.mxu0 0.0
        %2648 = vmatprep.subr.mxu0 0.0
        %2649 = vmatpush1.msra.mxu0 0.0
        %2650 = vmatprep.subr.mxu0 0.0
        %2651 = vmatpush1.msra.mxu0 0.0
        %2652 = vmatprep.subr.mxu0 0.0
        %2653 = vmatpush1.msra.mxu0 0.0
        %2654 = vmatprep.subr.mxu0 0.0
        %2655 = vmatpush1.msra.mxu0 0.0
        %2656 = vmatprep.subr.mxu0 0.0
        %2657 = vmatpush1.msra.mxu0 0.0
        %2658 = vmatprep.subr.mxu0 0.0
        %2659 = vmatpush1.msra.mxu0 0.0
        %2660 = vmatprep.subr.mxu0 0.0
        %2661 = vmatpush1.msra.mxu0 0.0
        %2662 = vmatprep.subr.mxu0 0.0
        %2663 = vmatpush1.msra.mxu0 %v1712
        %2664 = vmatprep.subr.mxu0 0.0
        %2665 = vmatpush1.msra.mxu0 %v1711
        %2666 = vmatprep.subr.mxu0 0.0
        %2667 = vmatpush1.msra.mxu0 %v1710
        %2668 = vmatprep.subr.mxu0 0.0
        %2669 = vmatpush1.msra.mxu0 %v1709
        %2670 = vmatprep.subr.mxu0 0.0
        %2671 = vmatpush1.msra.mxu0 %v1708
        %2672 = vmatprep.subr.mxu0 0.0
        %2673 = vmatpush1.msra.mxu0 %v1707
        %2674 = vmatprep.subr.mxu0 0.0
        %2675 = vmatpush1.msra.mxu0 %v1706
        %2676 = vmatprep.subr.mxu0 0.0
        %2677 = vmatpush1.msra.mxu0 %v1705
        %2678 = vmatprep.subr.mxu0 0.0
        %2679 = vmatpush2.msra.mxu0 0.0
        %2680 = vmatprep.subr.mxu0 0.0
        %2681 = vmatpush2.msra.mxu0 0.0
        %2682 = vmatprep.subr.mxu0 0.0
        %2683 = vmatpush2.msra.mxu0 0.0
        %2684 = vmatprep.subr.mxu0 0.0
        %2685 = vmatpush2.msra.mxu0 0.0
        %2686 = vmatprep.subr.mxu0 0.0
        %2687 = vmatpush2.msra.mxu0 0.0
        %2688 = vmatprep.subr.mxu0 0.0
        %2689 = vmatpush2.msra.mxu0 0.0
        %2690 = vmatprep.subr.mxu0 0.0
        %2691 = vmatpush2.msra.mxu0 0.0
        %2692 = vmatprep.subr.mxu0 0.0
        %2693 = vmatpush2.msra.mxu0 0.0
        %2694 = vmatprep.subr.mxu0 0.0
        %2695 = vmatpush2.msra.mxu0 0.0
        %2696 = vmatprep.subr.mxu0 0.0
        %2697 = vmatpush2.msra.mxu0 0.0
        %2698 = vmatprep.subr.mxu0 0.0
        %2699 = vmatpush2.msra.mxu0 0.0
        %2700 = vmatprep.subr.mxu0 0.0
        %2701 = vmatpush2.msra.mxu0 0.0
        %2702 = vmatprep.subr.mxu0 0.0
        %2703 = vmatpush2.msra.mxu0 0.0
        %2704 = vmatprep.subr.mxu0 0.0
        %2705 = vmatpush2.msra.mxu0 0.0
        %2706 = vmatprep.subr.mxu0 0.0
        %2707 = vmatpush2.msra.mxu0 0.0
        %2708 = vmatprep.subr.mxu0 0.0
        %2709 = vmatpush2.msra.mxu0 0.0
        %2710 = vmatprep.mubr.f32.mxu0 0.0
        %2711 = vmatmul.mubr.f32.gmra.mxu0 %v2644
        %v2712 = vpop.f32.mrf.mxu0
        %v2713 = vadd.f32 0.0, %v2712
        %v2714 = vpop.f32.mrf.mxu0
        %2715 = vdwg.mxu0
        %s2716 = scalar_lea.vmem %s4, 96
        %v2717 = vld [vmem:[%s2716] sm:$0xff]
        %v2718 = vld [vmem:[%s2716 + $0x8] sm:$0xff]
        %v2720 = vsel %vm1015, %v2713, 0
        %2722 = vmatprep.subr.mxu0 0.0
        %2723 = vmatpush1.msra.mxu0 0.0
        %2724 = vmatprep.subr.mxu0 0.0
        %2725 = vmatpush1.msra.mxu0 0.0
        %2726 = vmatprep.subr.mxu0 0.0
        %2727 = vmatpush1.msra.mxu0 0.0
        %2728 = vmatprep.subr.mxu0 0.0
        %2729 = vmatpush1.msra.mxu0 0.0
        %2730 = vmatprep.subr.mxu0 0.0
        %2731 = vmatpush1.msra.mxu0 0.0
        %2732 = vmatprep.subr.mxu0 0.0
        %2733 = vmatpush1.msra.mxu0 0.0
        %2734 = vmatprep.subr.mxu0 0.0
        %2735 = vmatpush1.msra.mxu0 0.0
        %2736 = vmatprep.subr.mxu0 0.0
        %2737 = vmatpush1.msra.mxu0 0.0
        %2738 = vmatprep.subr.mxu0 0.0
        %2739 = vmatpush1.msra.mxu0 0.0
        %2740 = vmatprep.subr.mxu0 0.0
        %2741 = vmatpush1.msra.mxu0 0.0
        %2742 = vmatprep.subr.mxu0 0.0
        %2743 = vmatpush1.msra.mxu0 0.0
        %2744 = vmatprep.subr.mxu0 0.0
        %2745 = vmatpush1.msra.mxu0 0.0
        %2746 = vmatprep.subr.mxu0 0.0
        %2747 = vmatpush1.msra.mxu0 0.0
        %2748 = vmatprep.subr.mxu0 0.0
        %2749 = vmatpush1.msra.mxu0 0.0
        %2750 = vmatprep.subr.mxu0 0.0
        %2751 = vmatpush1.msra.mxu0 %v2718
        %2752 = vmatprep.subr.mxu0 0.0
        %2753 = vmatpush1.msra.mxu0 %v2717
        %2754 = vmatprep.subr.mxu0 0.0
        %2755 = vmatpush2.msra.mxu0 0.0
        %2756 = vmatprep.subr.mxu0 0.0
        %2757 = vmatpush2.msra.mxu0 0.0
        %2758 = vmatprep.subr.mxu0 0.0
        %2759 = vmatpush2.msra.mxu0 0.0
        %2760 = vmatprep.subr.mxu0 0.0
        %2761 = vmatpush2.msra.mxu0 0.0
        %2762 = vmatprep.subr.mxu0 0.0
        %2763 = vmatpush2.msra.mxu0 0.0
        %2764 = vmatprep.subr.mxu0 0.0
        %2765 = vmatpush2.msra.mxu0 0.0
        %2766 = vmatprep.subr.mxu0 0.0
        %2767 = vmatpush2.msra.mxu0 0.0
        %2768 = vmatprep.subr.mxu0 0.0
        %2769 = vmatpush2.msra.mxu0 0.0
        %2770 = vmatprep.subr.mxu0 0.0
        %2771 = vmatpush2.msra.mxu0 0.0
        %2772 = vmatprep.subr.mxu0 0.0
        %2773 = vmatpush2.msra.mxu0 0.0
        %2774 = vmatprep.subr.mxu0 0.0
        %2775 = vmatpush2.msra.mxu0 0.0
        %2776 = vmatprep.subr.mxu0 0.0
        %2777 = vmatpush2.msra.mxu0 0.0
        %2778 = vmatprep.subr.mxu0 0.0
        %2779 = vmatpush2.msra.mxu0 0.0
        %2780 = vmatprep.subr.mxu0 0.0
        %2781 = vmatpush2.msra.mxu0 0.0
        %2782 = vmatprep.subr.mxu0 0.0
        %2783 = vmatpush2.msra.mxu0 0.0
        %2784 = vmatprep.subr.mxu0 0.0
        %2785 = vmatpush2.msra.mxu0 0.0
        %2786 = vmatprep.mubr.f32.mxu0 0.0
        %2787 = vmatmul.mubr.f32.gmra.mxu0 %v2720
        %v2788 = vpop.f32.mrf.mxu0
        %v2789 = vadd.f32 0.0, %v2788
        %v2790 = vpop.f32.mrf.mxu0
        %2791 = vdwg.mxu0
        %v2792 = vadd.f32 %v2638, %v2789
        %v2793 = vadd.s32 %v1717, 7
        %vm2794 = vcmp.eq.s32.totalorder %v1714, %v2793
        %v2795 = vsel %vm2794, 1, 0
        %v2796 = vcvt.s32.f32 %v2795
        %v2798 = vsel %vm1721, %v2796, 0
        %2800 = vmatprep.subr.mxu0 0.0
        %2801 = vmatpush1.msra.mxu0 0.0
        %2802 = vmatprep.subr.mxu0 0.0
        %2803 = vmatpush1.msra.mxu0 0.0
        %2804 = vmatprep.subr.mxu0 0.0
        %2805 = vmatpush1.msra.mxu0 0.0
        %2806 = vmatprep.subr.mxu0 0.0
        %2807 = vmatpush1.msra.mxu0 0.0
        %2808 = vmatprep.subr.mxu0 0.0
        %2809 = vmatpush1.msra.mxu0 0.0
        %2810 = vmatprep.subr.mxu0 0.0
        %2811 = vmatpush1.msra.mxu0 0.0
        %2812 = vmatprep.subr.mxu0 0.0
        %2813 = vmatpush1.msra.mxu0 0.0
        %2814 = vmatprep.subr.mxu0 0.0
        %2815 = vmatpush1.msra.mxu0 0.0
        %2816 = vmatprep.subr.mxu0 0.0
        %2817 = vmatpush1.msra.mxu0 %v1712
        %2818 = vmatprep.subr.mxu0 0.0
        %2819 = vmatpush1.msra.mxu0 %v1711
        %2820 = vmatprep.subr.mxu0 0.0
        %2821 = vmatpush1.msra.mxu0 %v1710
        %2822 = vmatprep.subr.mxu0 0.0
        %2823 = vmatpush1.msra.mxu0 %v1709
        %2824 = vmatprep.subr.mxu0 0.0
        %2825 = vmatpush1.msra.mxu0 %v1708
        %2826 = vmatprep.subr.mxu0 0.0
        %2827 = vmatpush1.msra.mxu0 %v1707
        %2828 = vmatprep.subr.mxu0 0.0
        %2829 = vmatpush1.msra.mxu0 %v1706
        %2830 = vmatprep.subr.mxu0 0.0
        %2831 = vmatpush1.msra.mxu0 %v1705
        %2832 = vmatprep.subr.mxu0 0.0
        %2833 = vmatpush2.msra.mxu0 0.0
        %2834 = vmatprep.subr.mxu0 0.0
        %2835 = vmatpush2.msra.mxu0 0.0
        %2836 = vmatprep.subr.mxu0 0.0
        %2837 = vmatpush2.msra.mxu0 0.0
        %2838 = vmatprep.subr.mxu0 0.0
        %2839 = vmatpush2.msra.mxu0 0.0
        %2840 = vmatprep.subr.mxu0 0.0
        %2841 = vmatpush2.msra.mxu0 0.0
        %2842 = vmatprep.subr.mxu0 0.0
        %2843 = vmatpush2.msra.mxu0 0.0
        %2844 = vmatprep.subr.mxu0 0.0
        %2845 = vmatpush2.msra.mxu0 0.0
        %2846 = vmatprep.subr.mxu0 0.0
        %2847 = vmatpush2.msra.mxu0 0.0
        %2848 = vmatprep.subr.mxu0 0.0
        %2849 = vmatpush2.msra.mxu0 0.0
        %2850 = vmatprep.subr.mxu0 0.0
        %2851 = vmatpush2.msra.mxu0 0.0
        %2852 = vmatprep.subr.mxu0 0.0
        %2853 = vmatpush2.msra.mxu0 0.0
        %2854 = vmatprep.subr.mxu0 0.0
        %2855 = vmatpush2.msra.mxu0 0.0
        %2856 = vmatprep.subr.mxu0 0.0
        %2857 = vmatpush2.msra.mxu0 0.0
        %2858 = vmatprep.subr.mxu0 0.0
        %2859 = vmatpush2.msra.mxu0 0.0
        %2860 = vmatprep.subr.mxu0 0.0
        %2861 = vmatpush2.msra.mxu0 0.0
        %2862 = vmatprep.subr.mxu0 0.0
        %2863 = vmatpush2.msra.mxu0 0.0
        %2864 = vmatprep.mubr.f32.mxu0 0.0
        %2865 = vmatmul.mubr.f32.gmra.mxu0 %v2798
        %v2866 = vpop.f32.mrf.mxu0
        %v2867 = vadd.f32 0.0, %v2866
        %v2868 = vpop.f32.mrf.mxu0
        %2869 = vdwg.mxu0
        %s2870 = scalar_lea.vmem %s4, 112
        %v2871 = vld [vmem:[%s2870] sm:$0xff]
        %v2872 = vld [vmem:[%s2870 + $0x8] sm:$0xff]
        %v2874 = vsel %vm1015, %v2867, 0
        %2876 = vmatprep.subr.mxu0 0.0
        %2877 = vmatpush1.msra.mxu0 0.0
        %2878 = vmatprep.subr.mxu0 0.0
        %2879 = vmatpush1.msra.mxu0 0.0
        %2880 = vmatprep.subr.mxu0 0.0
        %2881 = vmatpush1.msra.mxu0 0.0
        %2882 = vmatprep.subr.mxu0 0.0
        %2883 = vmatpush1.msra.mxu0 0.0
        %2884 = vmatprep.subr.mxu0 0.0
        %2885 = vmatpush1.msra.mxu0 0.0
        %2886 = vmatprep.subr.mxu0 0.0
        %2887 = vmatpush1.msra.mxu0 0.0
        %2888 = vmatprep.subr.mxu0 0.0
        %2889 = vmatpush1.msra.mxu0 0.0
        %2890 = vmatprep.subr.mxu0 0.0
        %2891 = vmatpush1.msra.mxu0 0.0
        %2892 = vmatprep.subr.mxu0 0.0
        %2893 = vmatpush1.msra.mxu0 0.0
        %2894 = vmatprep.subr.mxu0 0.0
        %2895 = vmatpush1.msra.mxu0 0.0
        %2896 = vmatprep.subr.mxu0 0.0
        %2897 = vmatpush1.msra.mxu0 0.0
        %2898 = vmatprep.subr.mxu0 0.0
        %2899 = vmatpush1.msra.mxu0 0.0
        %2900 = vmatprep.subr.mxu0 0.0
        %2901 = vmatpush1.msra.mxu0 0.0
        %2902 = vmatprep.subr.mxu0 0.0
        %2903 = vmatpush1.msra.mxu0 0.0
        %2904 = vmatprep.subr.mxu0 0.0
        %2905 = vmatpush1.msra.mxu0 %v2872
        %2906 = vmatprep.subr.mxu0 0.0
        %2907 = vmatpush1.msra.mxu0 %v2871
        %2908 = vmatprep.subr.mxu0 0.0
        %2909 = vmatpush2.msra.mxu0 0.0
        %2910 = vmatprep.subr.mxu0 0.0
        %2911 = vmatpush2.msra.mxu0 0.0
        %2912 = vmatprep.subr.mxu0 0.0
        %2913 = vmatpush2.msra.mxu0 0.0
        %2914 = vmatprep.subr.mxu0 0.0
        %2915 = vmatpush2.msra.mxu0 0.0
        %2916 = vmatprep.subr.mxu0 0.0
        %2917 = vmatpush2.msra.mxu0 0.0
        %2918 = vmatprep.subr.mxu0 0.0
        %2919 = vmatpush2.msra.mxu0 0.0
        %2920 = vmatprep.subr.mxu0 0.0
        %2921 = vmatpush2.msra.mxu0 0.0
        %2922 = vmatprep.subr.mxu0 0.0
        %2923 = vmatpush2.msra.mxu0 0.0
        %2924 = vmatprep.subr.mxu0 0.0
        %2925 = vmatpush2.msra.mxu0 0.0
        %2926 = vmatprep.subr.mxu0 0.0
        %2927 = vmatpush2.msra.mxu0 0.0
        %2928 = vmatprep.subr.mxu0 0.0
        %2929 = vmatpush2.msra.mxu0 0.0
        %2930 = vmatprep.subr.mxu0 0.0
        %2931 = vmatpush2.msra.mxu0 0.0
        %2932 = vmatprep.subr.mxu0 0.0
        %2933 = vmatpush2.msra.mxu0 0.0
        %2934 = vmatprep.subr.mxu0 0.0
        %2935 = vmatpush2.msra.mxu0 0.0
        %2936 = vmatprep.subr.mxu0 0.0
        %2937 = vmatpush2.msra.mxu0 0.0
        %2938 = vmatprep.subr.mxu0 0.0
        %2939 = vmatpush2.msra.mxu0 0.0
        %2940 = vmatprep.mubr.f32.mxu0 0.0
        %2941 = vmatmul.mubr.f32.gmra.mxu0 %v2874
        %v2942 = vpop.f32.mrf.mxu0
        %v2943 = vadd.f32 0.0, %v2942
        %v2944 = vpop.f32.mrf.mxu0
        %2945 = vdwg.mxu0
        %v2946 = vadd.f32 %v2792, %v2943
        %v2947 = vld [vmem:[%s5] sm:$0x1]
        %v2949 = vlaneseq
        %v2950 = vshrl.u32 %v2949, 7
        %v2951 = vsub.s32 0, %v2950
        %v2952 = vrot.slane %v2947, %v2951
        %v2954 = vadd.f32 %v2946, %v2952
        %2955 = vst [vmem:[%s261] sm:$0xff] %v2954
        %s2956 = sand.u32 %s164, 1
        %s2957 = scalar_lea.sflag [#allocation3], %s2956
        %s2958 = sand.u32 %s164, 1
        %s2959 = smul.addr %s2958, 8
        %s2960 = scalar_lea.vmem [#allocation2], %s2959
        // Predicated region
        $region45: #{tpu_custom_call.1} parent=43 // pred_check
          %p2961 = pneg %p174
        $region46: #{tpu_custom_call.1} parent=43 // pred_check_branch
          %2963 = sbr.rel (%p2961) target = $region48
        $region47: #{tpu_custom_call.1} parent=43 // pred_region
          %s2965 = ssub.s32 128, 128
          %2966 = vsyncadd %s2957, %s2965
          %s2967 = smul.addr %s20, 128
          %s2968 = scalar_lea.hbm %s6, %s2967
          %s2970 = sshll.u32 %s2960, 4
          %s2971 = int_to_ptr.vmem [resolvable:$true] %s2970
          %2973 = dma.vmem_to_hbm [thread:$0]  %s2971, 128, %s2968, %s2957
        $region48: #{tpu_custom_call.1} parent=43 // pred_fallthru
          _
      $region44: #{tpu_custom_call.1} parent=5 // pred_fallthru
        _
      %p2974 = scmp.le.s32.totalorder 2, %s15
      // Predicated region
      $region49: #{tpu_custom_call.1} parent=5 // pred_check
        %p2975 = pneg %p2974
      $region50: #{tpu_custom_call.1} parent=5 // pred_check_branch
        %2977 = sbr.rel (%p2975) target = $region52
      $region51: #{tpu_custom_call.1} parent=5 // pred_region
        %s2978 = ssub.s32 %s15, 2
        // Predicated region
        $region53: #{tpu_custom_call.1} parent=51 // pred_check
          %p2979 = pneg %p180
        $region54: #{tpu_custom_call.1} parent=51 // pred_check_branch
          %2981 = sbr.rel (%p2979) target = $region56
        $region55: #{tpu_custom_call.1} parent=51 // pred_region
          %s2982 = sand.u32 %s165, 1
          %s2983 = scalar_lea.sflag [#allocation3], %s2982
          %s2984 = sand.u32 %s165, 1
          %s2985 = smul.addr %s2984, 8
          %s2986 = scalar_lea.vmem [#allocation2], %s2985
          %2987 = dma.done %s2983, 128
        $region56: #{tpu_custom_call.1} parent=51 // pred_fallthru
          _
      $region52: #{tpu_custom_call.1} parent=5 // pred_fallthru
        _
    $region6: #{tpu_custom_call.1} parent=1 // loop_footer
      %s19 = sadd.s32 1, %s15
    $region7: #{tpu_custom_call.1} parent=1 // loop_footer_branch
      %14 = sbr.rel target = $region3
    $region8: #{tpu_custom_call.1} parent=1 // loop_exit
      _
    %2988 = vsyncpa [#allocation3], 1
    %s2989 = scalar_lea.sflag [#allocation3], 1
    %2990 = vsyncpa %s2989, 1

</llo_original>
